<compile_context>
chip_gen: v7x
topology: tpu7x:2x2x1
jax: 0.10.0
libtpu: 0.0.40
codegen_flags: <defaults>
</compile_context>

<pallas_src>
import math
import functools

import jax
import jax.numpy as jnp
from jax.experimental import pallas as pl
from jax.experimental.pallas import tpu as pltpu

# ----------------------------- configuration -------------------------------
D_MODEL = 32
N_LAYER = 2
VOCAB_RAW = 12
PAD_MULT = 8
VOCAB = VOCAB_RAW + (PAD_MULT - VOCAB_RAW % PAD_MULT) % PAD_MULT  # padded vocab = 16
D_INNER_MLP = 64                       # d_inner of the MLP
D_STATE = 8                            # Mamba d_state
D_CONV = 4                             # Mamba d_conv
EXPAND = 2
D_IN = EXPAND * D_MODEL                # Mamba inner width = 64
DT_RANK = math.ceil(D_MODEL / 16)      # = 2
EPS = 1e-5
BATCH = 2
SEQ = 8
HEAD_PAD = max(VOCAB, 128 // BATCH)    # pad head output so the final store is 128-lane dense


# ------------------------------ small helpers --------------------------------
def _iota(shape, dim):
    return jax.lax.broadcasted_iota(jnp.int32, shape, dim)


def _div_p2(x, d):     # x // d for power-of-two d, x >= 0  (VPU shift, no integer div)
    return jnp.right_shift(x, int(d).bit_length() - 1)


def _mod_p2(x, d):     # x % d for power-of-two d
    return jnp.bitwise_and(x, d - 1)


def _ln_packed(x, g, b, avg):
    """LayerNorm over each d_model lane segment of the batch-packed (seq, B*d_model) stream."""
    f32 = jnp.float32
    mu = jnp.dot(x, avg, preferred_element_type=f32)
    c = x - mu
    var = jnp.dot(c * c, avg, preferred_element_type=f32)
    return c * jax.lax.rsqrt(var + EPS) * g + b


# ------------------------------ fused kernel --------------------------------
def _fused_forward_kernel(
        ids_ref, emb_ref,
        ln1_g_ref, ln1_b_ref, in_w_ref, conv_w_ref, conv_b_ref,
        dtbc_w_ref, dt_b_ref, a_ref, d_ref, out_w_ref,
        ln2_g_ref, ln2_b_ref, fc1_w_ref, fc1_b_ref, fc2_w_ref, fc2_b_ref,
        lnf_g_ref, lnf_b_ref, head_w_ref,
        out_ref,
        *, batch, seq, n_layer, d_model, d_in, d_state, d_conv, vocab):
    f32 = jnp.float32
    lanes = batch * d_in          # 128: Mamba-inner activations, batch packed on lanes
    dmod = batch * d_model        # 64 : residual stream, batch packed on lanes
    nbs = batch * d_state         # 16
    # all segment sizes (d_state, d_model, d_in, nbs, lanes, seq) are powers of two here

    # ---- constant selector / expansion matrices from iotas (built once per call) ----
    # rep: (seq*ds, seq)  rep[t*ds+s, t'] = (t == t')
    rep = (_div_p2(_iota((seq * d_state, seq), 0), d_state) ==
           _iota((seq * d_state, seq), 1)).astype(f32)
    # rep_t: (seq, seq*ds) = rep^T  (segmented sublane reduction for y)
    rep_t = (_div_p2(_iota((seq, seq * d_state), 1), d_state) ==
             _iota((seq, seq * d_state), 0)).astype(f32)
    # smask2: keep column j iff (j mod d_state) equals the row's state index (shared by B and C)
    smask2 = (_mod_p2(_iota((seq * d_state, 2 * nbs), 0), d_state) ==
              _mod_p2(_iota((seq * d_state, 2 * nbs), 1), d_state)).astype(f32)
    # expand2: broadcast (group, batch, state) columns onto (group, batch, d_in) lanes
    er = _iota((2 * nbs, 2 * lanes), 0)
    ec = _iota((2 * nbs, 2 * lanes), 1)
    expand2 = ((_div_p2(er, nbs) == _div_p2(ec, lanes)) &
               (_div_p2(_mod_p2(er, nbs), d_state) ==
                _div_p2(_mod_p2(ec, lanes), d_in))).astype(f32)
    # per-batch-segment averaging matrix for the packed LayerNorm
    lnavg = (_div_p2(_iota((dmod, dmod), 0), d_model) ==
             _div_p2(_iota((dmod, dmod), 1), d_model)).astype(f32) * (1.0 / d_model)
    # causal conv shift selectors: shiftcat[t, k*seq + t'] = (t - t' == k + 1)
    sr = _iota((seq, (d_conv - 1) * seq), 0)
    sc = _iota((seq, (d_conv - 1) * seq), 1)
    shiftcat = ((sr - _mod_p2(sc, seq)) == (_div_p2(sc, seq) + 1)).astype(f32)

    # ---- embedding: one-hot (from SMEM token ids) x block-diag embedding matmul ----
    oh_r = _iota((seq, batch * vocab), 0)
    oh_c = _iota((seq, batch * vocab), 1)
    onehot = jnp.zeros((seq, batch * vocab), f32)
    for b in range(batch):
        for t in range(seq):
            tok = ids_ref[b * seq + t]                      # SMEM scalar read
            onehot = onehot + ((oh_r == t) & (oh_c == b * vocab + tok)).astype(f32)
    hidden = jnp.dot(onehot, emb_ref[...], preferred_element_type=f32)   # (seq, dmod)
    residual = jnp.zeros_like(hidden)

    for li in range(n_layer):
        # ---- prenorm Block: residual = hidden + residual ; hs = LN1(residual) ----
        residual = hidden + residual
        normed = _ln_packed(residual, ln1_g_ref[li], ln1_b_ref[li], lnavg)

        # ---- Mamba in_proj (batch-block-diag) -> vreg-aligned x / z halves ----
        xz = jnp.dot(normed, in_w_ref[li], preferred_element_type=f32)   # (seq, 2*lanes)
        x_pk = xz[:, :lanes]
        z_pk = xz[:, lanes:]

        # ---- causal depthwise conv: ONE shift matmul over the stacked pre-scaled taps ----
        cw = conv_w_ref[li]                                              # (d_conv, lanes)
        taps = jnp.concatenate(
            [x_pk * cw[d_conv - 2 - k:d_conv - 1 - k, :] for k in range(d_conv - 1)], axis=0)
        xc = x_pk * cw[d_conv - 1:d_conv, :] + jnp.dot(
            shiftcat, taps, preferred_element_type=f32)
        xc = jax.nn.silu(xc + conv_b_ref[li])

        # ---- x_proj with the dt branch precomposed; columns = [dt_full | B | C] ----
        xdbl = jnp.dot(xc, dtbc_w_ref[li], preferred_element_type=f32)   # (seq, lanes + 2*nbs)
        delta = jax.nn.softplus(xdbl[:, :lanes] + dt_b_ref[li])          # (seq, lanes)
        bc = xdbl[:, lanes:]                                             # (seq, 2*nbs)

        # ---- hoist all time -> (time, state) expansions out of the recurrence (fused) ----
        dd = jnp.dot(rep, jnp.concatenate([delta, delta * xc], axis=1),
                     preferred_element_type=f32)                         # (seq*ds, 2*lanes)
        delta_flat = dd[:, :lanes]
        du_flat = dd[:, lanes:]
        bc_flat = jnp.dot(jnp.dot(rep, bc, preferred_element_type=f32) * smask2,
                          expand2, preferred_element_type=f32)           # (seq*ds, 2*lanes)
        b_flat = bc_flat[:, :lanes]
        c_flat = bc_flat[:, lanes:]

        a_flat = jnp.concatenate([a_ref[li]] * seq, axis=0)              # (seq*ds, lanes)
        dA_flat = jnp.exp(delta_flat * a_flat)     # one batched EUP exp, off the scan chain
        dBu_flat = b_flat * du_flat

        # ---- selective scan: per-step body is one (d_state, lanes) VPU fma; history in vregs ----
        h = jnp.zeros((d_state, lanes), f32)
        hc = []
        for t in range(seq):
            h = dA_flat[t * d_state:(t + 1) * d_state, :] * h \
                + dBu_flat[t * d_state:(t + 1) * d_state, :]
            hc.append(h * c_flat[t * d_state:(t + 1) * d_state, :])
        # y[t] = sum_s h_t[s] * C[t, s]  (segmented sublane reduction as one matmul)
        y_pk = jnp.dot(rep_t, jnp.concatenate(hc, axis=0), preferred_element_type=f32)
        y_pk = (y_pk + d_ref[li] * xc) * jax.nn.silu(z_pk)               # skip term + gate

        # ---- out_proj, second prenorm, MLP (GELU tanh) — all in the packed layout ----
        mixer_out = jnp.dot(y_pk, out_w_ref[li], preferred_element_type=f32)   # (seq, dmod)
        residual = mixer_out + residual
        normed = _ln_packed(residual, ln2_g_ref[li], ln2_b_ref[li], lnavg)
        h1 = jax.nn.gelu(
            jnp.dot(normed, fc1_w_ref[li], preferred_element_type=f32) + fc1_b_ref[li],
            approximate=True)
        hidden = jnp.dot(h1, fc2_w_ref[li], preferred_element_type=f32) + fc2_b_ref[li]

    # ---- final: add + ln_f + head (head output padded to a lane-dense 128-wide store) ----
    residual = hidden + residual
    normed = _ln_packed(residual, lnf_g_ref[...], lnf_b_ref[...], lnavg)
    out_ref[...] = jnp.dot(normed, head_w_ref[...], preferred_element_type=f32)


# ---------------------------- weight repacking -------------------------------
def _block_diag(mat, n):
    p, q = mat.shape
    out = jnp.zeros((n * p, n * q), mat.dtype)
    for b in range(n):
        out = out.at[b * p:(b + 1) * p, b * q:(b + 1) * q].set(mat)
    return out


def pack_params(params, batch):
    """One-time repacking into the batch-block-diag / lane-packed layouts the kernel uses."""
    layers = params["layers"]

    def stack(fn):
        return jnp.stack([fn(lp) for lp in layers])

    def tile_lane(v):                              # (d,) -> (1, batch*d)
        return jnp.tile(v.reshape(1, -1), (1, batch))

    def bd(m):
        return _block_diag(m, batch)

    def in_w_pk(lp):                               # columns grouped as [x (all b) | z (all b)]
        w = lp["in_w"]
        return jnp.concatenate([bd(w[:, :D_IN]), bd(w[:, D_IN:])], axis=1)

    def dtbc_pk(lp):                               # [dt precomposed | B | C], block-diag over b
        xp = lp["xproj_w"]
        w_dt_full = xp[:, :DT_RANK] @ lp["dt_w"]   # (d_in, d_in)
        w_b = xp[:, DT_RANK:DT_RANK + D_STATE]
        w_c = xp[:, DT_RANK + D_STATE:]
        return jnp.concatenate([bd(w_dt_full), bd(w_b), bd(w_c)], axis=1)

    head_pad = jnp.zeros((D_MODEL, HEAD_PAD), jnp.float32).at[:, :VOCAB].set(params["head_w"])

    return dict(
        emb=bd(params["emb"]),
        ln1_g=stack(lambda lp: tile_lane(lp["ln1_g"])),
        ln1_b=stack(lambda lp: tile_lane(lp["ln1_b"])),
        in_w=stack(in_w_pk),
        conv_w=stack(lambda lp: jnp.tile(lp["conv_w"], (1, batch))),
        conv_b=stack(lambda lp: tile_lane(lp["conv_b"])),
        dtbc_w=stack(dtbc_pk),
        dt_b=stack(lambda lp: tile_lane(lp["dt_b"])),
        # A[s, b*d_in + c] = (-exp(A_log))[c, s]   (no O(seq) pre-tiling)
        A=stack(lambda lp: jnp.tile((-jnp.exp(lp["A_log"])).T, (1, batch))),
        D=stack(lambda lp: tile_lane(lp["D"])),
        out_w=stack(lambda lp: bd(lp["out_w"])),
        ln2_g=stack(lambda lp: tile_lane(lp["ln2_g"])),
        ln2_b=stack(lambda lp: tile_lane(lp["ln2_b"])),
        fc1_w=stack(lambda lp: bd(lp["fc1_w"])),
        fc1_b=stack(lambda lp: tile_lane(lp["fc1_b"])),
        fc2_w=stack(lambda lp: bd(lp["fc2_w"])),
        fc2_b=stack(lambda lp: tile_lane(lp["fc2_b"])),
        lnf_g=tile_lane(params["lnf_g"]),
        lnf_b=tile_lane(params["lnf_b"]),
        head_w=bd(head_pad),
    )


_ORDER = ("emb", "ln1_g", "ln1_b", "in_w", "conv_w", "conv_b", "dtbc_w", "dt_b",
          "A", "D", "out_w", "ln2_g", "ln2_b", "fc1_w", "fc1_b", "fc2_w", "fc2_b",
          "lnf_g", "lnf_b", "head_w")


# ------------------------------ full forward -------------------------------
def barcode_mamba_forward(packed, input_ids):
    B, L = input_ids.shape
    assert B * D_IN == 128, "lane packing assumes batch * d_inner == 128"
    ids_flat = input_ids.reshape(-1).astype(jnp.int32)          # (B*L,), batch-major, to SMEM

    kern = functools.partial(
        _fused_forward_kernel, batch=B, seq=L, n_layer=N_LAYER, d_model=D_MODEL,
        d_in=D_IN, d_state=D_STATE, d_conv=D_CONV, vocab=VOCAB)

    in_specs = ([pl.BlockSpec(memory_space=pltpu.MemorySpace.SMEM)] +
                [pl.BlockSpec(memory_space=pltpu.MemorySpace.VMEM)] * len(_ORDER))

    out = pl.pallas_call(
        kern,
        out_shape=jax.ShapeDtypeStruct((L, B * HEAD_PAD), jnp.float32),
        in_specs=in_specs,
        out_specs=pl.BlockSpec(memory_space=pltpu.MemorySpace.VMEM),
    )(ids_flat, *[packed[k] for k in _ORDER])

    logits = out.reshape(L, B, HEAD_PAD)[:, :, :VOCAB].transpose(1, 0, 2)
    return logits                                                # (B, L, VOCAB)


# --------------------------- pure-JAX reference -----------------------------
def _ln_ref(x, g, b):
    m = x.mean(-1, keepdims=True)
    v = jnp.mean((x - m) ** 2, axis=-1, keepdims=True)
    return (x - m) / jnp.sqrt(v + EPS) * g + b


def _mamba_ref(x, z, lp):
    B, L, d_in = x.shape
    w = lp["conv_w"]
    xp = jnp.pad(x, ((0, 0), (D_CONV - 1, 0), (0, 0)))
    xc = sum(w[k][None, None, :] * xp[:, k:k + L, :] for k in range(D_CONV))
    xc = jax.nn.silu(xc + lp["conv_b"])
    xdbl = xc @ lp["xproj_w"]
    dt_in = xdbl[..., :DT_RANK]
    Bm = xdbl[..., DT_RANK:DT_RANK + D_STATE]
    Cm = xdbl[..., DT_RANK + D_STATE:]
    delta = jax.nn.softplus(dt_in @ lp["dt_w"] + lp["dt_b"])
    A = -jnp.exp(lp["A_log"])

    def step(h, inp):
        d_t, u_t, b_t, c_t = inp
        dA = jnp.exp(d_t[..., None] * A)
        dBu = (d_t * u_t)[..., None] * b_t[:, None, :]
        h = dA * h + dBu
        return h, jnp.einsum("bds,bs->bd", h, c_t)

    h0 = jnp.zeros((B, d_in, D_STATE), jnp.float32)
    _, ys = jax.lax.scan(step, h0, (delta.transpose(1, 0, 2), xc.transpose(1, 0, 2),
                                    Bm.transpose(1, 0, 2), Cm.transpose(1, 0, 2)))
    y = ys.transpose(1, 0, 2) + lp["D"] * xc
    return y * jax.nn.silu(z)


def ref_forward(params, input_ids):
    hidden = jnp.take(params["emb"], input_ids, axis=0)
    residual = jnp.zeros_like(hidden)
    for lp in params["layers"]:
        residual = hidden + residual
        normed = _ln_ref(residual, lp["ln1_g"], lp["ln1_b"])
        xz = normed @ lp["in_w"]
        y = _mamba_ref(xz[..., :D_IN], xz[..., D_IN:], lp)
        residual = y @ lp["out_w"] + residual
        normed = _ln_ref(residual, lp["ln2_g"], lp["ln2_b"])
        hidden = jax.nn.gelu(normed @ lp["fc1_w"] + lp["fc1_b"],
                             approximate=True) @ lp["fc2_w"] + lp["fc2_b"]
    residual = hidden + residual
    normed = _ln_ref(residual, params["lnf_g"], params["lnf_b"])
    return normed @ params["head_w"]


# ------------------------------ parameter init ------------------------------
def init_params(key):
    keys = iter(jax.random.split(key, 8 + 16 * N_LAYER))

    def nrm(shape, std=0.02):
        return (std * jax.random.normal(next(keys), shape)).astype(jnp.float32)

    resc = 0.02 / math.sqrt(2 * N_LAYER)  # out_proj / fc2 rescale from _init_weights
    a_log_row = jnp.log(jnp.arange(1, D_STATE + 1, dtype=jnp.float32))
    layers = []
    for _ in range(N_LAYER):
        layers.append(dict(
            ln1_g=jnp.ones((D_MODEL,), jnp.float32), ln1_b=jnp.zeros((D_MODEL,), jnp.float32),
            in_w=nrm((D_MODEL, 2 * D_IN)),
            conv_w=nrm((D_CONV, D_IN), 0.1),
            conv_b=nrm((D_IN,), 0.02),
            xproj_w=nrm((D_IN, DT_RANK + 2 * D_STATE)),
            dt_w=nrm((DT_RANK, D_IN)),
            dt_b=jnp.zeros((D_IN,), jnp.float32),
            A_log=jnp.tile(a_log_row[None, :], (D_IN, 1)),
            D=jnp.ones((D_IN,), jnp.float32),
            out_w=nrm((D_IN, D_MODEL), resc),
            ln2_g=jnp.ones((D_MODEL,), jnp.float32), ln2_b=jnp.zeros((D_MODEL,), jnp.float32),
            fc1_w=nrm((D_MODEL, D_INNER_MLP)), fc1_b=jnp.zeros((D_INNER_MLP,), jnp.float32),
            fc2_w=nrm((D_INNER_MLP, D_MODEL), resc), fc2_b=jnp.zeros((D_MODEL,), jnp.float32),
        ))
    return dict(
        emb=nrm((VOCAB, D_MODEL)),
        layers=layers,
        lnf_g=jnp.ones((D_MODEL,), jnp.float32), lnf_b=jnp.zeros((D_MODEL,), jnp.float32),
        head_w=nrm((D_MODEL, VOCAB)),   # pretrain head: Linear(d_model, vocab, bias=False)
    )


# ----------------------------------- main -----------------------------------
if __name__ == "__main__":
    key = jax.random.PRNGKey(0)
    pkey, ikey = jax.random.split(key)
    params = init_params(pkey)
    input_ids = jax.random.randint(ikey, (BATCH, SEQ), 0, VOCAB_RAW, dtype=jnp.int32)

    packed = pack_params(params, BATCH)
    logits = jax.block_until_ready(jax.jit(barcode_mamba_forward)(packed, input_ids))
    assert logits.shape == (BATCH, SEQ, VOCAB)

    ref = jax.block_until_ready(jax.jit(ref_forward)(params, input_ids))
    max_diff = float(jnp.max(jnp.abs(logits - ref)))
    assert max_diff < 5e-3, f"mismatch vs pure-JAX reference: {max_diff}"

    print("KERNEL_OK")
</pallas_src>

<mosaic_0001>
module attributes {stable_mosaic.version = 11 : i64} {
  func.func @_fused_forward_kernel(%arg0: memref<16xi32, #tpu.memory_space<smem>>, %arg1: memref<32x64xf32, #tpu.memory_space<vmem>>, %arg2: memref<2x1x64xf32, #tpu.memory_space<vmem>>, %arg3: memref<2x1x64xf32, #tpu.memory_space<vmem>>, %arg4: memref<2x64x256xf32, #tpu.memory_space<vmem>>, %arg5: memref<2x4x128xf32, #tpu.memory_space<vmem>>, %arg6: memref<2x1x128xf32, #tpu.memory_space<vmem>>, %arg7: memref<2x128x160xf32, #tpu.memory_space<vmem>>, %arg8: memref<2x1x128xf32, #tpu.memory_space<vmem>>, %arg9: memref<2x8x128xf32, #tpu.memory_space<vmem>>, %arg10: memref<2x1x128xf32, #tpu.memory_space<vmem>>, %arg11: memref<2x128x64xf32, #tpu.memory_space<vmem>>, %arg12: memref<2x1x64xf32, #tpu.memory_space<vmem>>, %arg13: memref<2x1x64xf32, #tpu.memory_space<vmem>>, %arg14: memref<2x64x128xf32, #tpu.memory_space<vmem>>, %arg15: memref<2x1x128xf32, #tpu.memory_space<vmem>>, %arg16: memref<2x128x64xf32, #tpu.memory_space<vmem>>, %arg17: memref<2x1x64xf32, #tpu.memory_space<vmem>>, %arg18: memref<1x64xf32, #tpu.memory_space<vmem>>, %arg19: memref<1x64xf32, #tpu.memory_space<vmem>>, %arg20: memref<64x128xf32, #tpu.memory_space<vmem>>, %arg21: memref<8x128xf32, #tpu.memory_space<vmem>>) attributes {dimension_semantics = [], scalar_prefetch = 0 : i64, scratch_operands = 0 : i64, tpu.core_type = #tpu.core_type<tc>} {
    %0 = tpu.iota {dimensions = array<i32: 0>} : vector<64x8xi32>
    %c3_i32 = arith.constant 3 : i32
    %1 = vector.broadcast %c3_i32 : i32 to vector<64x8xi32>
    %2 = arith.shrsi %0, %1 : vector<64x8xi32>
    %3 = tpu.iota {dimensions = array<i32: 1>} : vector<64x8xi32>
    %4 = arith.cmpi eq, %2, %3 : vector<64x8xi32>
    %5 = arith.extui %4 : vector<64x8xi1> to vector<64x8xi32>
    %6 = arith.sitofp %5 : vector<64x8xi32> to vector<64x8xf32>
    %7 = tpu.iota {dimensions = array<i32: 1>} : vector<8x64xi32>
    %c3_i32_0 = arith.constant 3 : i32
    %8 = vector.broadcast %c3_i32_0 : i32 to vector<8x64xi32>
    %9 = arith.shrsi %7, %8 : vector<8x64xi32>
    %10 = tpu.iota {dimensions = array<i32: 0>} : vector<8x64xi32>
    %11 = arith.cmpi eq, %9, %10 : vector<8x64xi32>
    %12 = arith.extui %11 : vector<8x64xi1> to vector<8x64xi32>
    %13 = arith.sitofp %12 : vector<8x64xi32> to vector<8x64xf32>
    %14 = tpu.iota {dimensions = array<i32: 0>} : vector<64x32xi32>
    %c7_i32 = arith.constant 7 : i32
    %15 = vector.broadcast %c7_i32 : i32 to vector<64x32xi32>
    %16 = arith.andi %14, %15 : vector<64x32xi32>
    %17 = tpu.iota {dimensions = array<i32: 1>} : vector<64x32xi32>
    %c7_i32_1 = arith.constant 7 : i32
    %18 = vector.broadcast %c7_i32_1 : i32 to vector<64x32xi32>
    %19 = arith.andi %17, %18 : vector<64x32xi32>
    %20 = arith.cmpi eq, %16, %19 : vector<64x32xi32>
    %21 = arith.extui %20 : vector<64x32xi1> to vector<64x32xi32>
    %22 = arith.sitofp %21 : vector<64x32xi32> to vector<64x32xf32>
    %23 = tpu.iota {dimensions = array<i32: 0>} : vector<32x256xi32>
    %24 = tpu.iota {dimensions = array<i32: 1>} : vector<32x256xi32>
    %c4_i32 = arith.constant 4 : i32
    %25 = vector.broadcast %c4_i32 : i32 to vector<32x256xi32>
    %26 = arith.shrsi %23, %25 : vector<32x256xi32>
    %c7_i32_2 = arith.constant 7 : i32
    %27 = vector.broadcast %c7_i32_2 : i32 to vector<32x256xi32>
    %28 = arith.shrsi %24, %27 : vector<32x256xi32>
    %29 = arith.cmpi eq, %26, %28 : vector<32x256xi32>
    %c15_i32 = arith.constant 15 : i32
    %30 = vector.broadcast %c15_i32 : i32 to vector<32x256xi32>
    %31 = arith.andi %23, %30 : vector<32x256xi32>
    %c3_i32_3 = arith.constant 3 : i32
    %32 = vector.broadcast %c3_i32_3 : i32 to vector<32x256xi32>
    %33 = arith.shrsi %31, %32 : vector<32x256xi32>
    %c127_i32 = arith.constant 127 : i32
    %34 = vector.broadcast %c127_i32 : i32 to vector<32x256xi32>
    %35 = arith.andi %24, %34 : vector<32x256xi32>
    %c6_i32 = arith.constant 6 : i32
    %36 = vector.broadcast %c6_i32 : i32 to vector<32x256xi32>
    %37 = arith.shrsi %35, %36 : vector<32x256xi32>
    %38 = arith.cmpi eq, %33, %37 : vector<32x256xi32>
    %39 = arith.andi %29, %38 : vector<32x256xi1>
    %40 = arith.extui %39 : vector<32x256xi1> to vector<32x256xi32>
    %41 = arith.sitofp %40 : vector<32x256xi32> to vector<32x256xf32>
    %42 = tpu.iota {dimensions = array<i32: 0>} : vector<64x64xi32>
    %c5_i32 = arith.constant 5 : i32
    %43 = vector.broadcast %c5_i32 : i32 to vector<64x64xi32>
    %44 = arith.shrsi %42, %43 : vector<64x64xi32>
    %45 = tpu.iota {dimensions = array<i32: 1>} : vector<64x64xi32>
    %c5_i32_4 = arith.constant 5 : i32
    %46 = vector.broadcast %c5_i32_4 : i32 to vector<64x64xi32>
    %47 = arith.shrsi %45, %46 : vector<64x64xi32>
    %48 = arith.cmpi eq, %44, %47 : vector<64x64xi32>
    %49 = arith.extui %48 : vector<64x64xi1> to vector<64x64xi32>
    %50 = arith.sitofp %49 : vector<64x64xi32> to vector<64x64xf32>
    %cst = arith.constant 3.125000e-02 : f32
    %51 = vector.broadcast %cst : f32 to vector<64x64xf32>
    %52 = arith.mulf %50, %51 : vector<64x64xf32>
    %53 = tpu.iota {dimensions = array<i32: 0>} : vector<8x24xi32>
    %54 = tpu.iota {dimensions = array<i32: 1>} : vector<8x24xi32>
    %c7_i32_5 = arith.constant 7 : i32
    %55 = vector.broadcast %c7_i32_5 : i32 to vector<8x24xi32>
    %56 = arith.andi %54, %55 : vector<8x24xi32>
    %57 = arith.subi %53, %56 : vector<8x24xi32>
    %c3_i32_6 = arith.constant 3 : i32
    %58 = vector.broadcast %c3_i32_6 : i32 to vector<8x24xi32>
    %59 = arith.shrsi %54, %58 : vector<8x24xi32>
    %c1_i32 = arith.constant 1 : i32
    %60 = vector.broadcast %c1_i32 : i32 to vector<8x24xi32>
    %61 = arith.addi %59, %60 : vector<8x24xi32>
    %62 = arith.cmpi eq, %57, %61 : vector<8x24xi32>
    %63 = arith.extui %62 : vector<8x24xi1> to vector<8x24xi32>
    %64 = arith.sitofp %63 : vector<8x24xi32> to vector<8x24xf32>
    %65 = tpu.iota {dimensions = array<i32: 0>} : vector<8x32xi32>
    %66 = tpu.iota {dimensions = array<i32: 1>} : vector<8x32xi32>
    %cst_7 = arith.constant 0.000000e+00 : f32
    %67 = vector.broadcast %cst_7 : f32 to vector<8x32xf32>
    %c0 = arith.constant 0 : index
    %68 = memref.load %arg0[%c0] : memref<16xi32, #tpu.memory_space<smem>>
    %c0_i32 = arith.constant 0 : i32
    %69 = vector.broadcast %c0_i32 : i32 to vector<8x32xi32>
    %70 = arith.cmpi eq, %65, %69 : vector<8x32xi32>
    %c0_i32_8 = arith.constant 0 : i32
    %71 = arith.addi %c0_i32_8, %68 : i32
    %72 = vector.broadcast %71 : i32 to vector<8x32xi32>
    %73 = arith.cmpi eq, %66, %72 : vector<8x32xi32>
    %74 = arith.andi %70, %73 : vector<8x32xi1>
    %75 = arith.extui %74 : vector<8x32xi1> to vector<8x32xi32>
    %76 = arith.sitofp %75 : vector<8x32xi32> to vector<8x32xf32>
    %77 = arith.addf %67, %76 : vector<8x32xf32>
    %c1 = arith.constant 1 : index
    %78 = memref.load %arg0[%c1] : memref<16xi32, #tpu.memory_space<smem>>
    %c1_i32_9 = arith.constant 1 : i32
    %79 = vector.broadcast %c1_i32_9 : i32 to vector<8x32xi32>
    %80 = arith.cmpi eq, %65, %79 : vector<8x32xi32>
    %c0_i32_10 = arith.constant 0 : i32
    %81 = arith.addi %c0_i32_10, %78 : i32
    %82 = vector.broadcast %81 : i32 to vector<8x32xi32>
    %83 = arith.cmpi eq, %66, %82 : vector<8x32xi32>
    %84 = arith.andi %80, %83 : vector<8x32xi1>
    %85 = arith.extui %84 : vector<8x32xi1> to vector<8x32xi32>
    %86 = arith.sitofp %85 : vector<8x32xi32> to vector<8x32xf32>
    %87 = arith.addf %77, %86 : vector<8x32xf32>
    %c2 = arith.constant 2 : index
    %88 = memref.load %arg0[%c2] : memref<16xi32, #tpu.memory_space<smem>>
    %c2_i32 = arith.constant 2 : i32
    %89 = vector.broadcast %c2_i32 : i32 to vector<8x32xi32>
    %90 = arith.cmpi eq, %65, %89 : vector<8x32xi32>
    %c0_i32_11 = arith.constant 0 : i32
    %91 = arith.addi %c0_i32_11, %88 : i32
    %92 = vector.broadcast %91 : i32 to vector<8x32xi32>
    %93 = arith.cmpi eq, %66, %92 : vector<8x32xi32>
    %94 = arith.andi %90, %93 : vector<8x32xi1>
    %95 = arith.extui %94 : vector<8x32xi1> to vector<8x32xi32>
    %96 = arith.sitofp %95 : vector<8x32xi32> to vector<8x32xf32>
    %97 = arith.addf %87, %96 : vector<8x32xf32>
    %c3 = arith.constant 3 : index
    %98 = memref.load %arg0[%c3] : memref<16xi32, #tpu.memory_space<smem>>
    %c3_i32_12 = arith.constant 3 : i32
    %99 = vector.broadcast %c3_i32_12 : i32 to vector<8x32xi32>
    %100 = arith.cmpi eq, %65, %99 : vector<8x32xi32>
    %c0_i32_13 = arith.constant 0 : i32
    %101 = arith.addi %c0_i32_13, %98 : i32
    %102 = vector.broadcast %101 : i32 to vector<8x32xi32>
    %103 = arith.cmpi eq, %66, %102 : vector<8x32xi32>
    %104 = arith.andi %100, %103 : vector<8x32xi1>
    %105 = arith.extui %104 : vector<8x32xi1> to vector<8x32xi32>
    %106 = arith.sitofp %105 : vector<8x32xi32> to vector<8x32xf32>
    %107 = arith.addf %97, %106 : vector<8x32xf32>
    %c4 = arith.constant 4 : index
    %108 = memref.load %arg0[%c4] : memref<16xi32, #tpu.memory_space<smem>>
    %c4_i32_14 = arith.constant 4 : i32
    %109 = vector.broadcast %c4_i32_14 : i32 to vector<8x32xi32>
    %110 = arith.cmpi eq, %65, %109 : vector<8x32xi32>
    %c0_i32_15 = arith.constant 0 : i32
    %111 = arith.addi %c0_i32_15, %108 : i32
    %112 = vector.broadcast %111 : i32 to vector<8x32xi32>
    %113 = arith.cmpi eq, %66, %112 : vector<8x32xi32>
    %114 = arith.andi %110, %113 : vector<8x32xi1>
    %115 = arith.extui %114 : vector<8x32xi1> to vector<8x32xi32>
    %116 = arith.sitofp %115 : vector<8x32xi32> to vector<8x32xf32>
    %117 = arith.addf %107, %116 : vector<8x32xf32>
    %c5 = arith.constant 5 : index
    %118 = memref.load %arg0[%c5] : memref<16xi32, #tpu.memory_space<smem>>
    %c5_i32_16 = arith.constant 5 : i32
    %119 = vector.broadcast %c5_i32_16 : i32 to vector<8x32xi32>
    %120 = arith.cmpi eq, %65, %119 : vector<8x32xi32>
    %c0_i32_17 = arith.constant 0 : i32
    %121 = arith.addi %c0_i32_17, %118 : i32
    %122 = vector.broadcast %121 : i32 to vector<8x32xi32>
    %123 = arith.cmpi eq, %66, %122 : vector<8x32xi32>
    %124 = arith.andi %120, %123 : vector<8x32xi1>
    %125 = arith.extui %124 : vector<8x32xi1> to vector<8x32xi32>
    %126 = arith.sitofp %125 : vector<8x32xi32> to vector<8x32xf32>
    %127 = arith.addf %117, %126 : vector<8x32xf32>
    %c6 = arith.constant 6 : index
    %128 = memref.load %arg0[%c6] : memref<16xi32, #tpu.memory_space<smem>>
    %c6_i32_18 = arith.constant 6 : i32
    %129 = vector.broadcast %c6_i32_18 : i32 to vector<8x32xi32>
    %130 = arith.cmpi eq, %65, %129 : vector<8x32xi32>
    %c0_i32_19 = arith.constant 0 : i32
    %131 = arith.addi %c0_i32_19, %128 : i32
    %132 = vector.broadcast %131 : i32 to vector<8x32xi32>
    %133 = arith.cmpi eq, %66, %132 : vector<8x32xi32>
    %134 = arith.andi %130, %133 : vector<8x32xi1>
    %135 = arith.extui %134 : vector<8x32xi1> to vector<8x32xi32>
    %136 = arith.sitofp %135 : vector<8x32xi32> to vector<8x32xf32>
    %137 = arith.addf %127, %136 : vector<8x32xf32>
    %c7 = arith.constant 7 : index
    %138 = memref.load %arg0[%c7] : memref<16xi32, #tpu.memory_space<smem>>
    %c7_i32_20 = arith.constant 7 : i32
    %139 = vector.broadcast %c7_i32_20 : i32 to vector<8x32xi32>
    %140 = arith.cmpi eq, %65, %139 : vector<8x32xi32>
    %c0_i32_21 = arith.constant 0 : i32
    %141 = arith.addi %c0_i32_21, %138 : i32
    %142 = vector.broadcast %141 : i32 to vector<8x32xi32>
    %143 = arith.cmpi eq, %66, %142 : vector<8x32xi32>
    %144 = arith.andi %140, %143 : vector<8x32xi1>
    %145 = arith.extui %144 : vector<8x32xi1> to vector<8x32xi32>
    %146 = arith.sitofp %145 : vector<8x32xi32> to vector<8x32xf32>
    %147 = arith.addf %137, %146 : vector<8x32xf32>
    %c8 = arith.constant 8 : index
    %148 = memref.load %arg0[%c8] : memref<16xi32, #tpu.memory_space<smem>>
    %c0_i32_22 = arith.constant 0 : i32
    %149 = vector.broadcast %c0_i32_22 : i32 to vector<8x32xi32>
    %150 = arith.cmpi eq, %65, %149 : vector<8x32xi32>
    %c16_i32 = arith.constant 16 : i32
    %151 = arith.addi %c16_i32, %148 : i32
    %152 = vector.broadcast %151 : i32 to vector<8x32xi32>
    %153 = arith.cmpi eq, %66, %152 : vector<8x32xi32>
    %154 = arith.andi %150, %153 : vector<8x32xi1>
    %155 = arith.extui %154 : vector<8x32xi1> to vector<8x32xi32>
    %156 = arith.sitofp %155 : vector<8x32xi32> to vector<8x32xf32>
    %157 = arith.addf %147, %156 : vector<8x32xf32>
    %c9 = arith.constant 9 : index
    %158 = memref.load %arg0[%c9] : memref<16xi32, #tpu.memory_space<smem>>
    %c1_i32_23 = arith.constant 1 : i32
    %159 = vector.broadcast %c1_i32_23 : i32 to vector<8x32xi32>
    %160 = arith.cmpi eq, %65, %159 : vector<8x32xi32>
    %c16_i32_24 = arith.constant 16 : i32
    %161 = arith.addi %c16_i32_24, %158 : i32
    %162 = vector.broadcast %161 : i32 to vector<8x32xi32>
    %163 = arith.cmpi eq, %66, %162 : vector<8x32xi32>
    %164 = arith.andi %160, %163 : vector<8x32xi1>
    %165 = arith.extui %164 : vector<8x32xi1> to vector<8x32xi32>
    %166 = arith.sitofp %165 : vector<8x32xi32> to vector<8x32xf32>
    %167 = arith.addf %157, %166 : vector<8x32xf32>
    %c10 = arith.constant 10 : index
    %168 = memref.load %arg0[%c10] : memref<16xi32, #tpu.memory_space<smem>>
    %c2_i32_25 = arith.constant 2 : i32
    %169 = vector.broadcast %c2_i32_25 : i32 to vector<8x32xi32>
    %170 = arith.cmpi eq, %65, %169 : vector<8x32xi32>
    %c16_i32_26 = arith.constant 16 : i32
    %171 = arith.addi %c16_i32_26, %168 : i32
    %172 = vector.broadcast %171 : i32 to vector<8x32xi32>
    %173 = arith.cmpi eq, %66, %172 : vector<8x32xi32>
    %174 = arith.andi %170, %173 : vector<8x32xi1>
    %175 = arith.extui %174 : vector<8x32xi1> to vector<8x32xi32>
    %176 = arith.sitofp %175 : vector<8x32xi32> to vector<8x32xf32>
    %177 = arith.addf %167, %176 : vector<8x32xf32>
    %c11 = arith.constant 11 : index
    %178 = memref.load %arg0[%c11] : memref<16xi32, #tpu.memory_space<smem>>
    %c3_i32_27 = arith.constant 3 : i32
    %179 = vector.broadcast %c3_i32_27 : i32 to vector<8x32xi32>
    %180 = arith.cmpi eq, %65, %179 : vector<8x32xi32>
    %c16_i32_28 = arith.constant 16 : i32
    %181 = arith.addi %c16_i32_28, %178 : i32
    %182 = vector.broadcast %181 : i32 to vector<8x32xi32>
    %183 = arith.cmpi eq, %66, %182 : vector<8x32xi32>
    %184 = arith.andi %180, %183 : vector<8x32xi1>
    %185 = arith.extui %184 : vector<8x32xi1> to vector<8x32xi32>
    %186 = arith.sitofp %185 : vector<8x32xi32> to vector<8x32xf32>
    %187 = arith.addf %177, %186 : vector<8x32xf32>
    %c12 = arith.constant 12 : index
    %188 = memref.load %arg0[%c12] : memref<16xi32, #tpu.memory_space<smem>>
    %c4_i32_29 = arith.constant 4 : i32
    %189 = vector.broadcast %c4_i32_29 : i32 to vector<8x32xi32>
    %190 = arith.cmpi eq, %65, %189 : vector<8x32xi32>
    %c16_i32_30 = arith.constant 16 : i32
    %191 = arith.addi %c16_i32_30, %188 : i32
    %192 = vector.broadcast %191 : i32 to vector<8x32xi32>
    %193 = arith.cmpi eq, %66, %192 : vector<8x32xi32>
    %194 = arith.andi %190, %193 : vector<8x32xi1>
    %195 = arith.extui %194 : vector<8x32xi1> to vector<8x32xi32>
    %196 = arith.sitofp %195 : vector<8x32xi32> to vector<8x32xf32>
    %197 = arith.addf %187, %196 : vector<8x32xf32>
    %c13 = arith.constant 13 : index
    %198 = memref.load %arg0[%c13] : memref<16xi32, #tpu.memory_space<smem>>
    %c5_i32_31 = arith.constant 5 : i32
    %199 = vector.broadcast %c5_i32_31 : i32 to vector<8x32xi32>
    %200 = arith.cmpi eq, %65, %199 : vector<8x32xi32>
    %c16_i32_32 = arith.constant 16 : i32
    %201 = arith.addi %c16_i32_32, %198 : i32
    %202 = vector.broadcast %201 : i32 to vector<8x32xi32>
    %203 = arith.cmpi eq, %66, %202 : vector<8x32xi32>
    %204 = arith.andi %200, %203 : vector<8x32xi1>
    %205 = arith.extui %204 : vector<8x32xi1> to vector<8x32xi32>
    %206 = arith.sitofp %205 : vector<8x32xi32> to vector<8x32xf32>
    %207 = arith.addf %197, %206 : vector<8x32xf32>
    %c14 = arith.constant 14 : index
    %208 = memref.load %arg0[%c14] : memref<16xi32, #tpu.memory_space<smem>>
    %c6_i32_33 = arith.constant 6 : i32
    %209 = vector.broadcast %c6_i32_33 : i32 to vector<8x32xi32>
    %210 = arith.cmpi eq, %65, %209 : vector<8x32xi32>
    %c16_i32_34 = arith.constant 16 : i32
    %211 = arith.addi %c16_i32_34, %208 : i32
    %212 = vector.broadcast %211 : i32 to vector<8x32xi32>
    %213 = arith.cmpi eq, %66, %212 : vector<8x32xi32>
    %214 = arith.andi %210, %213 : vector<8x32xi1>
    %215 = arith.extui %214 : vector<8x32xi1> to vector<8x32xi32>
    %216 = arith.sitofp %215 : vector<8x32xi32> to vector<8x32xf32>
    %217 = arith.addf %207, %216 : vector<8x32xf32>
    %c15 = arith.constant 15 : index
    %218 = memref.load %arg0[%c15] : memref<16xi32, #tpu.memory_space<smem>>
    %c7_i32_35 = arith.constant 7 : i32
    %219 = vector.broadcast %c7_i32_35 : i32 to vector<8x32xi32>
    %220 = arith.cmpi eq, %65, %219 : vector<8x32xi32>
    %c16_i32_36 = arith.constant 16 : i32
    %221 = arith.addi %c16_i32_36, %218 : i32
    %222 = vector.broadcast %221 : i32 to vector<8x32xi32>
    %223 = arith.cmpi eq, %66, %222 : vector<8x32xi32>
    %224 = arith.andi %220, %223 : vector<8x32xi1>
    %225 = arith.extui %224 : vector<8x32xi1> to vector<8x32xi32>
    %226 = arith.sitofp %225 : vector<8x32xi32> to vector<8x32xf32>
    %227 = arith.addf %217, %226 : vector<8x32xf32>
    %c0_37 = arith.constant 0 : index
    %c0_38 = arith.constant 0 : index
    %228 = vector.load %arg1[%c0_37, %c0_38] : memref<32x64xf32, #tpu.memory_space<vmem>>, vector<32x64xf32>
    %cst_39 = arith.constant dense<0.000000e+00> : vector<8x64xf32>
    %229 = tpu.matmul %227, %228, %cst_39 {dimension_numbers = #tpu.dot_dimension_numbers<[1], [0], [0], [1], [0, 0, 1, 1], [], []>} : vector<8x32xf32>, vector<32x64xf32>, vector<8x64xf32> -> vector<8x64xf32>
    %cst_40 = arith.constant 0.000000e+00 : f32
    %230 = vector.broadcast %cst_40 : f32 to vector<8x64xf32>
    %231 = arith.addf %229, %230 : vector<8x64xf32>
    %c0_41 = arith.constant 0 : index
    %c0_42 = arith.constant 0 : index
    %c0_43 = arith.constant 0 : index
    %232 = vector.load %arg2[%c0_41, %c0_42, %c0_43] : memref<2x1x64xf32, #tpu.memory_space<vmem>>, vector<1x1x64xf32>
    %233 = vector.shape_cast %232 : vector<1x1x64xf32> to vector<1x64xf32>
    %c0_44 = arith.constant 0 : index
    %c0_45 = arith.constant 0 : index
    %c0_46 = arith.constant 0 : index
    %234 = vector.load %arg3[%c0_44, %c0_45, %c0_46] : memref<2x1x64xf32, #tpu.memory_space<vmem>>, vector<1x1x64xf32>
    %235 = vector.shape_cast %234 : vector<1x1x64xf32> to vector<1x64xf32>
    %cst_47 = arith.constant dense<0.000000e+00> : vector<8x64xf32>
    %236 = tpu.matmul %231, %52, %cst_47 {dimension_numbers = #tpu.dot_dimension_numbers<[1], [0], [0], [1], [0, 0, 1, 1], [], []>} : vector<8x64xf32>, vector<64x64xf32>, vector<8x64xf32> -> vector<8x64xf32>
    %237 = arith.subf %231, %236 : vector<8x64xf32>
    %238 = arith.mulf %237, %237 : vector<8x64xf32>
    %cst_48 = arith.constant dense<0.000000e+00> : vector<8x64xf32>
    %239 = tpu.matmul %238, %52, %cst_48 {dimension_numbers = #tpu.dot_dimension_numbers<[1], [0], [0], [1], [0, 0, 1, 1], [], []>} : vector<8x64xf32>, vector<64x64xf32>, vector<8x64xf32> -> vector<8x64xf32>
    %cst_49 = arith.constant 9.99999974E-6 : f32
    %240 = vector.broadcast %cst_49 : f32 to vector<8x64xf32>
    %241 = arith.addf %239, %240 : vector<8x64xf32>
    %242 = math.rsqrt %241 : vector<8x64xf32>
    %243 = arith.mulf %237, %242 : vector<8x64xf32>
    %244 = vector.broadcast %233 : vector<1x64xf32> to vector<8x64xf32>
    %245 = arith.mulf %243, %244 : vector<8x64xf32>
    %246 = vector.broadcast %235 : vector<1x64xf32> to vector<8x64xf32>
    %247 = arith.addf %245, %246 : vector<8x64xf32>
    %c0_50 = arith.constant 0 : index
    %c0_51 = arith.constant 0 : index
    %c0_52 = arith.constant 0 : index
    %248 = vector.load %arg4[%c0_50, %c0_51, %c0_52] : memref<2x64x256xf32, #tpu.memory_space<vmem>>, vector<1x64x256xf32>
    %249 = vector.shape_cast %248 : vector<1x64x256xf32> to vector<64x256xf32>
    %cst_53 = arith.constant dense<0.000000e+00> : vector<8x256xf32>
    %250 = tpu.matmul %247, %249, %cst_53 {dimension_numbers = #tpu.dot_dimension_numbers<[1], [0], [0], [1], [0, 0, 1, 1], [], []>} : vector<8x64xf32>, vector<64x256xf32>, vector<8x256xf32> -> vector<8x256xf32>
    %251 = vector.extract_strided_slice %250 {offsets = [0, 0], sizes = [8, 128], strides = [1, 1]} : vector<8x256xf32> to vector<8x128xf32>
    %252 = vector.extract_strided_slice %250 {offsets = [0, 128], sizes = [8, 128], strides = [1, 1]} : vector<8x256xf32> to vector<8x128xf32>
    %c0_54 = arith.constant 0 : index
    %c0_55 = arith.constant 0 : index
    %c0_56 = arith.constant 0 : index
    %253 = vector.load %arg5[%c0_54, %c0_55, %c0_56] : memref<2x4x128xf32, #tpu.memory_space<vmem>>, vector<1x4x128xf32>
    %254 = vector.shape_cast %253 : vector<1x4x128xf32> to vector<4x128xf32>
    %255 = vector.extract_strided_slice %254 {offsets = [2, 0], sizes = [1, 128], strides = [1, 1]} : vector<4x128xf32> to vector<1x128xf32>
    %256 = vector.broadcast %255 : vector<1x128xf32> to vector<8x128xf32>
    %257 = arith.mulf %251, %256 : vector<8x128xf32>
    %258 = vector.extract_strided_slice %254 {offsets = [1, 0], sizes = [1, 128], strides = [1, 1]} : vector<4x128xf32> to vector<1x128xf32>
    %259 = vector.broadcast %258 : vector<1x128xf32> to vector<8x128xf32>
    %260 = arith.mulf %251, %259 : vector<8x128xf32>
    %261 = vector.extract_strided_slice %254 {offsets = [0, 0], sizes = [1, 128], strides = [1, 1]} : vector<4x128xf32> to vector<1x128xf32>
    %262 = vector.broadcast %261 : vector<1x128xf32> to vector<8x128xf32>
    %263 = arith.mulf %251, %262 : vector<8x128xf32>
    %264 = tpu.concatenate %257, %260, %263 in 0 : vector<8x128xf32>, vector<8x128xf32>, vector<8x128xf32> -> vector<24x128xf32>
    %265 = vector.extract_strided_slice %254 {offsets = [3, 0], sizes = [1, 128], strides = [1, 1]} : vector<4x128xf32> to vector<1x128xf32>
    %266 = vector.broadcast %265 : vector<1x128xf32> to vector<8x128xf32>
    %267 = arith.mulf %251, %266 : vector<8x128xf32>
    %cst_57 = arith.constant dense<0.000000e+00> : vector<8x128xf32>
    %268 = tpu.matmul %64, %264, %cst_57 {dimension_numbers = #tpu.dot_dimension_numbers<[1], [0], [0], [1], [0, 0, 1, 1], [], []>} : vector<8x24xf32>, vector<24x128xf32>, vector<8x128xf32> -> vector<8x128xf32>
    %269 = arith.addf %267, %268 : vector<8x128xf32>
    %c0_58 = arith.constant 0 : index
    %c0_59 = arith.constant 0 : index
    %c0_60 = arith.constant 0 : index
    %270 = vector.load %arg6[%c0_58, %c0_59, %c0_60] : memref<2x1x128xf32, #tpu.memory_space<vmem>>, vector<1x1x128xf32>
    %271 = vector.shape_cast %270 : vector<1x1x128xf32> to vector<1x128xf32>
    %272 = vector.broadcast %271 : vector<1x128xf32> to vector<8x128xf32>
    %273 = arith.addf %269, %272 : vector<8x128xf32>
    %274 = arith.negf %273 : vector<8x128xf32>
    %275 = math.exp %274 : vector<8x128xf32>
    %cst_61 = arith.constant 1.000000e+00 : f32
    %276 = vector.broadcast %cst_61 : f32 to vector<8x128xf32>
    %277 = arith.addf %276, %275 : vector<8x128xf32>
    %278 = arith.divf %276, %277 : vector<8x128xf32>
    %279 = arith.mulf %273, %278 : vector<8x128xf32>
    %c0_62 = arith.constant 0 : index
    %c0_63 = arith.constant 0 : index
    %c0_64 = arith.constant 0 : index
    %280 = vector.load %arg7[%c0_62, %c0_63, %c0_64] : memref<2x128x160xf32, #tpu.memory_space<vmem>>, vector<1x128x160xf32>
    %281 = vector.shape_cast %280 : vector<1x128x160xf32> to vector<128x160xf32>
    %cst_65 = arith.constant dense<0.000000e+00> : vector<8x160xf32>
    %282 = tpu.matmul %279, %281, %cst_65 {dimension_numbers = #tpu.dot_dimension_numbers<[1], [0], [0], [1], [0, 0, 1, 1], [], []>} : vector<8x128xf32>, vector<128x160xf32>, vector<8x160xf32> -> vector<8x160xf32>
    %283 = vector.extract_strided_slice %282 {offsets = [0, 0], sizes = [8, 128], strides = [1, 1]} : vector<8x160xf32> to vector<8x128xf32>
    %c0_66 = arith.constant 0 : index
    %c0_67 = arith.constant 0 : index
    %c0_68 = arith.constant 0 : index
    %284 = vector.load %arg8[%c0_66, %c0_67, %c0_68] : memref<2x1x128xf32, #tpu.memory_space<vmem>>, vector<1x1x128xf32>
    %285 = vector.shape_cast %284 : vector<1x1x128xf32> to vector<1x128xf32>
    %286 = vector.broadcast %285 : vector<1x128xf32> to vector<8x128xf32>
    %287 = arith.addf %283, %286 : vector<8x128xf32>
    %cst_69 = arith.constant 0.000000e+00 : f32
    %288 = vector.broadcast %cst_69 : f32 to vector<8x128xf32>
    %289 = arith.maximumf %287, %288 : vector<8x128xf32>
    %290 = vector.broadcast %cst_69 : f32 to vector<8x128xf32>
    %291 = arith.subf %287, %290 : vector<8x128xf32>
    %292 = arith.cmpf one, %291, %291 : vector<8x128xf32>
    %293 = vector.broadcast %cst_69 : f32 to vector<8x128xf32>
    %294 = arith.addf %287, %293 : vector<8x128xf32>
    %295 = math.absf %291 : vector<8x128xf32>
    %cst_70 = arith.constant 0.000000e+00 : f32
    %296 = vector.broadcast %cst_70 : f32 to vector<8x128xf32>
    %297 = arith.subf %296, %295 : vector<8x128xf32>
    %298 = math.exp %297 : vector<8x128xf32>
    %299 = math.log1p %298 : vector<8x128xf32>
    %300 = arith.addf %289, %299 : vector<8x128xf32>
    %301 = arith.select %292, %294, %300 : vector<8x128xi1>, vector<8x128xf32>
    %302 = vector.extract_strided_slice %282 {offsets = [0, 128], sizes = [8, 32], strides = [1, 1]} : vector<8x160xf32> to vector<8x32xf32>
    %303 = arith.mulf %301, %279 : vector<8x128xf32>
    %304 = tpu.concatenate %301, %303 in 1 : vector<8x128xf32>, vector<8x128xf32> -> vector<8x256xf32>
    %cst_71 = arith.constant dense<0.000000e+00> : vector<64x256xf32>
    %305 = tpu.matmul %6, %304, %cst_71 {dimension_numbers = #tpu.dot_dimension_numbers<[1], [0], [0], [1], [0, 0, 1, 1], [], []>} : vector<64x8xf32>, vector<8x256xf32>, vector<64x256xf32> -> vector<64x256xf32>
    %306 = vector.extract_strided_slice %305 {offsets = [0, 0], sizes = [64, 128], strides = [1, 1]} : vector<64x256xf32> to vector<64x128xf32>
    %307 = vector.extract_strided_slice %305 {offsets = [0, 128], sizes = [64, 128], strides = [1, 1]} : vector<64x256xf32> to vector<64x128xf32>
    %cst_72 = arith.constant dense<0.000000e+00> : vector<64x32xf32>
    %308 = tpu.matmul %6, %302, %cst_72 {dimension_numbers = #tpu.dot_dimension_numbers<[1], [0], [0], [1], [0, 0, 1, 1], [], []>} : vector<64x8xf32>, vector<8x32xf32>, vector<64x32xf32> -> vector<64x32xf32>
    %309 = arith.mulf %308, %22 : vector<64x32xf32>
    %cst_73 = arith.constant dense<0.000000e+00> : vector<64x256xf32>
    %310 = tpu.matmul %309, %41, %cst_73 {dimension_numbers = #tpu.dot_dimension_numbers<[1], [0], [0], [1], [0, 0, 1, 1], [], []>} : vector<64x32xf32>, vector<32x256xf32>, vector<64x256xf32> -> vector<64x256xf32>
    %311 = vector.extract_strided_slice %310 {offsets = [0, 0], sizes = [64, 128], strides = [1, 1]} : vector<64x256xf32> to vector<64x128xf32>
    %312 = vector.extract_strided_slice %310 {offsets = [0, 128], sizes = [64, 128], strides = [1, 1]} : vector<64x256xf32> to vector<64x128xf32>
    %c0_74 = arith.constant 0 : index
    %c0_75 = arith.constant 0 : index
    %c0_76 = arith.constant 0 : index
    %313 = vector.load %arg9[%c0_74, %c0_75, %c0_76] : memref<2x8x128xf32, #tpu.memory_space<vmem>>, vector<1x8x128xf32>
    %314 = vector.shape_cast %313 : vector<1x8x128xf32> to vector<8x128xf32>
    %315 = tpu.concatenate %314, %314, %314, %314, %314, %314, %314, %314 in 0 : vector<8x128xf32>, vector<8x128xf32>, vector<8x128xf32>, vector<8x128xf32>, vector<8x128xf32>, vector<8x128xf32>, vector<8x128xf32>, vector<8x128xf32> -> vector<64x128xf32>
    %316 = arith.mulf %306, %315 : vector<64x128xf32>
    %317 = math.exp %316 : vector<64x128xf32>
    %318 = arith.mulf %311, %307 : vector<64x128xf32>
    %cst_77 = arith.constant 0.000000e+00 : f32
    %319 = vector.broadcast %cst_77 : f32 to vector<8x128xf32>
    %320 = vector.extract_strided_slice %317 {offsets = [0, 0], sizes = [8, 128], strides = [1, 1]} : vector<64x128xf32> to vector<8x128xf32>
    %321 = arith.mulf %320, %319 : vector<8x128xf32>
    %322 = vector.extract_strided_slice %318 {offsets = [0, 0], sizes = [8, 128], strides = [1, 1]} : vector<64x128xf32> to vector<8x128xf32>
    %323 = arith.addf %321, %322 : vector<8x128xf32>
    %324 = vector.extract_strided_slice %312 {offsets = [0, 0], sizes = [8, 128], strides = [1, 1]} : vector<64x128xf32> to vector<8x128xf32>
    %325 = arith.mulf %323, %324 : vector<8x128xf32>
    %326 = vector.extract_strided_slice %317 {offsets = [8, 0], sizes = [8, 128], strides = [1, 1]} : vector<64x128xf32> to vector<8x128xf32>
    %327 = arith.mulf %326, %323 : vector<8x128xf32>
    %328 = vector.extract_strided_slice %318 {offsets = [8, 0], sizes = [8, 128], strides = [1, 1]} : vector<64x128xf32> to vector<8x128xf32>
    %329 = arith.addf %327, %328 : vector<8x128xf32>
    %330 = vector.extract_strided_slice %312 {offsets = [8, 0], sizes = [8, 128], strides = [1, 1]} : vector<64x128xf32> to vector<8x128xf32>
    %331 = arith.mulf %329, %330 : vector<8x128xf32>
    %332 = vector.extract_strided_slice %317 {offsets = [16, 0], sizes = [8, 128], strides = [1, 1]} : vector<64x128xf32> to vector<8x128xf32>
    %333 = arith.mulf %332, %329 : vector<8x128xf32>
    %334 = vector.extract_strided_slice %318 {offsets = [16, 0], sizes = [8, 128], strides = [1, 1]} : vector<64x128xf32> to vector<8x128xf32>
    %335 = arith.addf %333, %334 : vector<8x128xf32>
    %336 = vector.extract_strided_slice %312 {offsets = [16, 0], sizes = [8, 128], strides = [1, 1]} : vector<64x128xf32> to vector<8x128xf32>
    %337 = arith.mulf %335, %336 : vector<8x128xf32>
    %338 = vector.extract_strided_slice %317 {offsets = [24, 0], sizes = [8, 128], strides = [1, 1]} : vector<64x128xf32> to vector<8x128xf32>
    %339 = arith.mulf %338, %335 : vector<8x128xf32>
    %340 = vector.extract_strided_slice %318 {offsets = [24, 0], sizes = [8, 128], strides = [1, 1]} : vector<64x128xf32> to vector<8x128xf32>
    %341 = arith.addf %339, %340 : vector<8x128xf32>
    %342 = vector.extract_strided_slice %312 {offsets = [24, 0], sizes = [8, 128], strides = [1, 1]} : vector<64x128xf32> to vector<8x128xf32>
    %343 = arith.mulf %341, %342 : vector<8x128xf32>
    %344 = vector.extract_strided_slice %317 {offsets = [32, 0], sizes = [8, 128], strides = [1, 1]} : vector<64x128xf32> to vector<8x128xf32>
    %345 = arith.mulf %344, %341 : vector<8x128xf32>
    %346 = vector.extract_strided_slice %318 {offsets = [32, 0], sizes = [8, 128], strides = [1, 1]} : vector<64x128xf32> to vector<8x128xf32>
    %347 = arith.addf %345, %346 : vector<8x128xf32>
    %348 = vector.extract_strided_slice %312 {offsets = [32, 0], sizes = [8, 128], strides = [1, 1]} : vector<64x128xf32> to vector<8x128xf32>
    %349 = arith.mulf %347, %348 : vector<8x128xf32>
    %350 = vector.extract_strided_slice %317 {offsets = [40, 0], sizes = [8, 128], strides = [1, 1]} : vector<64x128xf32> to vector<8x128xf32>
    %351 = arith.mulf %350, %347 : vector<8x128xf32>
    %352 = vector.extract_strided_slice %318 {offsets = [40, 0], sizes = [8, 128], strides = [1, 1]} : vector<64x128xf32> to vector<8x128xf32>
    %353 = arith.addf %351, %352 : vector<8x128xf32>
    %354 = vector.extract_strided_slice %312 {offsets = [40, 0], sizes = [8, 128], strides = [1, 1]} : vector<64x128xf32> to vector<8x128xf32>
    %355 = arith.mulf %353, %354 : vector<8x128xf32>
    %356 = vector.extract_strided_slice %317 {offsets = [48, 0], sizes = [8, 128], strides = [1, 1]} : vector<64x128xf32> to vector<8x128xf32>
    %357 = arith.mulf %356, %353 : vector<8x128xf32>
    %358 = vector.extract_strided_slice %318 {offsets = [48, 0], sizes = [8, 128], strides = [1, 1]} : vector<64x128xf32> to vector<8x128xf32>
    %359 = arith.addf %357, %358 : vector<8x128xf32>
    %360 = vector.extract_strided_slice %312 {offsets = [48, 0], sizes = [8, 128], strides = [1, 1]} : vector<64x128xf32> to vector<8x128xf32>
    %361 = arith.mulf %359, %360 : vector<8x128xf32>
    %362 = vector.extract_strided_slice %317 {offsets = [56, 0], sizes = [8, 128], strides = [1, 1]} : vector<64x128xf32> to vector<8x128xf32>
    %363 = arith.mulf %362, %359 : vector<8x128xf32>
    %364 = vector.extract_strided_slice %318 {offsets = [56, 0], sizes = [8, 128], strides = [1, 1]} : vector<64x128xf32> to vector<8x128xf32>
    %365 = arith.addf %363, %364 : vector<8x128xf32>
    %366 = vector.extract_strided_slice %312 {offsets = [56, 0], sizes = [8, 128], strides = [1, 1]} : vector<64x128xf32> to vector<8x128xf32>
    %367 = arith.mulf %365, %366 : vector<8x128xf32>
    %368 = tpu.concatenate %325, %331, %337, %343, %349, %355, %361, %367 in 0 : vector<8x128xf32>, vector<8x128xf32>, vector<8x128xf32>, vector<8x128xf32>, vector<8x128xf32>, vector<8x128xf32>, vector<8x128xf32>, vector<8x128xf32> -> vector<64x128xf32>
    %cst_78 = arith.constant dense<0.000000e+00> : vector<8x128xf32>
    %369 = tpu.matmul %13, %368, %cst_78 {dimension_numbers = #tpu.dot_dimension_numbers<[1], [0], [0], [1], [0, 0, 1, 1], [], []>} : vector<8x64xf32>, vector<64x128xf32>, vector<8x128xf32> -> vector<8x128xf32>
    %c0_79 = arith.constant 0 : index
    %c0_80 = arith.constant 0 : index
    %c0_81 = arith.constant 0 : index
    %370 = vector.load %arg10[%c0_79, %c0_80, %c0_81] : memref<2x1x128xf32, #tpu.memory_space<vmem>>, vector<1x1x128xf32>
    %371 = vector.shape_cast %370 : vector<1x1x128xf32> to vector<1x128xf32>
    %372 = vector.broadcast %371 : vector<1x128xf32> to vector<8x128xf32>
    %373 = arith.mulf %372, %279 : vector<8x128xf32>
    %374 = arith.addf %369, %373 : vector<8x128xf32>
    %375 = arith.negf %252 : vector<8x128xf32>
    %376 = math.exp %375 : vector<8x128xf32>
    %cst_82 = arith.constant 1.000000e+00 : f32
    %377 = vector.broadcast %cst_82 : f32 to vector<8x128xf32>
    %378 = arith.addf %377, %376 : vector<8x128xf32>
    %379 = arith.divf %377, %378 : vector<8x128xf32>
    %380 = arith.mulf %252, %379 : vector<8x128xf32>
    %381 = arith.mulf %374, %380 : vector<8x128xf32>
    %c0_83 = arith.constant 0 : index
    %c0_84 = arith.constant 0 : index
    %c0_85 = arith.constant 0 : index
    %382 = vector.load %arg11[%c0_83, %c0_84, %c0_85] : memref<2x128x64xf32, #tpu.memory_space<vmem>>, vector<1x128x64xf32>
    %383 = vector.shape_cast %382 : vector<1x128x64xf32> to vector<128x64xf32>
    %cst_86 = arith.constant dense<0.000000e+00> : vector<8x64xf32>
    %384 = tpu.matmul %381, %383, %cst_86 {dimension_numbers = #tpu.dot_dimension_numbers<[1], [0], [0], [1], [0, 0, 1, 1], [], []>} : vector<8x128xf32>, vector<128x64xf32>, vector<8x64xf32> -> vector<8x64xf32>
    %385 = arith.addf %384, %231 : vector<8x64xf32>
    %c0_87 = arith.constant 0 : index
    %c0_88 = arith.constant 0 : index
    %c0_89 = arith.constant 0 : index
    %386 = vector.load %arg12[%c0_87, %c0_88, %c0_89] : memref<2x1x64xf32, #tpu.memory_space<vmem>>, vector<1x1x64xf32>
    %387 = vector.shape_cast %386 : vector<1x1x64xf32> to vector<1x64xf32>
    %c0_90 = arith.constant 0 : index
    %c0_91 = arith.constant 0 : index
    %c0_92 = arith.constant 0 : index
    %388 = vector.load %arg13[%c0_90, %c0_91, %c0_92] : memref<2x1x64xf32, #tpu.memory_space<vmem>>, vector<1x1x64xf32>
    %389 = vector.shape_cast %388 : vector<1x1x64xf32> to vector<1x64xf32>
    %cst_93 = arith.constant dense<0.000000e+00> : vector<8x64xf32>
    %390 = tpu.matmul %385, %52, %cst_93 {dimension_numbers = #tpu.dot_dimension_numbers<[1], [0], [0], [1], [0, 0, 1, 1], [], []>} : vector<8x64xf32>, vector<64x64xf32>, vector<8x64xf32> -> vector<8x64xf32>
    %391 = arith.subf %385, %390 : vector<8x64xf32>
    %392 = arith.mulf %391, %391 : vector<8x64xf32>
    %cst_94 = arith.constant dense<0.000000e+00> : vector<8x64xf32>
    %393 = tpu.matmul %392, %52, %cst_94 {dimension_numbers = #tpu.dot_dimension_numbers<[1], [0], [0], [1], [0, 0, 1, 1], [], []>} : vector<8x64xf32>, vector<64x64xf32>, vector<8x64xf32> -> vector<8x64xf32>
    %cst_95 = arith.constant 9.99999974E-6 : f32
    %394 = vector.broadcast %cst_95 : f32 to vector<8x64xf32>
    %395 = arith.addf %393, %394 : vector<8x64xf32>
    %396 = math.rsqrt %395 : vector<8x64xf32>
    %397 = arith.mulf %391, %396 : vector<8x64xf32>
    %398 = vector.broadcast %387 : vector<1x64xf32> to vector<8x64xf32>
    %399 = arith.mulf %397, %398 : vector<8x64xf32>
    %400 = vector.broadcast %389 : vector<1x64xf32> to vector<8x64xf32>
    %401 = arith.addf %399, %400 : vector<8x64xf32>
    %c0_96 = arith.constant 0 : index
    %c0_97 = arith.constant 0 : index
    %c0_98 = arith.constant 0 : index
    %402 = vector.load %arg14[%c0_96, %c0_97, %c0_98] : memref<2x64x128xf32, #tpu.memory_space<vmem>>, vector<1x64x128xf32>
    %403 = vector.shape_cast %402 : vector<1x64x128xf32> to vector<64x128xf32>
    %cst_99 = arith.constant dense<0.000000e+00> : vector<8x128xf32>
    %404 = tpu.matmul %401, %403, %cst_99 {dimension_numbers = #tpu.dot_dimension_numbers<[1], [0], [0], [1], [0, 0, 1, 1], [], []>} : vector<8x64xf32>, vector<64x128xf32>, vector<8x128xf32> -> vector<8x128xf32>
    %c0_100 = arith.constant 0 : index
    %c0_101 = arith.constant 0 : index
    %c0_102 = arith.constant 0 : index
    %405 = vector.load %arg15[%c0_100, %c0_101, %c0_102] : memref<2x1x128xf32, #tpu.memory_space<vmem>>, vector<1x1x128xf32>
    %406 = vector.shape_cast %405 : vector<1x1x128xf32> to vector<1x128xf32>
    %407 = vector.broadcast %406 : vector<1x128xf32> to vector<8x128xf32>
    %408 = arith.addf %404, %407 : vector<8x128xf32>
    %409 = arith.mulf %408, %408 : vector<8x128xf32>
    %410 = arith.mulf %408, %409 : vector<8x128xf32>
    %cst_103 = arith.constant 4.471500e-02 : f32
    %411 = vector.broadcast %cst_103 : f32 to vector<8x128xf32>
    %412 = arith.mulf %411, %410 : vector<8x128xf32>
    %413 = arith.addf %408, %412 : vector<8x128xf32>
    %cst_104 = arith.constant 0.797884583 : f32
    %414 = vector.broadcast %cst_104 : f32 to vector<8x128xf32>
    %415 = arith.mulf %414, %413 : vector<8x128xf32>
    %416 = math.tanh %415 : vector<8x128xf32>
    %cst_105 = arith.constant 1.000000e+00 : f32
    %417 = vector.broadcast %cst_105 : f32 to vector<8x128xf32>
    %418 = arith.addf %417, %416 : vector<8x128xf32>
    %cst_106 = arith.constant 5.000000e-01 : f32
    %419 = vector.broadcast %cst_106 : f32 to vector<8x128xf32>
    %420 = arith.mulf %419, %418 : vector<8x128xf32>
    %421 = arith.mulf %408, %420 : vector<8x128xf32>
    %c0_107 = arith.constant 0 : index
    %c0_108 = arith.constant 0 : index
    %c0_109 = arith.constant 0 : index
    %422 = vector.load %arg16[%c0_107, %c0_108, %c0_109] : memref<2x128x64xf32, #tpu.memory_space<vmem>>, vector<1x128x64xf32>
    %423 = vector.shape_cast %422 : vector<1x128x64xf32> to vector<128x64xf32>
    %cst_110 = arith.constant dense<0.000000e+00> : vector<8x64xf32>
    %424 = tpu.matmul %421, %423, %cst_110 {dimension_numbers = #tpu.dot_dimension_numbers<[1], [0], [0], [1], [0, 0, 1, 1], [], []>} : vector<8x128xf32>, vector<128x64xf32>, vector<8x64xf32> -> vector<8x64xf32>
    %c0_111 = arith.constant 0 : index
    %c0_112 = arith.constant 0 : index
    %c0_113 = arith.constant 0 : index
    %425 = vector.load %arg17[%c0_111, %c0_112, %c0_113] : memref<2x1x64xf32, #tpu.memory_space<vmem>>, vector<1x1x64xf32>
    %426 = vector.shape_cast %425 : vector<1x1x64xf32> to vector<1x64xf32>
    %427 = vector.broadcast %426 : vector<1x64xf32> to vector<8x64xf32>
    %428 = arith.addf %424, %427 : vector<8x64xf32>
    %429 = arith.addf %428, %385 : vector<8x64xf32>
    %c1_114 = arith.constant 1 : index
    %c0_115 = arith.constant 0 : index
    %c0_116 = arith.constant 0 : index
    %430 = vector.load %arg2[%c1_114, %c0_115, %c0_116] : memref<2x1x64xf32, #tpu.memory_space<vmem>>, vector<1x1x64xf32>
    %431 = vector.shape_cast %430 : vector<1x1x64xf32> to vector<1x64xf32>
    %c1_117 = arith.constant 1 : index
    %c0_118 = arith.constant 0 : index
    %c0_119 = arith.constant 0 : index
    %432 = vector.load %arg3[%c1_117, %c0_118, %c0_119] : memref<2x1x64xf32, #tpu.memory_space<vmem>>, vector<1x1x64xf32>
    %433 = vector.shape_cast %432 : vector<1x1x64xf32> to vector<1x64xf32>
    %cst_120 = arith.constant dense<0.000000e+00> : vector<8x64xf32>
    %434 = tpu.matmul %429, %52, %cst_120 {dimension_numbers = #tpu.dot_dimension_numbers<[1], [0], [0], [1], [0, 0, 1, 1], [], []>} : vector<8x64xf32>, vector<64x64xf32>, vector<8x64xf32> -> vector<8x64xf32>
    %435 = arith.subf %429, %434 : vector<8x64xf32>
    %436 = arith.mulf %435, %435 : vector<8x64xf32>
    %cst_121 = arith.constant dense<0.000000e+00> : vector<8x64xf32>
    %437 = tpu.matmul %436, %52, %cst_121 {dimension_numbers = #tpu.dot_dimension_numbers<[1], [0], [0], [1], [0, 0, 1, 1], [], []>} : vector<8x64xf32>, vector<64x64xf32>, vector<8x64xf32> -> vector<8x64xf32>
    %cst_122 = arith.constant 9.99999974E-6 : f32
    %438 = vector.broadcast %cst_122 : f32 to vector<8x64xf32>
    %439 = arith.addf %437, %438 : vector<8x64xf32>
    %440 = math.rsqrt %439 : vector<8x64xf32>
    %441 = arith.mulf %435, %440 : vector<8x64xf32>
    %442 = vector.broadcast %431 : vector<1x64xf32> to vector<8x64xf32>
    %443 = arith.mulf %441, %442 : vector<8x64xf32>
    %444 = vector.broadcast %433 : vector<1x64xf32> to vector<8x64xf32>
    %445 = arith.addf %443, %444 : vector<8x64xf32>
    %c1_123 = arith.constant 1 : index
    %c0_124 = arith.constant 0 : index
    %c0_125 = arith.constant 0 : index
    %446 = vector.load %arg4[%c1_123, %c0_124, %c0_125] : memref<2x64x256xf32, #tpu.memory_space<vmem>>, vector<1x64x256xf32>
    %447 = vector.shape_cast %446 : vector<1x64x256xf32> to vector<64x256xf32>
    %cst_126 = arith.constant dense<0.000000e+00> : vector<8x256xf32>
    %448 = tpu.matmul %445, %447, %cst_126 {dimension_numbers = #tpu.dot_dimension_numbers<[1], [0], [0], [1], [0, 0, 1, 1], [], []>} : vector<8x64xf32>, vector<64x256xf32>, vector<8x256xf32> -> vector<8x256xf32>
    %449 = vector.extract_strided_slice %448 {offsets = [0, 0], sizes = [8, 128], strides = [1, 1]} : vector<8x256xf32> to vector<8x128xf32>
    %450 = vector.extract_strided_slice %448 {offsets = [0, 128], sizes = [8, 128], strides = [1, 1]} : vector<8x256xf32> to vector<8x128xf32>
    %c1_127 = arith.constant 1 : index
    %c0_128 = arith.constant 0 : index
    %c0_129 = arith.constant 0 : index
    %451 = vector.load %arg5[%c1_127, %c0_128, %c0_129] : memref<2x4x128xf32, #tpu.memory_space<vmem>>, vector<1x4x128xf32>
    %452 = vector.shape_cast %451 : vector<1x4x128xf32> to vector<4x128xf32>
    %453 = vector.extract_strided_slice %452 {offsets = [2, 0], sizes = [1, 128], strides = [1, 1]} : vector<4x128xf32> to vector<1x128xf32>
    %454 = vector.broadcast %453 : vector<1x128xf32> to vector<8x128xf32>
    %455 = arith.mulf %449, %454 : vector<8x128xf32>
    %456 = vector.extract_strided_slice %452 {offsets = [1, 0], sizes = [1, 128], strides = [1, 1]} : vector<4x128xf32> to vector<1x128xf32>
    %457 = vector.broadcast %456 : vector<1x128xf32> to vector<8x128xf32>
    %458 = arith.mulf %449, %457 : vector<8x128xf32>
    %459 = vector.extract_strided_slice %452 {offsets = [0, 0], sizes = [1, 128], strides = [1, 1]} : vector<4x128xf32> to vector<1x128xf32>
    %460 = vector.broadcast %459 : vector<1x128xf32> to vector<8x128xf32>
    %461 = arith.mulf %449, %460 : vector<8x128xf32>
    %462 = tpu.concatenate %455, %458, %461 in 0 : vector<8x128xf32>, vector<8x128xf32>, vector<8x128xf32> -> vector<24x128xf32>
    %463 = vector.extract_strided_slice %452 {offsets = [3, 0], sizes = [1, 128], strides = [1, 1]} : vector<4x128xf32> to vector<1x128xf32>
    %464 = vector.broadcast %463 : vector<1x128xf32> to vector<8x128xf32>
    %465 = arith.mulf %449, %464 : vector<8x128xf32>
    %cst_130 = arith.constant dense<0.000000e+00> : vector<8x128xf32>
    %466 = tpu.matmul %64, %462, %cst_130 {dimension_numbers = #tpu.dot_dimension_numbers<[1], [0], [0], [1], [0, 0, 1, 1], [], []>} : vector<8x24xf32>, vector<24x128xf32>, vector<8x128xf32> -> vector<8x128xf32>
    %467 = arith.addf %465, %466 : vector<8x128xf32>
    %c1_131 = arith.constant 1 : index
    %c0_132 = arith.constant 0 : index
    %c0_133 = arith.constant 0 : index
    %468 = vector.load %arg6[%c1_131, %c0_132, %c0_133] : memref<2x1x128xf32, #tpu.memory_space<vmem>>, vector<1x1x128xf32>
    %469 = vector.shape_cast %468 : vector<1x1x128xf32> to vector<1x128xf32>
    %470 = vector.broadcast %469 : vector<1x128xf32> to vector<8x128xf32>
    %471 = arith.addf %467, %470 : vector<8x128xf32>
    %472 = arith.negf %471 : vector<8x128xf32>
    %473 = math.exp %472 : vector<8x128xf32>
    %cst_134 = arith.constant 1.000000e+00 : f32
    %474 = vector.broadcast %cst_134 : f32 to vector<8x128xf32>
    %475 = arith.addf %474, %473 : vector<8x128xf32>
    %476 = arith.divf %474, %475 : vector<8x128xf32>
    %477 = arith.mulf %471, %476 : vector<8x128xf32>
    %c1_135 = arith.constant 1 : index
    %c0_136 = arith.constant 0 : index
    %c0_137 = arith.constant 0 : index
    %478 = vector.load %arg7[%c1_135, %c0_136, %c0_137] : memref<2x128x160xf32, #tpu.memory_space<vmem>>, vector<1x128x160xf32>
    %479 = vector.shape_cast %478 : vector<1x128x160xf32> to vector<128x160xf32>
    %cst_138 = arith.constant dense<0.000000e+00> : vector<8x160xf32>
    %480 = tpu.matmul %477, %479, %cst_138 {dimension_numbers = #tpu.dot_dimension_numbers<[1], [0], [0], [1], [0, 0, 1, 1], [], []>} : vector<8x128xf32>, vector<128x160xf32>, vector<8x160xf32> -> vector<8x160xf32>
    %481 = vector.extract_strided_slice %480 {offsets = [0, 0], sizes = [8, 128], strides = [1, 1]} : vector<8x160xf32> to vector<8x128xf32>
    %c1_139 = arith.constant 1 : index
    %c0_140 = arith.constant 0 : index
    %c0_141 = arith.constant 0 : index
    %482 = vector.load %arg8[%c1_139, %c0_140, %c0_141] : memref<2x1x128xf32, #tpu.memory_space<vmem>>, vector<1x1x128xf32>
    %483 = vector.shape_cast %482 : vector<1x1x128xf32> to vector<1x128xf32>
    %484 = vector.broadcast %483 : vector<1x128xf32> to vector<8x128xf32>
    %485 = arith.addf %481, %484 : vector<8x128xf32>
    %cst_142 = arith.constant 0.000000e+00 : f32
    %486 = vector.broadcast %cst_142 : f32 to vector<8x128xf32>
    %487 = arith.maximumf %485, %486 : vector<8x128xf32>
    %488 = vector.broadcast %cst_142 : f32 to vector<8x128xf32>
    %489 = arith.subf %485, %488 : vector<8x128xf32>
    %490 = arith.cmpf one, %489, %489 : vector<8x128xf32>
    %491 = vector.broadcast %cst_142 : f32 to vector<8x128xf32>
    %492 = arith.addf %485, %491 : vector<8x128xf32>
    %493 = math.absf %489 : vector<8x128xf32>
    %cst_143 = arith.constant 0.000000e+00 : f32
    %494 = vector.broadcast %cst_143 : f32 to vector<8x128xf32>
    %495 = arith.subf %494, %493 : vector<8x128xf32>
    %496 = math.exp %495 : vector<8x128xf32>
    %497 = math.log1p %496 : vector<8x128xf32>
    %498 = arith.addf %487, %497 : vector<8x128xf32>
    %499 = arith.select %490, %492, %498 : vector<8x128xi1>, vector<8x128xf32>
    %500 = vector.extract_strided_slice %480 {offsets = [0, 128], sizes = [8, 32], strides = [1, 1]} : vector<8x160xf32> to vector<8x32xf32>
    %501 = arith.mulf %499, %477 : vector<8x128xf32>
    %502 = tpu.concatenate %499, %501 in 1 : vector<8x128xf32>, vector<8x128xf32> -> vector<8x256xf32>
    %cst_144 = arith.constant dense<0.000000e+00> : vector<64x256xf32>
    %503 = tpu.matmul %6, %502, %cst_144 {dimension_numbers = #tpu.dot_dimension_numbers<[1], [0], [0], [1], [0, 0, 1, 1], [], []>} : vector<64x8xf32>, vector<8x256xf32>, vector<64x256xf32> -> vector<64x256xf32>
    %504 = vector.extract_strided_slice %503 {offsets = [0, 0], sizes = [64, 128], strides = [1, 1]} : vector<64x256xf32> to vector<64x128xf32>
    %505 = vector.extract_strided_slice %503 {offsets = [0, 128], sizes = [64, 128], strides = [1, 1]} : vector<64x256xf32> to vector<64x128xf32>
    %cst_145 = arith.constant dense<0.000000e+00> : vector<64x32xf32>
    %506 = tpu.matmul %6, %500, %cst_145 {dimension_numbers = #tpu.dot_dimension_numbers<[1], [0], [0], [1], [0, 0, 1, 1], [], []>} : vector<64x8xf32>, vector<8x32xf32>, vector<64x32xf32> -> vector<64x32xf32>
    %507 = arith.mulf %506, %22 : vector<64x32xf32>
    %cst_146 = arith.constant dense<0.000000e+00> : vector<64x256xf32>
    %508 = tpu.matmul %507, %41, %cst_146 {dimension_numbers = #tpu.dot_dimension_numbers<[1], [0], [0], [1], [0, 0, 1, 1], [], []>} : vector<64x32xf32>, vector<32x256xf32>, vector<64x256xf32> -> vector<64x256xf32>
    %509 = vector.extract_strided_slice %508 {offsets = [0, 0], sizes = [64, 128], strides = [1, 1]} : vector<64x256xf32> to vector<64x128xf32>
    %510 = vector.extract_strided_slice %508 {offsets = [0, 128], sizes = [64, 128], strides = [1, 1]} : vector<64x256xf32> to vector<64x128xf32>
    %c1_147 = arith.constant 1 : index
    %c0_148 = arith.constant 0 : index
    %c0_149 = arith.constant 0 : index
    %511 = vector.load %arg9[%c1_147, %c0_148, %c0_149] : memref<2x8x128xf32, #tpu.memory_space<vmem>>, vector<1x8x128xf32>
    %512 = vector.shape_cast %511 : vector<1x8x128xf32> to vector<8x128xf32>
    %513 = tpu.concatenate %512, %512, %512, %512, %512, %512, %512, %512 in 0 : vector<8x128xf32>, vector<8x128xf32>, vector<8x128xf32>, vector<8x128xf32>, vector<8x128xf32>, vector<8x128xf32>, vector<8x128xf32>, vector<8x128xf32> -> vector<64x128xf32>
    %514 = arith.mulf %504, %513 : vector<64x128xf32>
    %515 = math.exp %514 : vector<64x128xf32>
    %516 = arith.mulf %509, %505 : vector<64x128xf32>
    %cst_150 = arith.constant 0.000000e+00 : f32
    %517 = vector.broadcast %cst_150 : f32 to vector<8x128xf32>
    %518 = vector.extract_strided_slice %515 {offsets = [0, 0], sizes = [8, 128], strides = [1, 1]} : vector<64x128xf32> to vector<8x128xf32>
    %519 = arith.mulf %518, %517 : vector<8x128xf32>
    %520 = vector.extract_strided_slice %516 {offsets = [0, 0], sizes = [8, 128], strides = [1, 1]} : vector<64x128xf32> to vector<8x128xf32>
    %521 = arith.addf %519, %520 : vector<8x128xf32>
    %522 = vector.extract_strided_slice %510 {offsets = [0, 0], sizes = [8, 128], strides = [1, 1]} : vector<64x128xf32> to vector<8x128xf32>
    %523 = arith.mulf %521, %522 : vector<8x128xf32>
    %524 = vector.extract_strided_slice %515 {offsets = [8, 0], sizes = [8, 128], strides = [1, 1]} : vector<64x128xf32> to vector<8x128xf32>
    %525 = arith.mulf %524, %521 : vector<8x128xf32>
    %526 = vector.extract_strided_slice %516 {offsets = [8, 0], sizes = [8, 128], strides = [1, 1]} : vector<64x128xf32> to vector<8x128xf32>
    %527 = arith.addf %525, %526 : vector<8x128xf32>
    %528 = vector.extract_strided_slice %510 {offsets = [8, 0], sizes = [8, 128], strides = [1, 1]} : vector<64x128xf32> to vector<8x128xf32>
    %529 = arith.mulf %527, %528 : vector<8x128xf32>
    %530 = vector.extract_strided_slice %515 {offsets = [16, 0], sizes = [8, 128], strides = [1, 1]} : vector<64x128xf32> to vector<8x128xf32>
    %531 = arith.mulf %530, %527 : vector<8x128xf32>
    %532 = vector.extract_strided_slice %516 {offsets = [16, 0], sizes = [8, 128], strides = [1, 1]} : vector<64x128xf32> to vector<8x128xf32>
    %533 = arith.addf %531, %532 : vector<8x128xf32>
    %534 = vector.extract_strided_slice %510 {offsets = [16, 0], sizes = [8, 128], strides = [1, 1]} : vector<64x128xf32> to vector<8x128xf32>
    %535 = arith.mulf %533, %534 : vector<8x128xf32>
    %536 = vector.extract_strided_slice %515 {offsets = [24, 0], sizes = [8, 128], strides = [1, 1]} : vector<64x128xf32> to vector<8x128xf32>
    %537 = arith.mulf %536, %533 : vector<8x128xf32>
    %538 = vector.extract_strided_slice %516 {offsets = [24, 0], sizes = [8, 128], strides = [1, 1]} : vector<64x128xf32> to vector<8x128xf32>
    %539 = arith.addf %537, %538 : vector<8x128xf32>
    %540 = vector.extract_strided_slice %510 {offsets = [24, 0], sizes = [8, 128], strides = [1, 1]} : vector<64x128xf32> to vector<8x128xf32>
    %541 = arith.mulf %539, %540 : vector<8x128xf32>
    %542 = vector.extract_strided_slice %515 {offsets = [32, 0], sizes = [8, 128], strides = [1, 1]} : vector<64x128xf32> to vector<8x128xf32>
    %543 = arith.mulf %542, %539 : vector<8x128xf32>
    %544 = vector.extract_strided_slice %516 {offsets = [32, 0], sizes = [8, 128], strides = [1, 1]} : vector<64x128xf32> to vector<8x128xf32>
    %545 = arith.addf %543, %544 : vector<8x128xf32>
    %546 = vector.extract_strided_slice %510 {offsets = [32, 0], sizes = [8, 128], strides = [1, 1]} : vector<64x128xf32> to vector<8x128xf32>
    %547 = arith.mulf %545, %546 : vector<8x128xf32>
    %548 = vector.extract_strided_slice %515 {offsets = [40, 0], sizes = [8, 128], strides = [1, 1]} : vector<64x128xf32> to vector<8x128xf32>
    %549 = arith.mulf %548, %545 : vector<8x128xf32>
    %550 = vector.extract_strided_slice %516 {offsets = [40, 0], sizes = [8, 128], strides = [1, 1]} : vector<64x128xf32> to vector<8x128xf32>
    %551 = arith.addf %549, %550 : vector<8x128xf32>
    %552 = vector.extract_strided_slice %510 {offsets = [40, 0], sizes = [8, 128], strides = [1, 1]} : vector<64x128xf32> to vector<8x128xf32>
    %553 = arith.mulf %551, %552 : vector<8x128xf32>
    %554 = vector.extract_strided_slice %515 {offsets = [48, 0], sizes = [8, 128], strides = [1, 1]} : vector<64x128xf32> to vector<8x128xf32>
    %555 = arith.mulf %554, %551 : vector<8x128xf32>
    %556 = vector.extract_strided_slice %516 {offsets = [48, 0], sizes = [8, 128], strides = [1, 1]} : vector<64x128xf32> to vector<8x128xf32>
    %557 = arith.addf %555, %556 : vector<8x128xf32>
    %558 = vector.extract_strided_slice %510 {offsets = [48, 0], sizes = [8, 128], strides = [1, 1]} : vector<64x128xf32> to vector<8x128xf32>
    %559 = arith.mulf %557, %558 : vector<8x128xf32>
    %560 = vector.extract_strided_slice %515 {offsets = [56, 0], sizes = [8, 128], strides = [1, 1]} : vector<64x128xf32> to vector<8x128xf32>
    %561 = arith.mulf %560, %557 : vector<8x128xf32>
    %562 = vector.extract_strided_slice %516 {offsets = [56, 0], sizes = [8, 128], strides = [1, 1]} : vector<64x128xf32> to vector<8x128xf32>
    %563 = arith.addf %561, %562 : vector<8x128xf32>
    %564 = vector.extract_strided_slice %510 {offsets = [56, 0], sizes = [8, 128], strides = [1, 1]} : vector<64x128xf32> to vector<8x128xf32>
    %565 = arith.mulf %563, %564 : vector<8x128xf32>
    %566 = tpu.concatenate %523, %529, %535, %541, %547, %553, %559, %565 in 0 : vector<8x128xf32>, vector<8x128xf32>, vector<8x128xf32>, vector<8x128xf32>, vector<8x128xf32>, vector<8x128xf32>, vector<8x128xf32>, vector<8x128xf32> -> vector<64x128xf32>
    %cst_151 = arith.constant dense<0.000000e+00> : vector<8x128xf32>
    %567 = tpu.matmul %13, %566, %cst_151 {dimension_numbers = #tpu.dot_dimension_numbers<[1], [0], [0], [1], [0, 0, 1, 1], [], []>} : vector<8x64xf32>, vector<64x128xf32>, vector<8x128xf32> -> vector<8x128xf32>
    %c1_152 = arith.constant 1 : index
    %c0_153 = arith.constant 0 : index
    %c0_154 = arith.constant 0 : index
    %568 = vector.load %arg10[%c1_152, %c0_153, %c0_154] : memref<2x1x128xf32, #tpu.memory_space<vmem>>, vector<1x1x128xf32>
    %569 = vector.shape_cast %568 : vector<1x1x128xf32> to vector<1x128xf32>
    %570 = vector.broadcast %569 : vector<1x128xf32> to vector<8x128xf32>
    %571 = arith.mulf %570, %477 : vector<8x128xf32>
    %572 = arith.addf %567, %571 : vector<8x128xf32>
    %573 = arith.negf %450 : vector<8x128xf32>
    %574 = math.exp %573 : vector<8x128xf32>
    %cst_155 = arith.constant 1.000000e+00 : f32
    %575 = vector.broadcast %cst_155 : f32 to vector<8x128xf32>
    %576 = arith.addf %575, %574 : vector<8x128xf32>
    %577 = arith.divf %575, %576 : vector<8x128xf32>
    %578 = arith.mulf %450, %577 : vector<8x128xf32>
    %579 = arith.mulf %572, %578 : vector<8x128xf32>
    %c1_156 = arith.constant 1 : index
    %c0_157 = arith.constant 0 : index
    %c0_158 = arith.constant 0 : index
    %580 = vector.load %arg11[%c1_156, %c0_157, %c0_158] : memref<2x128x64xf32, #tpu.memory_space<vmem>>, vector<1x128x64xf32>
    %581 = vector.shape_cast %580 : vector<1x128x64xf32> to vector<128x64xf32>
    %cst_159 = arith.constant dense<0.000000e+00> : vector<8x64xf32>
    %582 = tpu.matmul %579, %581, %cst_159 {dimension_numbers = #tpu.dot_dimension_numbers<[1], [0], [0], [1], [0, 0, 1, 1], [], []>} : vector<8x128xf32>, vector<128x64xf32>, vector<8x64xf32> -> vector<8x64xf32>
    %583 = arith.addf %582, %429 : vector<8x64xf32>
    %c1_160 = arith.constant 1 : index
    %c0_161 = arith.constant 0 : index
    %c0_162 = arith.constant 0 : index
    %584 = vector.load %arg12[%c1_160, %c0_161, %c0_162] : memref<2x1x64xf32, #tpu.memory_space<vmem>>, vector<1x1x64xf32>
    %585 = vector.shape_cast %584 : vector<1x1x64xf32> to vector<1x64xf32>
    %c1_163 = arith.constant 1 : index
    %c0_164 = arith.constant 0 : index
    %c0_165 = arith.constant 0 : index
    %586 = vector.load %arg13[%c1_163, %c0_164, %c0_165] : memref<2x1x64xf32, #tpu.memory_space<vmem>>, vector<1x1x64xf32>
    %587 = vector.shape_cast %586 : vector<1x1x64xf32> to vector<1x64xf32>
    %cst_166 = arith.constant dense<0.000000e+00> : vector<8x64xf32>
    %588 = tpu.matmul %583, %52, %cst_166 {dimension_numbers = #tpu.dot_dimension_numbers<[1], [0], [0], [1], [0, 0, 1, 1], [], []>} : vector<8x64xf32>, vector<64x64xf32>, vector<8x64xf32> -> vector<8x64xf32>
    %589 = arith.subf %583, %588 : vector<8x64xf32>
    %590 = arith.mulf %589, %589 : vector<8x64xf32>
    %cst_167 = arith.constant dense<0.000000e+00> : vector<8x64xf32>
    %591 = tpu.matmul %590, %52, %cst_167 {dimension_numbers = #tpu.dot_dimension_numbers<[1], [0], [0], [1], [0, 0, 1, 1], [], []>} : vector<8x64xf32>, vector<64x64xf32>, vector<8x64xf32> -> vector<8x64xf32>
    %cst_168 = arith.constant 9.99999974E-6 : f32
    %592 = vector.broadcast %cst_168 : f32 to vector<8x64xf32>
    %593 = arith.addf %591, %592 : vector<8x64xf32>
    %594 = math.rsqrt %593 : vector<8x64xf32>
    %595 = arith.mulf %589, %594 : vector<8x64xf32>
    %596 = vector.broadcast %585 : vector<1x64xf32> to vector<8x64xf32>
    %597 = arith.mulf %595, %596 : vector<8x64xf32>
    %598 = vector.broadcast %587 : vector<1x64xf32> to vector<8x64xf32>
    %599 = arith.addf %597, %598 : vector<8x64xf32>
    %c1_169 = arith.constant 1 : index
    %c0_170 = arith.constant 0 : index
    %c0_171 = arith.constant 0 : index
    %600 = vector.load %arg14[%c1_169, %c0_170, %c0_171] : memref<2x64x128xf32, #tpu.memory_space<vmem>>, vector<1x64x128xf32>
    %601 = vector.shape_cast %600 : vector<1x64x128xf32> to vector<64x128xf32>
    %cst_172 = arith.constant dense<0.000000e+00> : vector<8x128xf32>
    %602 = tpu.matmul %599, %601, %cst_172 {dimension_numbers = #tpu.dot_dimension_numbers<[1], [0], [0], [1], [0, 0, 1, 1], [], []>} : vector<8x64xf32>, vector<64x128xf32>, vector<8x128xf32> -> vector<8x128xf32>
    %c1_173 = arith.constant 1 : index
    %c0_174 = arith.constant 0 : index
    %c0_175 = arith.constant 0 : index
    %603 = vector.load %arg15[%c1_173, %c0_174, %c0_175] : memref<2x1x128xf32, #tpu.memory_space<vmem>>, vector<1x1x128xf32>
    %604 = vector.shape_cast %603 : vector<1x1x128xf32> to vector<1x128xf32>
    %605 = vector.broadcast %604 : vector<1x128xf32> to vector<8x128xf32>
    %606 = arith.addf %602, %605 : vector<8x128xf32>
    %607 = arith.mulf %606, %606 : vector<8x128xf32>
    %608 = arith.mulf %606, %607 : vector<8x128xf32>
    %cst_176 = arith.constant 4.471500e-02 : f32
    %609 = vector.broadcast %cst_176 : f32 to vector<8x128xf32>
    %610 = arith.mulf %609, %608 : vector<8x128xf32>
    %611 = arith.addf %606, %610 : vector<8x128xf32>
    %cst_177 = arith.constant 0.797884583 : f32
    %612 = vector.broadcast %cst_177 : f32 to vector<8x128xf32>
    %613 = arith.mulf %612, %611 : vector<8x128xf32>
    %614 = math.tanh %613 : vector<8x128xf32>
    %cst_178 = arith.constant 1.000000e+00 : f32
    %615 = vector.broadcast %cst_178 : f32 to vector<8x128xf32>
    %616 = arith.addf %615, %614 : vector<8x128xf32>
    %cst_179 = arith.constant 5.000000e-01 : f32
    %617 = vector.broadcast %cst_179 : f32 to vector<8x128xf32>
    %618 = arith.mulf %617, %616 : vector<8x128xf32>
    %619 = arith.mulf %606, %618 : vector<8x128xf32>
    %c1_180 = arith.constant 1 : index
    %c0_181 = arith.constant 0 : index
    %c0_182 = arith.constant 0 : index
    %620 = vector.load %arg16[%c1_180, %c0_181, %c0_182] : memref<2x128x64xf32, #tpu.memory_space<vmem>>, vector<1x128x64xf32>
    %621 = vector.shape_cast %620 : vector<1x128x64xf32> to vector<128x64xf32>
    %cst_183 = arith.constant dense<0.000000e+00> : vector<8x64xf32>
    %622 = tpu.matmul %619, %621, %cst_183 {dimension_numbers = #tpu.dot_dimension_numbers<[1], [0], [0], [1], [0, 0, 1, 1], [], []>} : vector<8x128xf32>, vector<128x64xf32>, vector<8x64xf32> -> vector<8x64xf32>
    %c1_184 = arith.constant 1 : index
    %c0_185 = arith.constant 0 : index
    %c0_186 = arith.constant 0 : index
    %623 = vector.load %arg17[%c1_184, %c0_185, %c0_186] : memref<2x1x64xf32, #tpu.memory_space<vmem>>, vector<1x1x64xf32>
    %624 = vector.shape_cast %623 : vector<1x1x64xf32> to vector<1x64xf32>
    %625 = vector.broadcast %624 : vector<1x64xf32> to vector<8x64xf32>
    %626 = arith.addf %622, %625 : vector<8x64xf32>
    %627 = arith.addf %626, %583 : vector<8x64xf32>
    %c0_187 = arith.constant 0 : index
    %c0_188 = arith.constant 0 : index
    %628 = vector.load %arg18[%c0_187, %c0_188] : memref<1x64xf32, #tpu.memory_space<vmem>>, vector<1x64xf32>
    %c0_189 = arith.constant 0 : index
    %c0_190 = arith.constant 0 : index
    %629 = vector.load %arg19[%c0_189, %c0_190] : memref<1x64xf32, #tpu.memory_space<vmem>>, vector<1x64xf32>
    %cst_191 = arith.constant dense<0.000000e+00> : vector<8x64xf32>
    %630 = tpu.matmul %627, %52, %cst_191 {dimension_numbers = #tpu.dot_dimension_numbers<[1], [0], [0], [1], [0, 0, 1, 1], [], []>} : vector<8x64xf32>, vector<64x64xf32>, vector<8x64xf32> -> vector<8x64xf32>
    %631 = arith.subf %627, %630 : vector<8x64xf32>
    %632 = arith.mulf %631, %631 : vector<8x64xf32>
    %cst_192 = arith.constant dense<0.000000e+00> : vector<8x64xf32>
    %633 = tpu.matmul %632, %52, %cst_192 {dimension_numbers = #tpu.dot_dimension_numbers<[1], [0], [0], [1], [0, 0, 1, 1], [], []>} : vector<8x64xf32>, vector<64x64xf32>, vector<8x64xf32> -> vector<8x64xf32>
    %cst_193 = arith.constant 9.99999974E-6 : f32
    %634 = vector.broadcast %cst_193 : f32 to vector<8x64xf32>
    %635 = arith.addf %633, %634 : vector<8x64xf32>
    %636 = math.rsqrt %635 : vector<8x64xf32>
    %637 = arith.mulf %631, %636 : vector<8x64xf32>
    %638 = vector.broadcast %628 : vector<1x64xf32> to vector<8x64xf32>
    %639 = arith.mulf %637, %638 : vector<8x64xf32>
    %640 = vector.broadcast %629 : vector<1x64xf32> to vector<8x64xf32>
    %641 = arith.addf %639, %640 : vector<8x64xf32>
    %c0_194 = arith.constant 0 : index
    %c0_195 = arith.constant 0 : index
    %642 = vector.load %arg20[%c0_194, %c0_195] : memref<64x128xf32, #tpu.memory_space<vmem>>, vector<64x128xf32>
    %cst_196 = arith.constant dense<0.000000e+00> : vector<8x128xf32>
    %643 = tpu.matmul %641, %642, %cst_196 {dimension_numbers = #tpu.dot_dimension_numbers<[1], [0], [0], [1], [0, 0, 1, 1], [], []>} : vector<8x64xf32>, vector<64x128xf32>, vector<8x128xf32> -> vector<8x128xf32>
    %c0_197 = arith.constant 0 : index
    %c0_198 = arith.constant 0 : index
    %644 = vector.load %arg21[%c0_197, %c0_198] : memref<8x128xf32, #tpu.memory_space<vmem>>, vector<8x128xf32>
    tpu.vector_store %arg21[%c0_197, %c0_198], %643 {strides = array<i32>} : memref<8x128xf32, #tpu.memory_space<vmem>>, vector<8x128xf32>,
    return
  }
}

</mosaic_0001>

<llo_original>
// kernel: barcode_mamba_forward.1
$region0: #{barcode_mamba_forward.1}
  #allocation0 [shape = 'u32[]', space=smem, size = 0x4, offset = 0x4, fixed_abs, tag = 'smem constant byte address 0x4 - core index']
  #allocation1 [shape = 'u32[144,128]{1,0:T(1,128)}', space=vmem, size = 0x12000, scoped, tag = 'internal scratch']
  %s0 = inlined_call_operand.vmem [shape: s32[16], index: 0, kind: input, shape index: {}]
  %s1 = inlined_call_operand.vmem [shape: f32[32,64], index: 1, kind: input, shape index: {}]
  %s2 = inlined_call_operand.vmem [shape: f32[2,1,64], index: 2, kind: input, shape index: {}]
  %s3 = inlined_call_operand.vmem [shape: f32[2,1,64], index: 3, kind: input, shape index: {}]
  %s4 = inlined_call_operand.vmem [shape: f32[2,64,256], index: 4, kind: input, shape index: {}]
  %s5 = inlined_call_operand.vmem [shape: f32[2,4,128], index: 5, kind: input, shape index: {}]
  %s6 = inlined_call_operand.vmem [shape: f32[2,1,128], index: 6, kind: input, shape index: {}]
  %s7 = inlined_call_operand.vmem [shape: f32[2,128,160], index: 7, kind: input, shape index: {}]
  %s8 = inlined_call_operand.vmem [shape: f32[2,1,128], index: 8, kind: input, shape index: {}]
  %s9 = inlined_call_operand.vmem [shape: f32[2,8,128], index: 9, kind: input, shape index: {}]
  %s10 = inlined_call_operand.vmem [shape: f32[2,1,128], index: 10, kind: input, shape index: {}]
  %s11 = inlined_call_operand.vmem [shape: f32[2,128,64], index: 11, kind: input, shape index: {}]
  %s12 = inlined_call_operand.vmem [shape: f32[2,1,64], index: 12, kind: input, shape index: {}]
  %s13 = inlined_call_operand.vmem [shape: f32[2,1,64], index: 13, kind: input, shape index: {}]
  %s14 = inlined_call_operand.vmem [shape: f32[2,64,128], index: 14, kind: input, shape index: {}]
  %s15 = inlined_call_operand.vmem [shape: f32[2,1,128], index: 15, kind: input, shape index: {}]
  %s16 = inlined_call_operand.vmem [shape: f32[2,128,64], index: 16, kind: input, shape index: {}]
  %s17 = inlined_call_operand.vmem [shape: f32[2,1,64], index: 17, kind: input, shape index: {}]
  %s18 = inlined_call_operand.vmem [shape: f32[1,64], index: 18, kind: input, shape index: {}]
  %s19 = inlined_call_operand.vmem [shape: f32[1,64], index: 19, kind: input, shape index: {}]
  %s20 = inlined_call_operand.vmem [shape: f32[64,128], index: 20, kind: input, shape index: {}]
  %s21 = inlined_call_operand.vmem [shape: f32[8,128], index: 21, kind: output, shape index: {}]
  %s22 = sld [smem:[#allocation0]]
  $region98: #{barcode_mamba_forward.1} parent=0
    _
  %s24 = ssub.s32 1, %s22
  %s25 = scalar_select 0, %s24, %s22
  $region1: #{barcode_mamba_forward.1} parent=0
    #allocation2 [shape = 'u8[512]{0}', space=smem, size = 0x200, scoped, tag = 'input window, operand 0, single buffered']
    #allocation3 [shape = 's32[1]{0}', space=sflag, size = 0x4, scoped, tag = 'scoped memory for barcode_mamba_forward.1']
    %26 = vsyncpa [#allocation3], 0
    // Predicated region
    $region2: #{barcode_mamba_forward.1} parent=1 // pred_check
      _
    $region3: #{barcode_mamba_forward.1} parent=1 // pred_check_branch
      %28 = sbr.rel (0) target = $region5
    $region4: #{barcode_mamba_forward.1} parent=1 // pred_region
      %s30 = ssub.s32 16, 16
      %31 = vsyncadd [#allocation3], %s30
      %s33 = sshll.u32 %s0, 4
      %s34 = int_to_ptr.vmem [resolvable:$true] %s33
      %36 = dma.vmem_to_smem %s34, 16, [#allocation2], [#allocation3]
    $region5: #{barcode_mamba_forward.1} parent=1 // pred_fallthru
      _
    // Predicated region
    $region6: #{barcode_mamba_forward.1} parent=1 // pred_check
      _
    $region7: #{barcode_mamba_forward.1} parent=1 // pred_check_branch
      %38 = sbr.rel (0) target = $region9
    $region8: #{barcode_mamba_forward.1} parent=1 // pred_region
      _
    $region9: #{barcode_mamba_forward.1} parent=1 // pred_fallthru
      _
    // Predicated region
    $region10: #{barcode_mamba_forward.1} parent=1 // pred_check
      _
    $region11: #{barcode_mamba_forward.1} parent=1 // pred_check_branch
      %40 = sbr.rel (0) target = $region13
    $region12: #{barcode_mamba_forward.1} parent=1 // pred_region
      _
    $region13: #{barcode_mamba_forward.1} parent=1 // pred_fallthru
      _
    // Predicated region
    $region14: #{barcode_mamba_forward.1} parent=1 // pred_check
      _
    $region15: #{barcode_mamba_forward.1} parent=1 // pred_check_branch
      %42 = sbr.rel (0) target = $region17
    $region16: #{barcode_mamba_forward.1} parent=1 // pred_region
      _
    $region17: #{barcode_mamba_forward.1} parent=1 // pred_fallthru
      _
    // Predicated region
    $region18: #{barcode_mamba_forward.1} parent=1 // pred_check
      _
    $region19: #{barcode_mamba_forward.1} parent=1 // pred_check_branch
      %44 = sbr.rel (0) target = $region21
    $region20: #{barcode_mamba_forward.1} parent=1 // pred_region
      _
    $region21: #{barcode_mamba_forward.1} parent=1 // pred_fallthru
      _
    // Predicated region
    $region22: #{barcode_mamba_forward.1} parent=1 // pred_check
      _
    $region23: #{barcode_mamba_forward.1} parent=1 // pred_check_branch
      %46 = sbr.rel (0) target = $region25
    $region24: #{barcode_mamba_forward.1} parent=1 // pred_region
      _
    $region25: #{barcode_mamba_forward.1} parent=1 // pred_fallthru
      _
    // Predicated region
    $region26: #{barcode_mamba_forward.1} parent=1 // pred_check
      _
    $region27: #{barcode_mamba_forward.1} parent=1 // pred_check_branch
      %48 = sbr.rel (0) target = $region29
    $region28: #{barcode_mamba_forward.1} parent=1 // pred_region
      _
    $region29: #{barcode_mamba_forward.1} parent=1 // pred_fallthru
      _
    // Predicated region
    $region30: #{barcode_mamba_forward.1} parent=1 // pred_check
      _
    $region31: #{barcode_mamba_forward.1} parent=1 // pred_check_branch
      %50 = sbr.rel (0) target = $region33
    $region32: #{barcode_mamba_forward.1} parent=1 // pred_region
      _
    $region33: #{barcode_mamba_forward.1} parent=1 // pred_fallthru
      _
    // Predicated region
    $region34: #{barcode_mamba_forward.1} parent=1 // pred_check
      _
    $region35: #{barcode_mamba_forward.1} parent=1 // pred_check_branch
      %52 = sbr.rel (0) target = $region37
    $region36: #{barcode_mamba_forward.1} parent=1 // pred_region
      _
    $region37: #{barcode_mamba_forward.1} parent=1 // pred_fallthru
      _
    // Predicated region
    $region38: #{barcode_mamba_forward.1} parent=1 // pred_check
      _
    $region39: #{barcode_mamba_forward.1} parent=1 // pred_check_branch
      %54 = sbr.rel (0) target = $region41
    $region40: #{barcode_mamba_forward.1} parent=1 // pred_region
      _
    $region41: #{barcode_mamba_forward.1} parent=1 // pred_fallthru
      _
    // Predicated region
    $region42: #{barcode_mamba_forward.1} parent=1 // pred_check
      _
    $region43: #{barcode_mamba_forward.1} parent=1 // pred_check_branch
      %56 = sbr.rel (0) target = $region45
    $region44: #{barcode_mamba_forward.1} parent=1 // pred_region
      _
    $region45: #{barcode_mamba_forward.1} parent=1 // pred_fallthru
      _
    // Predicated region
    $region46: #{barcode_mamba_forward.1} parent=1 // pred_check
      _
    $region47: #{barcode_mamba_forward.1} parent=1 // pred_check_branch
      %58 = sbr.rel (0) target = $region49
    $region48: #{barcode_mamba_forward.1} parent=1 // pred_region
      _
    $region49: #{barcode_mamba_forward.1} parent=1 // pred_fallthru
      _
    // Predicated region
    $region50: #{barcode_mamba_forward.1} parent=1 // pred_check
      _
    $region51: #{barcode_mamba_forward.1} parent=1 // pred_check_branch
      %60 = sbr.rel (0) target = $region53
    $region52: #{barcode_mamba_forward.1} parent=1 // pred_region
      _
    $region53: #{barcode_mamba_forward.1} parent=1 // pred_fallthru
      _
    // Predicated region
    $region54: #{barcode_mamba_forward.1} parent=1 // pred_check
      _
    $region55: #{barcode_mamba_forward.1} parent=1 // pred_check_branch
      %62 = sbr.rel (0) target = $region57
    $region56: #{barcode_mamba_forward.1} parent=1 // pred_region
      _
    $region57: #{barcode_mamba_forward.1} parent=1 // pred_fallthru
      _
    // Predicated region
    $region58: #{barcode_mamba_forward.1} parent=1 // pred_check
      _
    $region59: #{barcode_mamba_forward.1} parent=1 // pred_check_branch
      %64 = sbr.rel (0) target = $region61
    $region60: #{barcode_mamba_forward.1} parent=1 // pred_region
      _
    $region61: #{barcode_mamba_forward.1} parent=1 // pred_fallthru
      _
    // Predicated region
    $region62: #{barcode_mamba_forward.1} parent=1 // pred_check
      _
    $region63: #{barcode_mamba_forward.1} parent=1 // pred_check_branch
      %66 = sbr.rel (0) target = $region65
    $region64: #{barcode_mamba_forward.1} parent=1 // pred_region
      _
    $region65: #{barcode_mamba_forward.1} parent=1 // pred_fallthru
      _
    // Predicated region
    $region66: #{barcode_mamba_forward.1} parent=1 // pred_check
      _
    $region67: #{barcode_mamba_forward.1} parent=1 // pred_check_branch
      %68 = sbr.rel (0) target = $region69
    $region68: #{barcode_mamba_forward.1} parent=1 // pred_region
      _
    $region69: #{barcode_mamba_forward.1} parent=1 // pred_fallthru
      _
    // Predicated region
    $region70: #{barcode_mamba_forward.1} parent=1 // pred_check
      _
    $region71: #{barcode_mamba_forward.1} parent=1 // pred_check_branch
      %70 = sbr.rel (0) target = $region73
    $region72: #{barcode_mamba_forward.1} parent=1 // pred_region
      _
    $region73: #{barcode_mamba_forward.1} parent=1 // pred_fallthru
      _
    // Predicated region
    $region74: #{barcode_mamba_forward.1} parent=1 // pred_check
      _
    $region75: #{barcode_mamba_forward.1} parent=1 // pred_check_branch
      %72 = sbr.rel (0) target = $region77
    $region76: #{barcode_mamba_forward.1} parent=1 // pred_region
      _
    $region77: #{barcode_mamba_forward.1} parent=1 // pred_fallthru
      _
    // Predicated region
    $region78: #{barcode_mamba_forward.1} parent=1 // pred_check
      _
    $region79: #{barcode_mamba_forward.1} parent=1 // pred_check_branch
      %74 = sbr.rel (0) target = $region81
    $region80: #{barcode_mamba_forward.1} parent=1 // pred_region
      _
    $region81: #{barcode_mamba_forward.1} parent=1 // pred_fallthru
      _
    // Predicated region
    $region82: #{barcode_mamba_forward.1} parent=1 // pred_check
      _
    $region83: #{barcode_mamba_forward.1} parent=1 // pred_check_branch
      %76 = sbr.rel (0) target = $region85
    $region84: #{barcode_mamba_forward.1} parent=1 // pred_region
      _
    $region85: #{barcode_mamba_forward.1} parent=1 // pred_fallthru
      _
    // Predicated region
    $region86: #{barcode_mamba_forward.1} parent=1 // pred_check
      _
    $region87: #{barcode_mamba_forward.1} parent=1 // pred_check_branch
      %78 = sbr.rel (0) target = $region89
    $region88: #{barcode_mamba_forward.1} parent=1 // pred_region
      %79 = dma.done [#allocation3], 16
    $region89: #{barcode_mamba_forward.1} parent=1 // pred_fallthru
      _
    %80 = sfence
    %v81 = vlaneseq
    %v82 = vshrl.u32 %v81, 7
    %v83 = vadd.s32 %v82, 8
    %v84 = vadd.s32 %v82, 16
    %v85 = vadd.s32 %v82, 24
    %v86 = vadd.s32 %v82, 32
    %v87 = vadd.s32 %v82, 40
    %v88 = vadd.s32 %v82, 48
    %v89 = vadd.s32 %v82, 56
    %v90 = vshra.s32 %v82, 3
    %v91 = vshra.s32 %v83, 3
    %v92 = vshra.s32 %v84, 3
    %v93 = vshra.s32 %v85, 3
    %v94 = vshra.s32 %v86, 3
    %v95 = vshra.s32 %v87, 3
    %v96 = vshra.s32 %v88, 3
    %v97 = vshra.s32 %v89, 3
    %v98 = vlaneseq
    %v99 = vand.u32 %v98, 127
    %vm100 = vcmp.eq.s32.totalorder %v90, %v99
    %vm101 = vcmp.eq.s32.totalorder %v91, %v99
    %vm102 = vcmp.eq.s32.totalorder %v92, %v99
    %vm103 = vcmp.eq.s32.totalorder %v93, %v99
    %vm104 = vcmp.eq.s32.totalorder %v94, %v99
    %vm105 = vcmp.eq.s32.totalorder %v95, %v99
    %vm106 = vcmp.eq.s32.totalorder %v96, %v99
    %vm107 = vcmp.eq.s32.totalorder %v97, %v99
    %v108 = vsel %vm100, 1, 0
    %v109 = vsel %vm101, 1, 0
    %v110 = vsel %vm102, 1, 0
    %v111 = vsel %vm103, 1, 0
    %v112 = vsel %vm104, 1, 0
    %v113 = vsel %vm105, 1, 0
    %v114 = vsel %vm106, 1, 0
    %v115 = vsel %vm107, 1, 0
    %v116 = vcvt.s32.f32 %v108
    %v117 = vcvt.s32.f32 %v109
    %v118 = vcvt.s32.f32 %v110
    %v119 = vcvt.s32.f32 %v111
    %v120 = vcvt.s32.f32 %v112
    %v121 = vcvt.s32.f32 %v113
    %v122 = vcvt.s32.f32 %v114
    %v123 = vcvt.s32.f32 %v115
    %v124 = vshra.s32 %v99, 3
    %vm125 = vcmp.eq.s32.totalorder %v124, %v82
    %v126 = vsel %vm125, 1, 0
    %v127 = vcvt.s32.f32 %v126
    %v128 = vand.u32 %v82, 7
    %v129 = vand.u32 %v83, 7
    %v130 = vand.u32 %v84, 7
    %v131 = vand.u32 %v85, 7
    %v132 = vand.u32 %v86, 7
    %v133 = vand.u32 %v87, 7
    %v134 = vand.u32 %v88, 7
    %v135 = vand.u32 %v89, 7
    %v136 = vand.u32 %v99, 7
    %vm137 = vcmp.eq.s32.totalorder %v128, %v136
    %vm138 = vcmp.eq.s32.totalorder %v129, %v136
    %vm139 = vcmp.eq.s32.totalorder %v130, %v136
    %vm140 = vcmp.eq.s32.totalorder %v131, %v136
    %vm141 = vcmp.eq.s32.totalorder %v132, %v136
    %vm142 = vcmp.eq.s32.totalorder %v133, %v136
    %vm143 = vcmp.eq.s32.totalorder %v134, %v136
    %vm144 = vcmp.eq.s32.totalorder %v135, %v136
    %v145 = vsel %vm137, 1, 0
    %v146 = vsel %vm138, 1, 0
    %v147 = vsel %vm139, 1, 0
    %v148 = vsel %vm140, 1, 0
    %v149 = vsel %vm141, 1, 0
    %v150 = vsel %vm142, 1, 0
    %v151 = vsel %vm143, 1, 0
    %v152 = vsel %vm144, 1, 0
    %v153 = vcvt.s32.f32 %v145
    %v154 = vcvt.s32.f32 %v146
    %v155 = vcvt.s32.f32 %v147
    %v156 = vcvt.s32.f32 %v148
    %v157 = vcvt.s32.f32 %v149
    %v158 = vcvt.s32.f32 %v150
    %v159 = vcvt.s32.f32 %v151
    %v160 = vcvt.s32.f32 %v152
    %v161 = vadd.s32 %v99, 128
    %v162 = vshra.s32 %v82, 4
    %v163 = vshra.s32 %v83, 4
    %v164 = vshra.s32 %v84, 4
    %v165 = vshra.s32 %v85, 4
    %v166 = vshra.s32 %v99, 7
    %v167 = vshra.s32 %v161, 7
    %vm168 = vcmp.eq.s32.totalorder %v162, %v166
    %vm169 = vcmp.eq.s32.totalorder %v162, %v167
    %vm170 = vcmp.eq.s32.totalorder %v163, %v166
    %vm171 = vcmp.eq.s32.totalorder %v163, %v167
    %vm172 = vcmp.eq.s32.totalorder %v164, %v166
    %vm173 = vcmp.eq.s32.totalorder %v164, %v167
    %vm174 = vcmp.eq.s32.totalorder %v165, %v166
    %vm175 = vcmp.eq.s32.totalorder %v165, %v167
    %v176 = vand.u32 %v82, 15
    %v177 = vand.u32 %v83, 15
    %v178 = vand.u32 %v84, 15
    %v179 = vand.u32 %v85, 15
    %v180 = vshra.s32 %v176, 3
    %v181 = vshra.s32 %v177, 3
    %v182 = vshra.s32 %v178, 3
    %v183 = vshra.s32 %v179, 3
    %v184 = vand.u32 %v99, 127
    %v185 = vand.u32 %v161, 127
    %v186 = vshra.s32 %v184, 6
    %v187 = vshra.s32 %v185, 6
    %vm188 = vcmp.eq.s32.totalorder %v180, %v186
    %vm189 = vcmp.eq.s32.totalorder %v180, %v187
    %vm190 = vcmp.eq.s32.totalorder %v181, %v186
    %vm191 = vcmp.eq.s32.totalorder %v181, %v187
    %vm192 = vcmp.eq.s32.totalorder %v182, %v186
    %vm193 = vcmp.eq.s32.totalorder %v182, %v187
    %vm194 = vcmp.eq.s32.totalorder %v183, %v186
    %vm195 = vcmp.eq.s32.totalorder %v183, %v187
    %vm196 = vmand %vm168, %vm188
    %vm197 = vmand %vm169, %vm189
    %vm198 = vmand %vm170, %vm190
    %vm199 = vmand %vm171, %vm191
    %vm200 = vmand %vm172, %vm192
    %vm201 = vmand %vm173, %vm193
    %vm202 = vmand %vm174, %vm194
    %vm203 = vmand %vm175, %vm195
    %v204 = vsel %vm196, 1, 0
    %v205 = vsel %vm197, 1, 0
    %v206 = vsel %vm198, 1, 0
    %v207 = vsel %vm199, 1, 0
    %v208 = vsel %vm200, 1, 0
    %v209 = vsel %vm201, 1, 0
    %v210 = vsel %vm202, 1, 0
    %v211 = vsel %vm203, 1, 0
    %v212 = vcvt.s32.f32 %v204
    %v213 = vcvt.s32.f32 %v205
    %v214 = vcvt.s32.f32 %v206
    %v215 = vcvt.s32.f32 %v207
    %v216 = vcvt.s32.f32 %v208
    %v217 = vcvt.s32.f32 %v209
    %v218 = vcvt.s32.f32 %v210
    %v219 = vcvt.s32.f32 %v211
    %v220 = vshra.s32 %v82, 5
    %v221 = vshra.s32 %v83, 5
    %v222 = vshra.s32 %v84, 5
    %v223 = vshra.s32 %v85, 5
    %v224 = vshra.s32 %v86, 5
    %v225 = vshra.s32 %v87, 5
    %v226 = vshra.s32 %v88, 5
    %v227 = vshra.s32 %v89, 5
    %v228 = vshra.s32 %v99, 5
    %vm229 = vcmp.eq.s32.totalorder %v220, %v228
    %vm230 = vcmp.eq.s32.totalorder %v221, %v228
    %vm231 = vcmp.eq.s32.totalorder %v222, %v228
    %vm232 = vcmp.eq.s32.totalorder %v223, %v228
    %vm233 = vcmp.eq.s32.totalorder %v224, %v228
    %vm234 = vcmp.eq.s32.totalorder %v225, %v228
    %vm235 = vcmp.eq.s32.totalorder %v226, %v228
    %vm236 = vcmp.eq.s32.totalorder %v227, %v228
    %v237 = vsel %vm229, 1, 0
    %v238 = vsel %vm230, 1, 0
    %v239 = vsel %vm231, 1, 0
    %v240 = vsel %vm232, 1, 0
    %v241 = vsel %vm233, 1, 0
    %v242 = vsel %vm234, 1, 0
    %v243 = vsel %vm235, 1, 0
    %v244 = vsel %vm236, 1, 0
    %v245 = vcvt.s32.f32 %v237
    %v246 = vcvt.s32.f32 %v238
    %v247 = vcvt.s32.f32 %v239
    %v248 = vcvt.s32.f32 %v240
    %v249 = vcvt.s32.f32 %v241
    %v250 = vcvt.s32.f32 %v242
    %v251 = vcvt.s32.f32 %v243
    %v252 = vcvt.s32.f32 %v244
    %v253 = vmul.f32 %v245, 0.03125
    %v254 = vmul.f32 %v246, 0.03125
    %v255 = vmul.f32 %v247, 0.03125
    %v256 = vmul.f32 %v248, 0.03125
    %v257 = vmul.f32 %v249, 0.03125
    %v258 = vmul.f32 %v250, 0.03125
    %v259 = vmul.f32 %v251, 0.03125
    %v260 = vmul.f32 %v252, 0.03125
    %v261 = vsub.s32 %v82, %v136
    %v262 = vadd.s32 %v124, 1
    %vm263 = vcmp.eq.s32.totalorder %v261, %v262
    %v264 = vsel %vm263, 1, 0
    %v265 = vcvt.s32.f32 %v264
    %s266 = sld [smem:[#allocation2]]
    %vm267 = vcmp.eq.s32.totalorder %v82, 0
    %v268 = vstv %s266
    %vm269 = vcmp.eq.s32.totalorder %v99, %v268
    %vm270 = vmand %vm267, %vm269
    %v271 = vsel %vm270, 1, 0
    %v272 = vcvt.s32.f32 %v271
    %v273 = vadd.f32 %v272, 0.0
    %s274 = sld [smem:[#allocation2 + $0x1]]
    %vm275 = vcmp.eq.s32.totalorder %v82, 1
    %v276 = vstv %s274
    %vm277 = vcmp.eq.s32.totalorder %v99, %v276
    %vm278 = vmand %vm275, %vm277
    %v279 = vsel %vm278, 1, 0
    %v280 = vcvt.s32.f32 %v279
    %v281 = vadd.f32 %v273, %v280
    %s282 = sld [smem:[#allocation2 + $0x2]]
    %vm283 = vcmp.eq.s32.totalorder %v82, 2
    %v284 = vstv %s282
    %vm285 = vcmp.eq.s32.totalorder %v99, %v284
    %vm286 = vmand %vm283, %vm285
    %v287 = vsel %vm286, 1, 0
    %v288 = vcvt.s32.f32 %v287
    %v289 = vadd.f32 %v281, %v288
    %s290 = sld [smem:[#allocation2 + $0x3]]
    %vm291 = vcmp.eq.s32.totalorder %v82, 3
    %v292 = vstv %s290
    %vm293 = vcmp.eq.s32.totalorder %v99, %v292
    %vm294 = vmand %vm291, %vm293
    %v295 = vsel %vm294, 1, 0
    %v296 = vcvt.s32.f32 %v295
    %v297 = vadd.f32 %v289, %v296
    %s298 = sld [smem:[#allocation2 + $0x4]]
    %vm299 = vcmp.eq.s32.totalorder %v82, 4
    %v300 = vstv %s298
    %vm301 = vcmp.eq.s32.totalorder %v99, %v300
    %vm302 = vmand %vm299, %vm301
    %v303 = vsel %vm302, 1, 0
    %v304 = vcvt.s32.f32 %v303
    %v305 = vadd.f32 %v297, %v304
    %s306 = sld [smem:[#allocation2 + $0x5]]
    %vm307 = vcmp.eq.s32.totalorder %v82, 5
    %v308 = vstv %s306
    %vm309 = vcmp.eq.s32.totalorder %v99, %v308
    %vm310 = vmand %vm307, %vm309
    %v311 = vsel %vm310, 1, 0
    %v312 = vcvt.s32.f32 %v311
    %v313 = vadd.f32 %v305, %v312
    %s314 = sld [smem:[#allocation2 + $0x6]]
    %vm315 = vcmp.eq.s32.totalorder %v82, 6
    %v316 = vstv %s314
    %vm317 = vcmp.eq.s32.totalorder %v99, %v316
    %vm318 = vmand %vm315, %vm317
    %v319 = vsel %vm318, 1, 0
    %v320 = vcvt.s32.f32 %v319
    %v321 = vadd.f32 %v313, %v320
    %s322 = sld [smem:[#allocation2 + $0x7]]
    %vm323 = vcmp.eq.s32.totalorder %v82, 7
    %v324 = vstv %s322
    %vm325 = vcmp.eq.s32.totalorder %v99, %v324
    %vm326 = vmand %vm323, %vm325
    %v327 = vsel %vm326, 1, 0
    %v328 = vcvt.s32.f32 %v327
    %v329 = vadd.f32 %v321, %v328
    %s330 = sld [smem:[#allocation2 + $0x8]]
    %s331 = sadd.s32 %s330, 16
    %v332 = vstv %s331
    %vm333 = vcmp.eq.s32.totalorder %v99, %v332
    %vm334 = vmand %vm267, %vm333
    %v335 = vsel %vm334, 1, 0
    %v336 = vcvt.s32.f32 %v335
    %v337 = vadd.f32 %v329, %v336
    %s338 = sld [smem:[#allocation2 + $0x9]]
    %s339 = sadd.s32 %s338, 16
    %v340 = vstv %s339
    %vm341 = vcmp.eq.s32.totalorder %v99, %v340
    %vm342 = vmand %vm275, %vm341
    %v343 = vsel %vm342, 1, 0
    %v344 = vcvt.s32.f32 %v343
    %v345 = vadd.f32 %v337, %v344
    %s346 = sld [smem:[#allocation2 + $0xa]]
    %s347 = sadd.s32 %s346, 16
    %v348 = vstv %s347
    %vm349 = vcmp.eq.s32.totalorder %v99, %v348
    %vm350 = vmand %vm283, %vm349
    %v351 = vsel %vm350, 1, 0
    %v352 = vcvt.s32.f32 %v351
    %v353 = vadd.f32 %v345, %v352
    %s354 = sld [smem:[#allocation2 + $0xb]]
    %s355 = sadd.s32 %s354, 16
    %v356 = vstv %s355
    %vm357 = vcmp.eq.s32.totalorder %v99, %v356
    %vm358 = vmand %vm291, %vm357
    %v359 = vsel %vm358, 1, 0
    %v360 = vcvt.s32.f32 %v359
    %v361 = vadd.f32 %v353, %v360
    %s362 = sld [smem:[#allocation2 + $0xc]]
    %s363 = sadd.s32 %s362, 16
    %v364 = vstv %s363
    %vm365 = vcmp.eq.s32.totalorder %v99, %v364
    %vm366 = vmand %vm299, %vm365
    %v367 = vsel %vm366, 1, 0
    %v368 = vcvt.s32.f32 %v367
    %v369 = vadd.f32 %v361, %v368
    %s370 = sld [smem:[#allocation2 + $0xd]]
    %s371 = sadd.s32 %s370, 16
    %v372 = vstv %s371
    %vm373 = vcmp.eq.s32.totalorder %v99, %v372
    %vm374 = vmand %vm307, %vm373
    %v375 = vsel %vm374, 1, 0
    %v376 = vcvt.s32.f32 %v375
    %v377 = vadd.f32 %v369, %v376
    %s378 = sld [smem:[#allocation2 + $0xe]]
    %s379 = sadd.s32 %s378, 16
    %v380 = vstv %s379
    %vm381 = vcmp.eq.s32.totalorder %v99, %v380
    %vm382 = vmand %vm315, %vm381
    %v383 = vsel %vm382, 1, 0
    %v384 = vcvt.s32.f32 %v383
    %v385 = vadd.f32 %v377, %v384
    %s386 = sld [smem:[#allocation2 + $0xf]]
    %s387 = sadd.s32 %s386, 16
    %v388 = vstv %s387
    %vm389 = vcmp.eq.s32.totalorder %v99, %v388
    %vm390 = vmand %vm323, %vm389
    %v391 = vsel %vm390, 1, 0
    %v392 = vcvt.s32.f32 %v391
    %v393 = vadd.f32 %v385, %v392
    %v394 = vld [vmem:[%s1] sm:$0xff]
    %v395 = vld [vmem:[%s1 + $0x8] sm:$0xff]
    %v396 = vld [vmem:[%s1 + $0x10] sm:$0xff]
    %v397 = vld [vmem:[%s1 + $0x18] sm:$0xff]
    %vm398 = vcmask 261120
    %v400 = vsel %vm398, %v393, 0
    %402 = vmatprep.subr.mxu0 0.0
    %403 = vmatpush1.msra.mxu0 %v394
    %404 = vmatprep.subr.mxu0 0.0
    %405 = vmatpush1.msra.mxu0 %v395
    %406 = vmatprep.subr.mxu0 0.0
    %407 = vmatpush1.msra.mxu0 %v396
    %408 = vmatprep.subr.mxu0 0.0
    %409 = vmatpush1.msra.mxu0 %v397
    %410 = vmatprep.subr.mxu0 0.0
    %411 = vmatpush1.msra.mxu0 0.0
    %412 = vmatprep.subr.mxu0 0.0
    %413 = vmatpush1.msra.mxu0 0.0
    %414 = vmatprep.subr.mxu0 0.0
    %415 = vmatpush1.msra.mxu0 0.0
    %416 = vmatprep.subr.mxu0 0.0
    %417 = vmatpush1.msra.mxu0 0.0
    %418 = vmatprep.subr.mxu0 0.0
    %419 = vmatpush1.msra.mxu0 0.0
    %420 = vmatprep.subr.mxu0 0.0
    %421 = vmatpush1.msra.mxu0 0.0
    %422 = vmatprep.subr.mxu0 0.0
    %423 = vmatpush1.msra.mxu0 0.0
    %424 = vmatprep.subr.mxu0 0.0
    %425 = vmatpush1.msra.mxu0 0.0
    %426 = vmatprep.subr.mxu0 0.0
    %427 = vmatpush1.msra.mxu0 0.0
    %428 = vmatprep.subr.mxu0 0.0
    %429 = vmatpush1.msra.mxu0 0.0
    %430 = vmatprep.subr.mxu0 0.0
    %431 = vmatpush1.msra.mxu0 0.0
    %432 = vmatprep.subr.mxu0 0.0
    %433 = vmatpush1.msra.mxu0 0.0
    %434 = vmatprep.subr.mxu0 0.0
    %435 = vmatpush1.msra.mxu0 0.0
    %436 = vmatprep.subr.mxu0 0.0
    %437 = vmatpush1.msra.mxu0 0.0
    %438 = vmatprep.subr.mxu0 0.0
    %439 = vmatpush1.msra.mxu0 0.0
    %440 = vmatprep.subr.mxu0 0.0
    %441 = vmatpush1.msra.mxu0 0.0
    %442 = vmatprep.subr.mxu0 0.0
    %443 = vmatpush1.msra.mxu0 0.0
    %444 = vmatprep.subr.mxu0 0.0
    %445 = vmatpush1.msra.mxu0 0.0
    %446 = vmatprep.subr.mxu0 0.0
    %447 = vmatpush1.msra.mxu0 0.0
    %448 = vmatprep.subr.mxu0 0.0
    %449 = vmatpush1.msra.mxu0 0.0
    %450 = vmatprep.subr.mxu0 0.0
    %451 = vmatpush1.msra.mxu0 0.0
    %452 = vmatprep.subr.mxu0 0.0
    %453 = vmatpush1.msra.mxu0 0.0
    %454 = vmatprep.subr.mxu0 0.0
    %455 = vmatpush1.msra.mxu0 0.0
    %456 = vmatprep.subr.mxu0 0.0
    %457 = vmatpush1.msra.mxu0 0.0
    %458 = vmatprep.subr.mxu0 0.0
    %459 = vmatpush1.msra.mxu0 0.0
    %460 = vmatprep.subr.mxu0 0.0
    %461 = vmatpush1.msra.mxu0 0.0
    %462 = vmatprep.subr.mxu0 0.0
    %463 = vmatpush1.msra.mxu0 0.0
    %464 = vmatprep.subr.mxu0 0.0
    %465 = vmatpush1.msra.mxu0 0.0
    %466 = vmatprep.mubr.f32.mxu0 0.0
    %467 = vmatmul.mubr.f32.gmra.mrb[0].mxu0 %v400
    %v468 = vpop.f32.mrb[0].mxu0
    %v469 = vadd.f32 0.0, %v468
    %v470 = vpop.f32.mrb[0].mxu0
    %471 = vdwg.mxu0
    %v472 = vld [vmem:[%s2] sm:$0x1]
    %v473 = vld [vmem:[%s3] sm:$0x1]
    %vm474 = vcmask 523264
    %v476 = vsel %vm474, %v469, 0
    %478 = vmatprep.subr.mxu0 0.0
    %479 = vmatpush1.msra.mxu0 %v253
    %480 = vmatprep.subr.mxu0 0.0
    %481 = vmatpush1.msra.mxu0 %v254
    %482 = vmatprep.subr.mxu0 0.0
    %483 = vmatpush1.msra.mxu0 %v255
    %484 = vmatprep.subr.mxu0 0.0
    %485 = vmatpush1.msra.mxu0 %v256
    %486 = vmatprep.subr.mxu0 0.0
    %487 = vmatpush1.msra.mxu0 %v257
    %488 = vmatprep.subr.mxu0 0.0
    %489 = vmatpush1.msra.mxu0 %v258
    %490 = vmatprep.subr.mxu0 0.0
    %491 = vmatpush1.msra.mxu0 %v259
    %492 = vmatprep.subr.mxu0 0.0
    %493 = vmatpush1.msra.mxu0 %v260
    %494 = vmatprep.subr.mxu0 0.0
    %495 = vmatpush1.msra.mxu0 0.0
    %496 = vmatprep.subr.mxu0 0.0
    %497 = vmatpush1.msra.mxu0 0.0
    %498 = vmatprep.subr.mxu0 0.0
    %499 = vmatpush1.msra.mxu0 0.0
    %500 = vmatprep.subr.mxu0 0.0
    %501 = vmatpush1.msra.mxu0 0.0
    %502 = vmatprep.subr.mxu0 0.0
    %503 = vmatpush1.msra.mxu0 0.0
    %504 = vmatprep.subr.mxu0 0.0
    %505 = vmatpush1.msra.mxu0 0.0
    %506 = vmatprep.subr.mxu0 0.0
    %507 = vmatpush1.msra.mxu0 0.0
    %508 = vmatprep.subr.mxu0 0.0
    %509 = vmatpush1.msra.mxu0 0.0
    %510 = vmatprep.subr.mxu0 0.0
    %511 = vmatpush1.msra.mxu0 0.0
    %512 = vmatprep.subr.mxu0 0.0
    %513 = vmatpush1.msra.mxu0 0.0
    %514 = vmatprep.subr.mxu0 0.0
    %515 = vmatpush1.msra.mxu0 0.0
    %516 = vmatprep.subr.mxu0 0.0
    %517 = vmatpush1.msra.mxu0 0.0
    %518 = vmatprep.subr.mxu0 0.0
    %519 = vmatpush1.msra.mxu0 0.0
    %520 = vmatprep.subr.mxu0 0.0
    %521 = vmatpush1.msra.mxu0 0.0
    %522 = vmatprep.subr.mxu0 0.0
    %523 = vmatpush1.msra.mxu0 0.0
    %524 = vmatprep.subr.mxu0 0.0
    %525 = vmatpush1.msra.mxu0 0.0
    %526 = vmatprep.subr.mxu0 0.0
    %527 = vmatpush1.msra.mxu0 0.0
    %528 = vmatprep.subr.mxu0 0.0
    %529 = vmatpush1.msra.mxu0 0.0
    %530 = vmatprep.subr.mxu0 0.0
    %531 = vmatpush1.msra.mxu0 0.0
    %532 = vmatprep.subr.mxu0 0.0
    %533 = vmatpush1.msra.mxu0 0.0
    %534 = vmatprep.subr.mxu0 0.0
    %535 = vmatpush1.msra.mxu0 0.0
    %536 = vmatprep.subr.mxu0 0.0
    %537 = vmatpush1.msra.mxu0 0.0
    %538 = vmatprep.subr.mxu0 0.0
    %539 = vmatpush1.msra.mxu0 0.0
    %540 = vmatprep.subr.mxu0 0.0
    %541 = vmatpush1.msra.mxu0 0.0
    %542 = vmatprep.mubr.f32.mxu0 0.0
    %543 = vmatmul.mubr.f32.gmra.mrb[0].mxu0 %v476
    %v544 = vpop.f32.mrb[0].mxu0
    %v545 = vadd.f32 0.0, %v544
    %v546 = vpop.f32.mrb[0].mxu0
    %547 = vdwg.mxu0
    %v548 = vsub.f32 %v469, %v545
    %v549 = vmul.f32 %v548, %v548
    %v551 = vsel %vm474, %v549, 0
    %553 = vmatprep.subr.mxu0 0.0
    %554 = vmatpush1.msra.mxu0 %v253
    %555 = vmatprep.subr.mxu0 0.0
    %556 = vmatpush1.msra.mxu0 %v254
    %557 = vmatprep.subr.mxu0 0.0
    %558 = vmatpush1.msra.mxu0 %v255
    %559 = vmatprep.subr.mxu0 0.0
    %560 = vmatpush1.msra.mxu0 %v256
    %561 = vmatprep.subr.mxu0 0.0
    %562 = vmatpush1.msra.mxu0 %v257
    %563 = vmatprep.subr.mxu0 0.0
    %564 = vmatpush1.msra.mxu0 %v258
    %565 = vmatprep.subr.mxu0 0.0
    %566 = vmatpush1.msra.mxu0 %v259
    %567 = vmatprep.subr.mxu0 0.0
    %568 = vmatpush1.msra.mxu0 %v260
    %569 = vmatprep.subr.mxu0 0.0
    %570 = vmatpush1.msra.mxu0 0.0
    %571 = vmatprep.subr.mxu0 0.0
    %572 = vmatpush1.msra.mxu0 0.0
    %573 = vmatprep.subr.mxu0 0.0
    %574 = vmatpush1.msra.mxu0 0.0
    %575 = vmatprep.subr.mxu0 0.0
    %576 = vmatpush1.msra.mxu0 0.0
    %577 = vmatprep.subr.mxu0 0.0
    %578 = vmatpush1.msra.mxu0 0.0
    %579 = vmatprep.subr.mxu0 0.0
    %580 = vmatpush1.msra.mxu0 0.0
    %581 = vmatprep.subr.mxu0 0.0
    %582 = vmatpush1.msra.mxu0 0.0
    %583 = vmatprep.subr.mxu0 0.0
    %584 = vmatpush1.msra.mxu0 0.0
    %585 = vmatprep.subr.mxu0 0.0
    %586 = vmatpush1.msra.mxu0 0.0
    %587 = vmatprep.subr.mxu0 0.0
    %588 = vmatpush1.msra.mxu0 0.0
    %589 = vmatprep.subr.mxu0 0.0
    %590 = vmatpush1.msra.mxu0 0.0
    %591 = vmatprep.subr.mxu0 0.0
    %592 = vmatpush1.msra.mxu0 0.0
    %593 = vmatprep.subr.mxu0 0.0
    %594 = vmatpush1.msra.mxu0 0.0
    %595 = vmatprep.subr.mxu0 0.0
    %596 = vmatpush1.msra.mxu0 0.0
    %597 = vmatprep.subr.mxu0 0.0
    %598 = vmatpush1.msra.mxu0 0.0
    %599 = vmatprep.subr.mxu0 0.0
    %600 = vmatpush1.msra.mxu0 0.0
    %601 = vmatprep.subr.mxu0 0.0
    %602 = vmatpush1.msra.mxu0 0.0
    %603 = vmatprep.subr.mxu0 0.0
    %604 = vmatpush1.msra.mxu0 0.0
    %605 = vmatprep.subr.mxu0 0.0
    %606 = vmatpush1.msra.mxu0 0.0
    %607 = vmatprep.subr.mxu0 0.0
    %608 = vmatpush1.msra.mxu0 0.0
    %609 = vmatprep.subr.mxu0 0.0
    %610 = vmatpush1.msra.mxu0 0.0
    %611 = vmatprep.subr.mxu0 0.0
    %612 = vmatpush1.msra.mxu0 0.0
    %613 = vmatprep.subr.mxu0 0.0
    %614 = vmatpush1.msra.mxu0 0.0
    %615 = vmatprep.subr.mxu0 0.0
    %616 = vmatpush1.msra.mxu0 0.0
    %617 = vmatprep.mubr.f32.mxu0 0.0
    %618 = vmatmul.mubr.f32.gmra.mrb[0].mxu0 %v551
    %v619 = vpop.f32.mrb[0].mxu0
    %v620 = vadd.f32 1e-05, %v619
    %v621 = vpop.f32.mrb[0].mxu0
    %622 = vdwg.mxu0
    %v623 = vrsqrt.pop %v620
    %v624 = vmul.f32 %v548, %v623
    %v626 = vlaneseq
    %v627 = vshrl.u32 %v626, 7
    %v628 = vsub.s32 0, %v627
    %v629 = vrot.slane %v472, %v628
    %v631 = vmul.f32 %v624, %v629
    %v633 = vlaneseq
    %v634 = vshrl.u32 %v633, 7
    %v635 = vsub.s32 0, %v634
    %v636 = vrot.slane %v473, %v635
    %v638 = vadd.f32 %v631, %v636
    %v639 = vld [vmem:[%s4] sm:$0xff]
    %v640 = vld [vmem:[%s4 + $0x8] sm:$0xff]
    %v641 = vld [vmem:[%s4 + $0x10] sm:$0xff]
    %v642 = vld [vmem:[%s4 + $0x18] sm:$0xff]
    %v643 = vld [vmem:[%s4 + $0x20] sm:$0xff]
    %v644 = vld [vmem:[%s4 + $0x28] sm:$0xff]
    %v645 = vld [vmem:[%s4 + $0x30] sm:$0xff]
    %v646 = vld [vmem:[%s4 + $0x38] sm:$0xff]
    %v647 = vld [vmem:[%s4 + $0x40] sm:$0xff]
    %v648 = vld [vmem:[%s4 + $0x48] sm:$0xff]
    %v649 = vld [vmem:[%s4 + $0x50] sm:$0xff]
    %v650 = vld [vmem:[%s4 + $0x58] sm:$0xff]
    %v651 = vld [vmem:[%s4 + $0x60] sm:$0xff]
    %v652 = vld [vmem:[%s4 + $0x68] sm:$0xff]
    %v653 = vld [vmem:[%s4 + $0x70] sm:$0xff]
    %v654 = vld [vmem:[%s4 + $0x78] sm:$0xff]
    %v656 = vsel %vm474, %v638, 0
    %658 = vmatprep.subr.mxu0 %v640
    %659 = vmatpush1.msra.mxu0 %v639
    %660 = vmatprep.subr.mxu0 %v642
    %661 = vmatpush1.msra.mxu0 %v641
    %662 = vmatprep.subr.mxu0 %v644
    %663 = vmatpush1.msra.mxu0 %v643
    %664 = vmatprep.subr.mxu0 %v646
    %665 = vmatpush1.msra.mxu0 %v645
    %666 = vmatprep.subr.mxu0 %v648
    %667 = vmatpush1.msra.mxu0 %v647
    %668 = vmatprep.subr.mxu0 %v650
    %669 = vmatpush1.msra.mxu0 %v649
    %670 = vmatprep.subr.mxu0 %v652
    %671 = vmatpush1.msra.mxu0 %v651
    %672 = vmatprep.subr.mxu0 %v654
    %673 = vmatpush1.msra.mxu0 %v653
    %674 = vmatprep.subr.mxu0 0.0
    %675 = vmatpush1.msra.mxu0 0.0
    %676 = vmatprep.subr.mxu0 0.0
    %677 = vmatpush1.msra.mxu0 0.0
    %678 = vmatprep.subr.mxu0 0.0
    %679 = vmatpush1.msra.mxu0 0.0
    %680 = vmatprep.subr.mxu0 0.0
    %681 = vmatpush1.msra.mxu0 0.0
    %682 = vmatprep.subr.mxu0 0.0
    %683 = vmatpush1.msra.mxu0 0.0
    %684 = vmatprep.subr.mxu0 0.0
    %685 = vmatpush1.msra.mxu0 0.0
    %686 = vmatprep.subr.mxu0 0.0
    %687 = vmatpush1.msra.mxu0 0.0
    %688 = vmatprep.subr.mxu0 0.0
    %689 = vmatpush1.msra.mxu0 0.0
    %690 = vmatprep.subr.mxu0 0.0
    %691 = vmatpush1.msra.mxu0 0.0
    %692 = vmatprep.subr.mxu0 0.0
    %693 = vmatpush1.msra.mxu0 0.0
    %694 = vmatprep.subr.mxu0 0.0
    %695 = vmatpush1.msra.mxu0 0.0
    %696 = vmatprep.subr.mxu0 0.0
    %697 = vmatpush1.msra.mxu0 0.0
    %698 = vmatprep.subr.mxu0 0.0
    %699 = vmatpush1.msra.mxu0 0.0
    %700 = vmatprep.subr.mxu0 0.0
    %701 = vmatpush1.msra.mxu0 0.0
    %702 = vmatprep.subr.mxu0 0.0
    %703 = vmatpush1.msra.mxu0 0.0
    %704 = vmatprep.subr.mxu0 0.0
    %705 = vmatpush1.msra.mxu0 0.0
    %706 = vmatprep.subr.mxu0 0.0
    %707 = vmatpush1.msra.mxu0 0.0
    %708 = vmatprep.subr.mxu0 0.0
    %709 = vmatpush1.msra.mxu0 0.0
    %710 = vmatprep.subr.mxu0 0.0
    %711 = vmatpush1.msra.mxu0 0.0
    %712 = vmatprep.subr.mxu0 0.0
    %713 = vmatpush1.msra.mxu0 0.0
    %714 = vmatprep.subr.mxu0 0.0
    %715 = vmatpush1.msra.mxu0 0.0
    %716 = vmatprep.subr.mxu0 0.0
    %717 = vmatpush1.msra.mxu0 0.0
    %718 = vmatprep.subr.mxu0 0.0
    %719 = vmatpush1.msra.mxu0 0.0
    %720 = vmatprep.subr.mxu0 0.0
    %721 = vmatpush1.msra.mxu0 0.0
    %722 = vmatprep.mubr.f32.mxu0 0.0
    %723 = vmatmul.mubr.f32.gmra.mrb[0].mxu0 %v656
    %v724 = vpop.f32.mrb[0].mxu0
    %v725 = vadd.f32 0.0, %v724
    %v726 = vpop.f32.mrb[0].mxu0
    %v727 = vadd.f32 0.0, %v726
    %728 = vdwg.mxu0
    %v729 = vld [vmem:[%s5] sm:$0xf]
    %v730 = vlaneseq
    %v731 = vshrl.u32 %v730, 7
    %v732 = vsub.s32 2, %v731
    %v733 = vrot.slane %v729, %v732
    %v734 = vmul.f32 %v725, %v733
    %v735 = vlaneseq
    %v736 = vshrl.u32 %v735, 7
    %v737 = vsub.s32 1, %v736
    %v738 = vrot.slane %v729, %v737
    %v739 = vmul.f32 %v725, %v738
    %v740 = vlaneseq
    %v741 = vshrl.u32 %v740, 7
    %v742 = vsub.s32 0, %v741
    %v743 = vrot.slane %v729, %v742
    %v744 = vmul.f32 %v725, %v743
    %v745 = vlaneseq
    %v746 = vshrl.u32 %v745, 7
    %v747 = vsub.s32 3, %v746
    %v748 = vrot.slane %v729, %v747
    %v749 = vmul.f32 %v725, %v748
    %vm750 = vcmask 195584
    %v752 = vsel %vm750, %v265, 0
    %754 = vmatprep.subr.mxu0 0.0
    %755 = vmatpush1.msra.mxu0 %v734
    %756 = vmatprep.subr.mxu0 0.0
    %757 = vmatpush1.msra.mxu0 %v739
    %758 = vmatprep.subr.mxu0 0.0
    %759 = vmatpush1.msra.mxu0 %v744
    %760 = vmatprep.subr.mxu0 0.0
    %761 = vmatpush1.msra.mxu0 0.0
    %762 = vmatprep.subr.mxu0 0.0
    %763 = vmatpush1.msra.mxu0 0.0
    %764 = vmatprep.subr.mxu0 0.0
    %765 = vmatpush1.msra.mxu0 0.0
    %766 = vmatprep.subr.mxu0 0.0
    %767 = vmatpush1.msra.mxu0 0.0
    %768 = vmatprep.subr.mxu0 0.0
    %769 = vmatpush1.msra.mxu0 0.0
    %770 = vmatprep.subr.mxu0 0.0
    %771 = vmatpush1.msra.mxu0 0.0
    %772 = vmatprep.subr.mxu0 0.0
    %773 = vmatpush1.msra.mxu0 0.0
    %774 = vmatprep.subr.mxu0 0.0
    %775 = vmatpush1.msra.mxu0 0.0
    %776 = vmatprep.subr.mxu0 0.0
    %777 = vmatpush1.msra.mxu0 0.0
    %778 = vmatprep.subr.mxu0 0.0
    %779 = vmatpush1.msra.mxu0 0.0
    %780 = vmatprep.subr.mxu0 0.0
    %781 = vmatpush1.msra.mxu0 0.0
    %782 = vmatprep.subr.mxu0 0.0
    %783 = vmatpush1.msra.mxu0 0.0
    %784 = vmatprep.subr.mxu0 0.0
    %785 = vmatpush1.msra.mxu0 0.0
    %786 = vmatprep.subr.mxu0 0.0
    %787 = vmatpush1.msra.mxu0 0.0
    %788 = vmatprep.subr.mxu0 0.0
    %789 = vmatpush1.msra.mxu0 0.0
    %790 = vmatprep.subr.mxu0 0.0
    %791 = vmatpush1.msra.mxu0 0.0
    %792 = vmatprep.subr.mxu0 0.0
    %793 = vmatpush1.msra.mxu0 0.0
    %794 = vmatprep.subr.mxu0 0.0
    %795 = vmatpush1.msra.mxu0 0.0
    %796 = vmatprep.subr.mxu0 0.0
    %797 = vmatpush1.msra.mxu0 0.0
    %798 = vmatprep.subr.mxu0 0.0
    %799 = vmatpush1.msra.mxu0 0.0
    %800 = vmatprep.subr.mxu0 0.0
    %801 = vmatpush1.msra.mxu0 0.0
    %802 = vmatprep.subr.mxu0 0.0
    %803 = vmatpush1.msra.mxu0 0.0
    %804 = vmatprep.subr.mxu0 0.0
    %805 = vmatpush1.msra.mxu0 0.0
    %806 = vmatprep.subr.mxu0 0.0
    %807 = vmatpush1.msra.mxu0 0.0
    %808 = vmatprep.subr.mxu0 0.0
    %809 = vmatpush1.msra.mxu0 0.0
    %810 = vmatprep.subr.mxu0 0.0
    %811 = vmatpush1.msra.mxu0 0.0
    %812 = vmatprep.subr.mxu0 0.0
    %813 = vmatpush1.msra.mxu0 0.0
    %814 = vmatprep.subr.mxu0 0.0
    %815 = vmatpush1.msra.mxu0 0.0
    %816 = vmatprep.subr.mxu0 0.0
    %817 = vmatpush1.msra.mxu0 0.0
    %818 = vmatprep.mubr.f32.mxu0 0.0
    %819 = vmatmul.mubr.f32.gmra.mrb[0].mxu0 %v752
    %v820 = vpop.f32.mrb[0].mxu0
    %v821 = vadd.f32 0.0, %v820
    %v822 = vpop.f32.mrb[0].mxu0
    %823 = vdwg.mxu0
    %v824 = vadd.f32 %v749, %v821
    %v825 = vld [vmem:[%s6] sm:$0x1]
    %v827 = vlaneseq
    %v828 = vshrl.u32 %v827, 7
    %v829 = vsub.s32 0, %v828
    %v830 = vrot.slane %v825, %v829
    %v832 = vadd.f32 %v824, %v830
    %v833 = vxor.u32 %v832, 2147483648
    %v834 = vmul.f32 %v833, 1.442695
    %v835 = vpow.pop %v834
    %v836 = vadd.f32 %v835, 1.0
    %v837 = vrcp.pop %v836
    %v838 = vmul.f32 1.0, %v837
    %v839 = vmul.f32 %v832, %v838
    %v840 = vld [vmem:[%s7] sm:$0xff]
    %v841 = vld [vmem:[%s7 + $0x8] sm:$0xff]
    %v842 = vld [vmem:[%s7 + $0x10] sm:$0xff]
    %v843 = vld [vmem:[%s7 + $0x18] sm:$0xff]
    %v844 = vld [vmem:[%s7 + $0x20] sm:$0xff]
    %v845 = vld [vmem:[%s7 + $0x28] sm:$0xff]
    %v846 = vld [vmem:[%s7 + $0x30] sm:$0xff]
    %v847 = vld [vmem:[%s7 + $0x38] sm:$0xff]
    %v848 = vld [vmem:[%s7 + $0x40] sm:$0xff]
    %v849 = vld [vmem:[%s7 + $0x48] sm:$0xff]
    %v850 = vld [vmem:[%s7 + $0x50] sm:$0xff]
    %v851 = vld [vmem:[%s7 + $0x58] sm:$0xff]
    %v852 = vld [vmem:[%s7 + $0x60] sm:$0xff]
    %v853 = vld [vmem:[%s7 + $0x68] sm:$0xff]
    %v854 = vld [vmem:[%s7 + $0x70] sm:$0xff]
    %v855 = vld [vmem:[%s7 + $0x78] sm:$0xff]
    %v856 = vld [vmem:[%s7 + $0x80] sm:$0xff]
    %v857 = vld [vmem:[%s7 + $0x88] sm:$0xff]
    %v858 = vld [vmem:[%s7 + $0x90] sm:$0xff]
    %v859 = vld [vmem:[%s7 + $0x98] sm:$0xff]
    %v860 = vld [vmem:[%s7 + $0xa0] sm:$0xff]
    %v861 = vld [vmem:[%s7 + $0xa8] sm:$0xff]
    %v862 = vld [vmem:[%s7 + $0xb0] sm:$0xff]
    %v863 = vld [vmem:[%s7 + $0xb8] sm:$0xff]
    %v864 = vld [vmem:[%s7 + $0xc0] sm:$0xff]
    %v865 = vld [vmem:[%s7 + $0xc8] sm:$0xff]
    %v866 = vld [vmem:[%s7 + $0xd0] sm:$0xff]
    %v867 = vld [vmem:[%s7 + $0xd8] sm:$0xff]
    %v868 = vld [vmem:[%s7 + $0xe0] sm:$0xff]
    %v869 = vld [vmem:[%s7 + $0xe8] sm:$0xff]
    %v870 = vld [vmem:[%s7 + $0xf0] sm:$0xff]
    %v871 = vld [vmem:[%s7 + $0xf8] sm:$0xff]
    %872 = vmatprep.subr.mxu0 %v841
    %873 = vmatpush1.msra.mxu0 %v840
    %874 = vmatprep.subr.mxu0 %v843
    %875 = vmatpush1.msra.mxu0 %v842
    %876 = vmatprep.subr.mxu0 %v845
    %877 = vmatpush1.msra.mxu0 %v844
    %878 = vmatprep.subr.mxu0 %v847
    %879 = vmatpush1.msra.mxu0 %v846
    %880 = vmatprep.subr.mxu0 %v849
    %881 = vmatpush1.msra.mxu0 %v848
    %882 = vmatprep.subr.mxu0 %v851
    %883 = vmatpush1.msra.mxu0 %v850
    %884 = vmatprep.subr.mxu0 %v853
    %885 = vmatpush1.msra.mxu0 %v852
    %886 = vmatprep.subr.mxu0 %v855
    %887 = vmatpush1.msra.mxu0 %v854
    %888 = vmatprep.subr.mxu0 %v857
    %889 = vmatpush1.msra.mxu0 %v856
    %890 = vmatprep.subr.mxu0 %v859
    %891 = vmatpush1.msra.mxu0 %v858
    %892 = vmatprep.subr.mxu0 %v861
    %893 = vmatpush1.msra.mxu0 %v860
    %894 = vmatprep.subr.mxu0 %v863
    %895 = vmatpush1.msra.mxu0 %v862
    %896 = vmatprep.subr.mxu0 %v865
    %897 = vmatpush1.msra.mxu0 %v864
    %898 = vmatprep.subr.mxu0 %v867
    %899 = vmatpush1.msra.mxu0 %v866
    %900 = vmatprep.subr.mxu0 %v869
    %901 = vmatpush1.msra.mxu0 %v868
    %902 = vmatprep.subr.mxu0 %v871
    %903 = vmatpush1.msra.mxu0 %v870
    %904 = vmatprep.subr.mxu0 0.0
    %905 = vmatpush1.msra.mxu0 0.0
    %906 = vmatprep.subr.mxu0 0.0
    %907 = vmatpush1.msra.mxu0 0.0
    %908 = vmatprep.subr.mxu0 0.0
    %909 = vmatpush1.msra.mxu0 0.0
    %910 = vmatprep.subr.mxu0 0.0
    %911 = vmatpush1.msra.mxu0 0.0
    %912 = vmatprep.subr.mxu0 0.0
    %913 = vmatpush1.msra.mxu0 0.0
    %914 = vmatprep.subr.mxu0 0.0
    %915 = vmatpush1.msra.mxu0 0.0
    %916 = vmatprep.subr.mxu0 0.0
    %917 = vmatpush1.msra.mxu0 0.0
    %918 = vmatprep.subr.mxu0 0.0
    %919 = vmatpush1.msra.mxu0 0.0
    %920 = vmatprep.subr.mxu0 0.0
    %921 = vmatpush1.msra.mxu0 0.0
    %922 = vmatprep.subr.mxu0 0.0
    %923 = vmatpush1.msra.mxu0 0.0
    %924 = vmatprep.subr.mxu0 0.0
    %925 = vmatpush1.msra.mxu0 0.0
    %926 = vmatprep.subr.mxu0 0.0
    %927 = vmatpush1.msra.mxu0 0.0
    %928 = vmatprep.subr.mxu0 0.0
    %929 = vmatpush1.msra.mxu0 0.0
    %930 = vmatprep.subr.mxu0 0.0
    %931 = vmatpush1.msra.mxu0 0.0
    %932 = vmatprep.subr.mxu0 0.0
    %933 = vmatpush1.msra.mxu0 0.0
    %934 = vmatprep.subr.mxu0 0.0
    %935 = vmatpush1.msra.mxu0 0.0
    %936 = vmatprep.mubr.f32.mxu0 0.0
    %937 = vmatmul.mubr.f32.gmra.mrb[0].mxu0 %v839
    %v938 = vpop.f32.mrb[0].mxu0
    %v939 = vadd.f32 0.0, %v938
    %v940 = vpop.f32.mrb[0].mxu0
    %v941 = vadd.f32 0.0, %v940
    %942 = vdwg.mxu0
    %v943 = vld [vmem:[%s8] sm:$0x1]
    %v945 = vlaneseq
    %v946 = vshrl.u32 %v945, 7
    %v947 = vsub.s32 0, %v946
    %v948 = vrot.slane %v943, %v947
    %v950 = vadd.f32 %v939, %v948
    %v951 = vmax.f32 %v950, 0.0
    %vm952 = vcmp.ne.f32.partialorder %v950, %v950
    %v953 = vadd.f32 %v950, 0.0
    %v954 = vand.u32 2147483647, %v950
    %v955 = vsub.f32 0.0, %v954
    %v956 = vmul.f32 %v955, 1.442695
    %v957 = vpow.pop %v956
    %v958 = vadd.f32 %v957, 1.0
    %v959 = vlog2.pop %v958
    %v960 = vmul.f32 %v959, 0.6931472
    %v961 = vmul.f32 -0.5, %v957
    %v962 = vadd.f32 %v961, 1.0
    %v963 = vmul.f32 %v962, %v957
    %v964 = vand.u32 2147483647, %v957
    %vm965 = vcmp.lt.f32.partialorder %v964, 0.0004427343
    %v966 = vsel %vm965, %v963, %v960
    %v967 = vadd.f32 %v951, %v966
    %v968 = vsel %vm952, %v953, %v967
    %v969 = vmul.f32 %v968, %v839
    %vm970 = vcmask 64512
    %v972 = vsel %vm970, %v116, 0
    %v975 = vsel %vm970, %v117, 0
    %v978 = vsel %vm970, %v118, 0
    %v981 = vsel %vm970, %v119, 0
    %v984 = vsel %vm970, %v120, 0
    %v987 = vsel %vm970, %v121, 0
    %v990 = vsel %vm970, %v122, 0
    %v993 = vsel %vm970, %v123, 0
    %995 = vmatprep.subr.mxu0 %v969
    %996 = vmatpush1.msra.mxu0 %v968
    %997 = vmatprep.subr.mxu0 0.0
    %998 = vmatpush1.msra.mxu0 0.0
    %999 = vmatprep.subr.mxu0 0.0
    %1000 = vmatpush1.msra.mxu0 0.0
    %1001 = vmatprep.subr.mxu0 0.0
    %1002 = vmatpush1.msra.mxu0 0.0
    %1003 = vmatprep.subr.mxu0 0.0
    %1004 = vmatpush1.msra.mxu0 0.0
    %1005 = vmatprep.subr.mxu0 0.0
    %1006 = vmatpush1.msra.mxu0 0.0
    %1007 = vmatprep.subr.mxu0 0.0
    %1008 = vmatpush1.msra.mxu0 0.0
    %1009 = vmatprep.subr.mxu0 0.0
    %1010 = vmatpush1.msra.mxu0 0.0
    %1011 = vmatprep.subr.mxu0 0.0
    %1012 = vmatpush1.msra.mxu0 0.0
    %1013 = vmatprep.subr.mxu0 0.0
    %1014 = vmatpush1.msra.mxu0 0.0
    %1015 = vmatprep.subr.mxu0 0.0
    %1016 = vmatpush1.msra.mxu0 0.0
    %1017 = vmatprep.subr.mxu0 0.0
    %1018 = vmatpush1.msra.mxu0 0.0
    %1019 = vmatprep.subr.mxu0 0.0
    %1020 = vmatpush1.msra.mxu0 0.0
    %1021 = vmatprep.subr.mxu0 0.0
    %1022 = vmatpush1.msra.mxu0 0.0
    %1023 = vmatprep.subr.mxu0 0.0
    %1024 = vmatpush1.msra.mxu0 0.0
    %1025 = vmatprep.subr.mxu0 0.0
    %1026 = vmatpush1.msra.mxu0 0.0
    %1027 = vmatprep.subr.mxu0 0.0
    %1028 = vmatpush1.msra.mxu0 0.0
    %1029 = vmatprep.subr.mxu0 0.0
    %1030 = vmatpush1.msra.mxu0 0.0
    %1031 = vmatprep.subr.mxu0 0.0
    %1032 = vmatpush1.msra.mxu0 0.0
    %1033 = vmatprep.subr.mxu0 0.0
    %1034 = vmatpush1.msra.mxu0 0.0
    %1035 = vmatprep.subr.mxu0 0.0
    %1036 = vmatpush1.msra.mxu0 0.0
    %1037 = vmatprep.subr.mxu0 0.0
    %1038 = vmatpush1.msra.mxu0 0.0
    %1039 = vmatprep.subr.mxu0 0.0
    %1040 = vmatpush1.msra.mxu0 0.0
    %1041 = vmatprep.subr.mxu0 0.0
    %1042 = vmatpush1.msra.mxu0 0.0
    %1043 = vmatprep.subr.mxu0 0.0
    %1044 = vmatpush1.msra.mxu0 0.0
    %1045 = vmatprep.subr.mxu0 0.0
    %1046 = vmatpush1.msra.mxu0 0.0
    %1047 = vmatprep.subr.mxu0 0.0
    %1048 = vmatpush1.msra.mxu0 0.0
    %1049 = vmatprep.subr.mxu0 0.0
    %1050 = vmatpush1.msra.mxu0 0.0
    %1051 = vmatprep.subr.mxu0 0.0
    %1052 = vmatpush1.msra.mxu0 0.0
    %1053 = vmatprep.subr.mxu0 0.0
    %1054 = vmatpush1.msra.mxu0 0.0
    %1055 = vmatprep.subr.mxu0 0.0
    %1056 = vmatpush1.msra.mxu0 0.0
    %1057 = vmatprep.subr.mxu0 0.0
    %1058 = vmatpush1.msra.mxu0 0.0
    %1059 = vmatprep.mubr.f32.mxu0 0.0
    %1060 = vmatmul.mubr.f32.gmra.mrb[0].mxu0 %v972
    %v1061 = vpop.f32.mrb[0].mxu0
    %v1062 = vadd.f32 0.0, %v1061
    %v1063 = vpop.f32.mrb[0].mxu0
    %v1064 = vadd.f32 0.0, %v1063
    %1065 = vmatprep.mubr.f32.mxu0 0.0
    %1066 = vmatmul.mubr.f32.gmra.mrb[0].mxu0 %v975
    %v1067 = vpop.f32.mrb[0].mxu0
    %v1068 = vadd.f32 0.0, %v1067
    %v1069 = vpop.f32.mrb[0].mxu0
    %v1070 = vadd.f32 0.0, %v1069
    %1071 = vmatprep.mubr.f32.mxu0 0.0
    %1072 = vmatmul.mubr.f32.gmra.mrb[0].mxu0 %v978
    %v1073 = vpop.f32.mrb[0].mxu0
    %v1074 = vadd.f32 0.0, %v1073
    %v1075 = vpop.f32.mrb[0].mxu0
    %v1076 = vadd.f32 0.0, %v1075
    %1077 = vmatprep.mubr.f32.mxu0 0.0
    %1078 = vmatmul.mubr.f32.gmra.mrb[0].mxu0 %v981
    %v1079 = vpop.f32.mrb[0].mxu0
    %v1080 = vadd.f32 0.0, %v1079
    %v1081 = vpop.f32.mrb[0].mxu0
    %v1082 = vadd.f32 0.0, %v1081
    %1083 = vmatprep.mubr.f32.mxu0 0.0
    %1084 = vmatmul.mubr.f32.gmra.mrb[0].mxu0 %v984
    %v1085 = vpop.f32.mrb[0].mxu0
    %v1086 = vadd.f32 0.0, %v1085
    %v1087 = vpop.f32.mrb[0].mxu0
    %v1088 = vadd.f32 0.0, %v1087
    %1089 = vmatprep.mubr.f32.mxu0 0.0
    %1090 = vmatmul.mubr.f32.gmra.mrb[0].mxu0 %v987
    %v1091 = vpop.f32.mrb[0].mxu0
    %v1092 = vadd.f32 0.0, %v1091
    %v1093 = vpop.f32.mrb[0].mxu0
    %v1094 = vadd.f32 0.0, %v1093
    %1095 = vmatprep.mubr.f32.mxu0 0.0
    %1096 = vmatmul.mubr.f32.gmra.mrb[0].mxu0 %v990
    %v1097 = vpop.f32.mrb[0].mxu0
    %v1098 = vadd.f32 0.0, %v1097
    %v1099 = vpop.f32.mrb[0].mxu0
    %v1100 = vadd.f32 0.0, %v1099
    %1101 = vmatprep.mubr.f32.mxu0 0.0
    %1102 = vmatmul.mubr.f32.gmra.mrb[0].mxu0 %v993
    %v1103 = vpop.f32.mrb[0].mxu0
    %v1104 = vadd.f32 0.0, %v1103
    %v1105 = vpop.f32.mrb[0].mxu0
    %v1106 = vadd.f32 0.0, %v1105
    %1107 = vdwg.mxu0
    %1108 = vmatprep.subr.mxu0 0.0
    %1109 = vmatpush1.msra.mxu0 %v941
    %1110 = vmatprep.subr.mxu0 0.0
    %1111 = vmatpush1.msra.mxu0 0.0
    %1112 = vmatprep.subr.mxu0 0.0
    %1113 = vmatpush1.msra.mxu0 0.0
    %1114 = vmatprep.subr.mxu0 0.0
    %1115 = vmatpush1.msra.mxu0 0.0
    %1116 = vmatprep.subr.mxu0 0.0
    %1117 = vmatpush1.msra.mxu0 0.0
    %1118 = vmatprep.subr.mxu0 0.0
    %1119 = vmatpush1.msra.mxu0 0.0
    %1120 = vmatprep.subr.mxu0 0.0
    %1121 = vmatpush1.msra.mxu0 0.0
    %1122 = vmatprep.subr.mxu0 0.0
    %1123 = vmatpush1.msra.mxu0 0.0
    %1124 = vmatprep.subr.mxu0 0.0
    %1125 = vmatpush1.msra.mxu0 0.0
    %1126 = vmatprep.subr.mxu0 0.0
    %1127 = vmatpush1.msra.mxu0 0.0
    %1128 = vmatprep.subr.mxu0 0.0
    %1129 = vmatpush1.msra.mxu0 0.0
    %1130 = vmatprep.subr.mxu0 0.0
    %1131 = vmatpush1.msra.mxu0 0.0
    %1132 = vmatprep.subr.mxu0 0.0
    %1133 = vmatpush1.msra.mxu0 0.0
    %1134 = vmatprep.subr.mxu0 0.0
    %1135 = vmatpush1.msra.mxu0 0.0
    %1136 = vmatprep.subr.mxu0 0.0
    %1137 = vmatpush1.msra.mxu0 0.0
    %1138 = vmatprep.subr.mxu0 0.0
    %1139 = vmatpush1.msra.mxu0 0.0
    %1140 = vmatprep.subr.mxu0 0.0
    %1141 = vmatpush1.msra.mxu0 0.0
    %1142 = vmatprep.subr.mxu0 0.0
    %1143 = vmatpush1.msra.mxu0 0.0
    %1144 = vmatprep.subr.mxu0 0.0
    %1145 = vmatpush1.msra.mxu0 0.0
    %1146 = vmatprep.subr.mxu0 0.0
    %1147 = vmatpush1.msra.mxu0 0.0
    %1148 = vmatprep.subr.mxu0 0.0
    %1149 = vmatpush1.msra.mxu0 0.0
    %1150 = vmatprep.subr.mxu0 0.0
    %1151 = vmatpush1.msra.mxu0 0.0
    %1152 = vmatprep.subr.mxu0 0.0
    %1153 = vmatpush1.msra.mxu0 0.0
    %1154 = vmatprep.subr.mxu0 0.0
    %1155 = vmatpush1.msra.mxu0 0.0
    %1156 = vmatprep.subr.mxu0 0.0
    %1157 = vmatpush1.msra.mxu0 0.0
    %1158 = vmatprep.subr.mxu0 0.0
    %1159 = vmatpush1.msra.mxu0 0.0
    %1160 = vmatprep.subr.mxu0 0.0
    %1161 = vmatpush1.msra.mxu0 0.0
    %1162 = vmatprep.subr.mxu0 0.0
    %1163 = vmatpush1.msra.mxu0 0.0
    %1164 = vmatprep.subr.mxu0 0.0
    %1165 = vmatpush1.msra.mxu0 0.0
    %1166 = vmatprep.subr.mxu0 0.0
    %1167 = vmatpush1.msra.mxu0 0.0
    %1168 = vmatprep.subr.mxu0 0.0
    %1169 = vmatpush1.msra.mxu0 0.0
    %1170 = vmatprep.subr.mxu0 0.0
    %1171 = vmatpush1.msra.mxu0 0.0
    %1172 = vmatprep.mubr.f32.mxu0 0.0
    %1173 = vmatmul.mubr.f32.gmra.mrb[0].mxu0 %v972
    %v1174 = vpop.f32.mrb[0].mxu0
    %v1175 = vadd.f32 0.0, %v1174
    %v1176 = vpop.f32.mrb[0].mxu0
    %1177 = vmatprep.mubr.f32.mxu0 0.0
    %1178 = vmatmul.mubr.f32.gmra.mrb[0].mxu0 %v975
    %v1179 = vpop.f32.mrb[0].mxu0
    %v1180 = vadd.f32 0.0, %v1179
    %v1181 = vpop.f32.mrb[0].mxu0
    %1182 = vmatprep.mubr.f32.mxu0 0.0
    %1183 = vmatmul.mubr.f32.gmra.mrb[0].mxu0 %v978
    %v1184 = vpop.f32.mrb[0].mxu0
    %v1185 = vadd.f32 0.0, %v1184
    %v1186 = vpop.f32.mrb[0].mxu0
    %1187 = vmatprep.mubr.f32.mxu0 0.0
    %1188 = vmatmul.mubr.f32.gmra.mrb[0].mxu0 %v981
    %v1189 = vpop.f32.mrb[0].mxu0
    %v1190 = vadd.f32 0.0, %v1189
    %v1191 = vpop.f32.mrb[0].mxu0
    %1192 = vmatprep.mubr.f32.mxu0 0.0
    %1193 = vmatmul.mubr.f32.gmra.mrb[0].mxu0 %v984
    %v1194 = vpop.f32.mrb[0].mxu0
    %v1195 = vadd.f32 0.0, %v1194
    %v1196 = vpop.f32.mrb[0].mxu0
    %1197 = vmatprep.mubr.f32.mxu0 0.0
    %1198 = vmatmul.mubr.f32.gmra.mrb[0].mxu0 %v987
    %v1199 = vpop.f32.mrb[0].mxu0
    %v1200 = vadd.f32 0.0, %v1199
    %v1201 = vpop.f32.mrb[0].mxu0
    %1202 = vmatprep.mubr.f32.mxu0 0.0
    %1203 = vmatmul.mubr.f32.gmra.mrb[0].mxu0 %v990
    %v1204 = vpop.f32.mrb[0].mxu0
    %v1205 = vadd.f32 0.0, %v1204
    %v1206 = vpop.f32.mrb[0].mxu0
    %1207 = vmatprep.mubr.f32.mxu0 0.0
    %1208 = vmatmul.mubr.f32.gmra.mrb[0].mxu0 %v993
    %v1209 = vpop.f32.mrb[0].mxu0
    %v1210 = vadd.f32 0.0, %v1209
    %v1211 = vpop.f32.mrb[0].mxu0
    %1212 = vdwg.mxu0
    %v1213 = vmul.f32 %v1175, %v153
    %v1214 = vmul.f32 %v1180, %v154
    %v1215 = vmul.f32 %v1185, %v155
    %v1216 = vmul.f32 %v1190, %v156
    %v1217 = vmul.f32 %v1195, %v157
    %v1218 = vmul.f32 %v1200, %v158
    %v1219 = vmul.f32 %v1205, %v159
    %v1220 = vmul.f32 %v1210, %v160
    %v1222 = vsel %vm398, %v1213, 0
    %v1225 = vsel %vm398, %v1214, 0
    %v1228 = vsel %vm398, %v1215, 0
    %v1231 = vsel %vm398, %v1216, 0
    %v1234 = vsel %vm398, %v1217, 0
    %v1237 = vsel %vm398, %v1218, 0
    %v1240 = vsel %vm398, %v1219, 0
    %v1243 = vsel %vm398, %v1220, 0
    %1245 = vmatprep.subr.mxu0 %v213
    %1246 = vmatpush1.msra.mxu0 %v212
    %1247 = vmatprep.subr.mxu0 %v215
    %1248 = vmatpush1.msra.mxu0 %v214
    %1249 = vmatprep.subr.mxu0 %v217
    %1250 = vmatpush1.msra.mxu0 %v216
    %1251 = vmatprep.subr.mxu0 %v219
    %1252 = vmatpush1.msra.mxu0 %v218
    %1253 = vmatprep.subr.mxu0 0.0
    %1254 = vmatpush1.msra.mxu0 0.0
    %1255 = vmatprep.subr.mxu0 0.0
    %1256 = vmatpush1.msra.mxu0 0.0
    %1257 = vmatprep.subr.mxu0 0.0
    %1258 = vmatpush1.msra.mxu0 0.0
    %1259 = vmatprep.subr.mxu0 0.0
    %1260 = vmatpush1.msra.mxu0 0.0
    %1261 = vmatprep.subr.mxu0 0.0
    %1262 = vmatpush1.msra.mxu0 0.0
    %1263 = vmatprep.subr.mxu0 0.0
    %1264 = vmatpush1.msra.mxu0 0.0
    %1265 = vmatprep.subr.mxu0 0.0
    %1266 = vmatpush1.msra.mxu0 0.0
    %1267 = vmatprep.subr.mxu0 0.0
    %1268 = vmatpush1.msra.mxu0 0.0
    %1269 = vmatprep.subr.mxu0 0.0
    %1270 = vmatpush1.msra.mxu0 0.0
    %1271 = vmatprep.subr.mxu0 0.0
    %1272 = vmatpush1.msra.mxu0 0.0
    %1273 = vmatprep.subr.mxu0 0.0
    %1274 = vmatpush1.msra.mxu0 0.0
    %1275 = vmatprep.subr.mxu0 0.0
    %1276 = vmatpush1.msra.mxu0 0.0
    %1277 = vmatprep.subr.mxu0 0.0
    %1278 = vmatpush1.msra.mxu0 0.0
    %1279 = vmatprep.subr.mxu0 0.0
    %1280 = vmatpush1.msra.mxu0 0.0
    %1281 = vmatprep.subr.mxu0 0.0
    %1282 = vmatpush1.msra.mxu0 0.0
    %1283 = vmatprep.subr.mxu0 0.0
    %1284 = vmatpush1.msra.mxu0 0.0
    %1285 = vmatprep.subr.mxu0 0.0
    %1286 = vmatpush1.msra.mxu0 0.0
    %1287 = vmatprep.subr.mxu0 0.0
    %1288 = vmatpush1.msra.mxu0 0.0
    %1289 = vmatprep.subr.mxu0 0.0
    %1290 = vmatpush1.msra.mxu0 0.0
    %1291 = vmatprep.subr.mxu0 0.0
    %1292 = vmatpush1.msra.mxu0 0.0
    %1293 = vmatprep.subr.mxu0 0.0
    %1294 = vmatpush1.msra.mxu0 0.0
    %1295 = vmatprep.subr.mxu0 0.0
    %1296 = vmatpush1.msra.mxu0 0.0
    %1297 = vmatprep.subr.mxu0 0.0
    %1298 = vmatpush1.msra.mxu0 0.0
    %1299 = vmatprep.subr.mxu0 0.0
    %1300 = vmatpush1.msra.mxu0 0.0
    %1301 = vmatprep.subr.mxu0 0.0
    %1302 = vmatpush1.msra.mxu0 0.0
    %1303 = vmatprep.subr.mxu0 0.0
    %1304 = vmatpush1.msra.mxu0 0.0
    %1305 = vmatprep.subr.mxu0 0.0
    %1306 = vmatpush1.msra.mxu0 0.0
    %1307 = vmatprep.subr.mxu0 0.0
    %1308 = vmatpush1.msra.mxu0 0.0
    %1309 = vmatprep.mubr.f32.mxu0 0.0
    %1310 = vmatmul.mubr.f32.gmra.mrb[0].mxu0 %v1222
    %v1311 = vpop.f32.mrb[0].mxu0
    %v1312 = vadd.f32 0.0, %v1311
    %v1313 = vpop.f32.mrb[0].mxu0
    %v1314 = vadd.f32 0.0, %v1313
    %1315 = vmatprep.mubr.f32.mxu0 0.0
    %1316 = vmatmul.mubr.f32.gmra.mrb[0].mxu0 %v1225
    %v1317 = vpop.f32.mrb[0].mxu0
    %v1318 = vadd.f32 0.0, %v1317
    %v1319 = vpop.f32.mrb[0].mxu0
    %v1320 = vadd.f32 0.0, %v1319
    %1321 = vmatprep.mubr.f32.mxu0 0.0
    %1322 = vmatmul.mubr.f32.gmra.mrb[0].mxu0 %v1228
    %v1323 = vpop.f32.mrb[0].mxu0
    %v1324 = vadd.f32 0.0, %v1323
    %v1325 = vpop.f32.mrb[0].mxu0
    %v1326 = vadd.f32 0.0, %v1325
    %1327 = vmatprep.mubr.f32.mxu0 0.0
    %1328 = vmatmul.mubr.f32.gmra.mrb[0].mxu0 %v1231
    %v1329 = vpop.f32.mrb[0].mxu0
    %v1330 = vadd.f32 0.0, %v1329
    %v1331 = vpop.f32.mrb[0].mxu0
    %v1332 = vadd.f32 0.0, %v1331
    %1333 = vmatprep.mubr.f32.mxu0 0.0
    %1334 = vmatmul.mubr.f32.gmra.mrb[0].mxu0 %v1234
    %v1335 = vpop.f32.mrb[0].mxu0
    %v1336 = vadd.f32 0.0, %v1335
    %v1337 = vpop.f32.mrb[0].mxu0
    %v1338 = vadd.f32 0.0, %v1337
    %1339 = vmatprep.mubr.f32.mxu0 0.0
    %1340 = vmatmul.mubr.f32.gmra.mrb[0].mxu0 %v1237
    %v1341 = vpop.f32.mrb[0].mxu0
    %v1342 = vadd.f32 0.0, %v1341
    %v1343 = vpop.f32.mrb[0].mxu0
    %v1344 = vadd.f32 0.0, %v1343
    %1345 = vmatprep.mubr.f32.mxu0 0.0
    %1346 = vmatmul.mubr.f32.gmra.mrb[0].mxu0 %v1240
    %v1347 = vpop.f32.mrb[0].mxu0
    %v1348 = vadd.f32 0.0, %v1347
    %v1349 = vpop.f32.mrb[0].mxu0
    %v1350 = vadd.f32 0.0, %v1349
    %1351 = vmatprep.mubr.f32.mxu0 0.0
    %1352 = vmatmul.mubr.f32.gmra.mrb[0].mxu0 %v1243
    %v1353 = vpop.f32.mrb[0].mxu0
    %v1354 = vadd.f32 0.0, %v1353
    %v1355 = vpop.f32.mrb[0].mxu0
    %v1356 = vadd.f32 0.0, %v1355
    %1357 = vdwg.mxu0
    %v1358 = vld [vmem:[%s9] sm:$0xff]
    %v1359 = vmul.f32 %v1062, %v1358
    %v1360 = vmul.f32 %v1068, %v1358
    %v1361 = vmul.f32 %v1074, %v1358
    %v1362 = vmul.f32 %v1080, %v1358
    %v1363 = vmul.f32 %v1086, %v1358
    %v1364 = vmul.f32 %v1092, %v1358
    %v1365 = vmul.f32 %v1098, %v1358
    %v1366 = vmul.f32 %v1104, %v1358
    %v1367 = vmul.f32 %v1359, 1.442695
    %v1368 = vpow.pop %v1367
    %v1369 = vmul.f32 %v1360, 1.442695
    %v1370 = vpow.pop %v1369
    %v1371 = vmul.f32 %v1361, 1.442695
    %v1372 = vpow.pop %v1371
    %v1373 = vmul.f32 %v1362, 1.442695
    %v1374 = vpow.pop %v1373
    %v1375 = vmul.f32 %v1363, 1.442695
    %v1376 = vpow.pop %v1375
    %v1377 = vmul.f32 %v1364, 1.442695
    %v1378 = vpow.pop %v1377
    %v1379 = vmul.f32 %v1365, 1.442695
    %v1380 = vpow.pop %v1379
    %v1381 = vmul.f32 %v1366, 1.442695
    %v1382 = vpow.pop %v1381
    %v1383 = vmul.f32 %v1312, %v1064
    %v1384 = vmul.f32 %v1318, %v1070
    %v1385 = vmul.f32 %v1324, %v1076
    %v1386 = vmul.f32 %v1330, %v1082
    %v1387 = vmul.f32 %v1336, %v1088
    %v1388 = vmul.f32 %v1342, %v1094
    %v1389 = vmul.f32 %v1348, %v1100
    %v1390 = vmul.f32 %v1354, %v1106
    %v1391 = vmul.f32 %v1368, 0.0
    %v1392 = vadd.f32 %v1391, %v1383
    %v1393 = vmul.f32 %v1392, %v1314
    %v1394 = vmul.f32 %v1370, %v1392
    %v1395 = vadd.f32 %v1394, %v1384
    %v1396 = vmul.f32 %v1395, %v1320
    %v1397 = vmul.f32 %v1372, %v1395
    %v1398 = vadd.f32 %v1397, %v1385
    %v1399 = vmul.f32 %v1398, %v1326
    %v1400 = vmul.f32 %v1374, %v1398
    %v1401 = vadd.f32 %v1400, %v1386
    %v1402 = vmul.f32 %v1401, %v1332
    %v1403 = vmul.f32 %v1376, %v1401
    %v1404 = vadd.f32 %v1403, %v1387
    %v1405 = vmul.f32 %v1404, %v1338
    %v1406 = vmul.f32 %v1378, %v1404
    %v1407 = vadd.f32 %v1406, %v1388
    %v1408 = vmul.f32 %v1407, %v1344
    %v1409 = vmul.f32 %v1380, %v1407
    %v1410 = vadd.f32 %v1409, %v1389
    %v1411 = vmul.f32 %v1410, %v1350
    %v1412 = vmul.f32 %v1382, %v1410
    %v1413 = vadd.f32 %v1412, %v1390
    %v1414 = vmul.f32 %v1413, %v1356
    %v1415 = vld [vmem:[%s10] sm:$0x1]
    %v1417 = vlaneseq
    %v1418 = vshrl.u32 %v1417, 7
    %v1419 = vsub.s32 0, %v1418
    %v1420 = vrot.slane %v1415, %v1419
    %v1422 = vmul.f32 %v1420, %v839
    %v1424 = vsel %vm474, %v127, 0
    %1426 = vmatprep.subr.mxu0 0.0
    %1427 = vmatpush1.msra.mxu0 %v1393
    %1428 = vmatprep.subr.mxu0 0.0
    %1429 = vmatpush1.msra.mxu0 %v1396
    %1430 = vmatprep.subr.mxu0 0.0
    %1431 = vmatpush1.msra.mxu0 %v1399
    %1432 = vmatprep.subr.mxu0 0.0
    %1433 = vmatpush1.msra.mxu0 %v1402
    %1434 = vmatprep.subr.mxu0 0.0
    %1435 = vmatpush1.msra.mxu0 %v1405
    %1436 = vmatprep.subr.mxu0 0.0
    %1437 = vmatpush1.msra.mxu0 %v1408
    %1438 = vmatprep.subr.mxu0 0.0
    %1439 = vmatpush1.msra.mxu0 %v1411
    %1440 = vmatprep.subr.mxu0 0.0
    %1441 = vmatpush1.msra.mxu0 %v1414
    %1442 = vmatprep.subr.mxu0 0.0
    %1443 = vmatpush1.msra.mxu0 0.0
    %1444 = vmatprep.subr.mxu0 0.0
    %1445 = vmatpush1.msra.mxu0 0.0
    %1446 = vmatprep.subr.mxu0 0.0
    %1447 = vmatpush1.msra.mxu0 0.0
    %1448 = vmatprep.subr.mxu0 0.0
    %1449 = vmatpush1.msra.mxu0 0.0
    %1450 = vmatprep.subr.mxu0 0.0
    %1451 = vmatpush1.msra.mxu0 0.0
    %1452 = vmatprep.subr.mxu0 0.0
    %1453 = vmatpush1.msra.mxu0 0.0
    %1454 = vmatprep.subr.mxu0 0.0
    %1455 = vmatpush1.msra.mxu0 0.0
    %1456 = vmatprep.subr.mxu0 0.0
    %1457 = vmatpush1.msra.mxu0 0.0
    %1458 = vmatprep.subr.mxu0 0.0
    %1459 = vmatpush1.msra.mxu0 0.0
    %1460 = vmatprep.subr.mxu0 0.0
    %1461 = vmatpush1.msra.mxu0 0.0
    %1462 = vmatprep.subr.mxu0 0.0
    %1463 = vmatpush1.msra.mxu0 0.0
    %1464 = vmatprep.subr.mxu0 0.0
    %1465 = vmatpush1.msra.mxu0 0.0
    %1466 = vmatprep.subr.mxu0 0.0
    %1467 = vmatpush1.msra.mxu0 0.0
    %1468 = vmatprep.subr.mxu0 0.0
    %1469 = vmatpush1.msra.mxu0 0.0
    %1470 = vmatprep.subr.mxu0 0.0
    %1471 = vmatpush1.msra.mxu0 0.0
    %1472 = vmatprep.subr.mxu0 0.0
    %1473 = vmatpush1.msra.mxu0 0.0
    %1474 = vmatprep.subr.mxu0 0.0
    %1475 = vmatpush1.msra.mxu0 0.0
    %1476 = vmatprep.subr.mxu0 0.0
    %1477 = vmatpush1.msra.mxu0 0.0
    %1478 = vmatprep.subr.mxu0 0.0
    %1479 = vmatpush1.msra.mxu0 0.0
    %1480 = vmatprep.subr.mxu0 0.0
    %1481 = vmatpush1.msra.mxu0 0.0
    %1482 = vmatprep.subr.mxu0 0.0
    %1483 = vmatpush1.msra.mxu0 0.0
    %1484 = vmatprep.subr.mxu0 0.0
    %1485 = vmatpush1.msra.mxu0 0.0
    %1486 = vmatprep.subr.mxu0 0.0
    %1487 = vmatpush1.msra.mxu0 0.0
    %1488 = vmatprep.subr.mxu0 0.0
    %1489 = vmatpush1.msra.mxu0 0.0
    %1490 = vmatprep.mubr.f32.mxu0 0.0
    %1491 = vmatmul.mubr.f32.gmra.mrb[0].mxu0 %v1424
    %v1492 = vpop.f32.mrb[0].mxu0
    %v1493 = vadd.f32 %v1422, %v1492
    %v1494 = vpop.f32.mrb[0].mxu0
    %1495 = vdwg.mxu0
    %v1496 = vxor.u32 %v727, 2147483648
    %v1497 = vmul.f32 %v1496, 1.442695
    %v1498 = vpow.pop %v1497
    %v1499 = vadd.f32 %v1498, 1.0
    %v1500 = vrcp.pop %v1499
    %v1501 = vmul.f32 1.0, %v1500
    %v1502 = vmul.f32 %v727, %v1501
    %v1503 = vmul.f32 %v1493, %v1502
    %v1504 = vld [vmem:[%s11] sm:$0xff]
    %v1505 = vld [vmem:[%s11 + $0x8] sm:$0xff]
    %v1506 = vld [vmem:[%s11 + $0x10] sm:$0xff]
    %v1507 = vld [vmem:[%s11 + $0x18] sm:$0xff]
    %v1508 = vld [vmem:[%s11 + $0x20] sm:$0xff]
    %v1509 = vld [vmem:[%s11 + $0x28] sm:$0xff]
    %v1510 = vld [vmem:[%s11 + $0x30] sm:$0xff]
    %v1511 = vld [vmem:[%s11 + $0x38] sm:$0xff]
    %v1512 = vld [vmem:[%s11 + $0x40] sm:$0xff]
    %v1513 = vld [vmem:[%s11 + $0x48] sm:$0xff]
    %v1514 = vld [vmem:[%s11 + $0x50] sm:$0xff]
    %v1515 = vld [vmem:[%s11 + $0x58] sm:$0xff]
    %v1516 = vld [vmem:[%s11 + $0x60] sm:$0xff]
    %v1517 = vld [vmem:[%s11 + $0x68] sm:$0xff]
    %v1518 = vld [vmem:[%s11 + $0x70] sm:$0xff]
    %v1519 = vld [vmem:[%s11 + $0x78] sm:$0xff]
    %1520 = vmatprep.subr.mxu0 0.0
    %1521 = vmatpush1.msra.mxu0 %v1504
    %1522 = vmatprep.subr.mxu0 0.0
    %1523 = vmatpush1.msra.mxu0 %v1505
    %1524 = vmatprep.subr.mxu0 0.0
    %1525 = vmatpush1.msra.mxu0 %v1506
    %1526 = vmatprep.subr.mxu0 0.0
    %1527 = vmatpush1.msra.mxu0 %v1507
    %1528 = vmatprep.subr.mxu0 0.0
    %1529 = vmatpush1.msra.mxu0 %v1508
    %1530 = vmatprep.subr.mxu0 0.0
    %1531 = vmatpush1.msra.mxu0 %v1509
    %1532 = vmatprep.subr.mxu0 0.0
    %1533 = vmatpush1.msra.mxu0 %v1510
    %1534 = vmatprep.subr.mxu0 0.0
    %1535 = vmatpush1.msra.mxu0 %v1511
    %1536 = vmatprep.subr.mxu0 0.0
    %1537 = vmatpush1.msra.mxu0 %v1512
    %1538 = vmatprep.subr.mxu0 0.0
    %1539 = vmatpush1.msra.mxu0 %v1513
    %1540 = vmatprep.subr.mxu0 0.0
    %1541 = vmatpush1.msra.mxu0 %v1514
    %1542 = vmatprep.subr.mxu0 0.0
    %1543 = vmatpush1.msra.mxu0 %v1515
    %1544 = vmatprep.subr.mxu0 0.0
    %1545 = vmatpush1.msra.mxu0 %v1516
    %1546 = vmatprep.subr.mxu0 0.0
    %1547 = vmatpush1.msra.mxu0 %v1517
    %1548 = vmatprep.subr.mxu0 0.0
    %1549 = vmatpush1.msra.mxu0 %v1518
    %1550 = vmatprep.subr.mxu0 0.0
    %1551 = vmatpush1.msra.mxu0 %v1519
    %1552 = vmatprep.subr.mxu0 0.0
    %1553 = vmatpush1.msra.mxu0 0.0
    %1554 = vmatprep.subr.mxu0 0.0
    %1555 = vmatpush1.msra.mxu0 0.0
    %1556 = vmatprep.subr.mxu0 0.0
    %1557 = vmatpush1.msra.mxu0 0.0
    %1558 = vmatprep.subr.mxu0 0.0
    %1559 = vmatpush1.msra.mxu0 0.0
    %1560 = vmatprep.subr.mxu0 0.0
    %1561 = vmatpush1.msra.mxu0 0.0
    %1562 = vmatprep.subr.mxu0 0.0
    %1563 = vmatpush1.msra.mxu0 0.0
    %1564 = vmatprep.subr.mxu0 0.0
    %1565 = vmatpush1.msra.mxu0 0.0
    %1566 = vmatprep.subr.mxu0 0.0
    %1567 = vmatpush1.msra.mxu0 0.0
    %1568 = vmatprep.subr.mxu0 0.0
    %1569 = vmatpush1.msra.mxu0 0.0
    %1570 = vmatprep.subr.mxu0 0.0
    %1571 = vmatpush1.msra.mxu0 0.0
    %1572 = vmatprep.subr.mxu0 0.0
    %1573 = vmatpush1.msra.mxu0 0.0
    %1574 = vmatprep.subr.mxu0 0.0
    %1575 = vmatpush1.msra.mxu0 0.0
    %1576 = vmatprep.subr.mxu0 0.0
    %1577 = vmatpush1.msra.mxu0 0.0
    %1578 = vmatprep.subr.mxu0 0.0
    %1579 = vmatpush1.msra.mxu0 0.0
    %1580 = vmatprep.subr.mxu0 0.0
    %1581 = vmatpush1.msra.mxu0 0.0
    %1582 = vmatprep.subr.mxu0 0.0
    %1583 = vmatpush1.msra.mxu0 0.0
    %1584 = vmatprep.mubr.f32.mxu0 0.0
    %1585 = vmatmul.mubr.f32.gmra.mrb[0].mxu0 %v1503
    %v1586 = vpop.f32.mrb[0].mxu0
    %v1587 = vadd.f32 %v469, %v1586
    %v1588 = vpop.f32.mrb[0].mxu0
    %1589 = vdwg.mxu0
    %v1590 = vld [vmem:[%s12] sm:$0x1]
    %v1591 = vld [vmem:[%s13] sm:$0x1]
    %v1593 = vsel %vm474, %v1587, 0
    %1595 = vmatprep.subr.mxu0 0.0
    %1596 = vmatpush1.msra.mxu0 %v253
    %1597 = vmatprep.subr.mxu0 0.0
    %1598 = vmatpush1.msra.mxu0 %v254
    %1599 = vmatprep.subr.mxu0 0.0
    %1600 = vmatpush1.msra.mxu0 %v255
    %1601 = vmatprep.subr.mxu0 0.0
    %1602 = vmatpush1.msra.mxu0 %v256
    %1603 = vmatprep.subr.mxu0 0.0
    %1604 = vmatpush1.msra.mxu0 %v257
    %1605 = vmatprep.subr.mxu0 0.0
    %1606 = vmatpush1.msra.mxu0 %v258
    %1607 = vmatprep.subr.mxu0 0.0
    %1608 = vmatpush1.msra.mxu0 %v259
    %1609 = vmatprep.subr.mxu0 0.0
    %1610 = vmatpush1.msra.mxu0 %v260
    %1611 = vmatprep.subr.mxu0 0.0
    %1612 = vmatpush1.msra.mxu0 0.0
    %1613 = vmatprep.subr.mxu0 0.0
    %1614 = vmatpush1.msra.mxu0 0.0
    %1615 = vmatprep.subr.mxu0 0.0
    %1616 = vmatpush1.msra.mxu0 0.0
    %1617 = vmatprep.subr.mxu0 0.0
    %1618 = vmatpush1.msra.mxu0 0.0
    %1619 = vmatprep.subr.mxu0 0.0
    %1620 = vmatpush1.msra.mxu0 0.0
    %1621 = vmatprep.subr.mxu0 0.0
    %1622 = vmatpush1.msra.mxu0 0.0
    %1623 = vmatprep.subr.mxu0 0.0
    %1624 = vmatpush1.msra.mxu0 0.0
    %1625 = vmatprep.subr.mxu0 0.0
    %1626 = vmatpush1.msra.mxu0 0.0
    %1627 = vmatprep.subr.mxu0 0.0
    %1628 = vmatpush1.msra.mxu0 0.0
    %1629 = vmatprep.subr.mxu0 0.0
    %1630 = vmatpush1.msra.mxu0 0.0
    %1631 = vmatprep.subr.mxu0 0.0
    %1632 = vmatpush1.msra.mxu0 0.0
    %1633 = vmatprep.subr.mxu0 0.0
    %1634 = vmatpush1.msra.mxu0 0.0
    %1635 = vmatprep.subr.mxu0 0.0
    %1636 = vmatpush1.msra.mxu0 0.0
    %1637 = vmatprep.subr.mxu0 0.0
    %1638 = vmatpush1.msra.mxu0 0.0
    %1639 = vmatprep.subr.mxu0 0.0
    %1640 = vmatpush1.msra.mxu0 0.0
    %1641 = vmatprep.subr.mxu0 0.0
    %1642 = vmatpush1.msra.mxu0 0.0
    %1643 = vmatprep.subr.mxu0 0.0
    %1644 = vmatpush1.msra.mxu0 0.0
    %1645 = vmatprep.subr.mxu0 0.0
    %1646 = vmatpush1.msra.mxu0 0.0
    %1647 = vmatprep.subr.mxu0 0.0
    %1648 = vmatpush1.msra.mxu0 0.0
    %1649 = vmatprep.subr.mxu0 0.0
    %1650 = vmatpush1.msra.mxu0 0.0
    %1651 = vmatprep.subr.mxu0 0.0
    %1652 = vmatpush1.msra.mxu0 0.0
    %1653 = vmatprep.subr.mxu0 0.0
    %1654 = vmatpush1.msra.mxu0 0.0
    %1655 = vmatprep.subr.mxu0 0.0
    %1656 = vmatpush1.msra.mxu0 0.0
    %1657 = vmatprep.subr.mxu0 0.0
    %1658 = vmatpush1.msra.mxu0 0.0
    %1659 = vmatprep.mubr.f32.mxu0 0.0
    %1660 = vmatmul.mubr.f32.gmra.mrb[0].mxu0 %v1593
    %v1661 = vpop.f32.mrb[0].mxu0
    %v1662 = vadd.f32 0.0, %v1661
    %v1663 = vpop.f32.mrb[0].mxu0
    %1664 = vdwg.mxu0
    %v1665 = vsub.f32 %v1587, %v1662
    %v1666 = vmul.f32 %v1665, %v1665
    %v1668 = vsel %vm474, %v1666, 0
    %1670 = vmatprep.subr.mxu0 0.0
    %1671 = vmatpush1.msra.mxu0 %v253
    %1672 = vmatprep.subr.mxu0 0.0
    %1673 = vmatpush1.msra.mxu0 %v254
    %1674 = vmatprep.subr.mxu0 0.0
    %1675 = vmatpush1.msra.mxu0 %v255
    %1676 = vmatprep.subr.mxu0 0.0
    %1677 = vmatpush1.msra.mxu0 %v256
    %1678 = vmatprep.subr.mxu0 0.0
    %1679 = vmatpush1.msra.mxu0 %v257
    %1680 = vmatprep.subr.mxu0 0.0
    %1681 = vmatpush1.msra.mxu0 %v258
    %1682 = vmatprep.subr.mxu0 0.0
    %1683 = vmatpush1.msra.mxu0 %v259
    %1684 = vmatprep.subr.mxu0 0.0
    %1685 = vmatpush1.msra.mxu0 %v260
    %1686 = vmatprep.subr.mxu0 0.0
    %1687 = vmatpush1.msra.mxu0 0.0
    %1688 = vmatprep.subr.mxu0 0.0
    %1689 = vmatpush1.msra.mxu0 0.0
    %1690 = vmatprep.subr.mxu0 0.0
    %1691 = vmatpush1.msra.mxu0 0.0
    %1692 = vmatprep.subr.mxu0 0.0
    %1693 = vmatpush1.msra.mxu0 0.0
    %1694 = vmatprep.subr.mxu0 0.0
    %1695 = vmatpush1.msra.mxu0 0.0
    %1696 = vmatprep.subr.mxu0 0.0
    %1697 = vmatpush1.msra.mxu0 0.0
    %1698 = vmatprep.subr.mxu0 0.0
    %1699 = vmatpush1.msra.mxu0 0.0
    %1700 = vmatprep.subr.mxu0 0.0
    %1701 = vmatpush1.msra.mxu0 0.0
    %1702 = vmatprep.subr.mxu0 0.0
    %1703 = vmatpush1.msra.mxu0 0.0
    %1704 = vmatprep.subr.mxu0 0.0
    %1705 = vmatpush1.msra.mxu0 0.0
    %1706 = vmatprep.subr.mxu0 0.0
    %1707 = vmatpush1.msra.mxu0 0.0
    %1708 = vmatprep.subr.mxu0 0.0
    %1709 = vmatpush1.msra.mxu0 0.0
    %1710 = vmatprep.subr.mxu0 0.0
    %1711 = vmatpush1.msra.mxu0 0.0
    %1712 = vmatprep.subr.mxu0 0.0
    %1713 = vmatpush1.msra.mxu0 0.0
    %1714 = vmatprep.subr.mxu0 0.0
    %1715 = vmatpush1.msra.mxu0 0.0
    %1716 = vmatprep.subr.mxu0 0.0
    %1717 = vmatpush1.msra.mxu0 0.0
    %1718 = vmatprep.subr.mxu0 0.0
    %1719 = vmatpush1.msra.mxu0 0.0
    %1720 = vmatprep.subr.mxu0 0.0
    %1721 = vmatpush1.msra.mxu0 0.0
    %1722 = vmatprep.subr.mxu0 0.0
    %1723 = vmatpush1.msra.mxu0 0.0
    %1724 = vmatprep.subr.mxu0 0.0
    %1725 = vmatpush1.msra.mxu0 0.0
    %1726 = vmatprep.subr.mxu0 0.0
    %1727 = vmatpush1.msra.mxu0 0.0
    %1728 = vmatprep.subr.mxu0 0.0
    %1729 = vmatpush1.msra.mxu0 0.0
    %1730 = vmatprep.subr.mxu0 0.0
    %1731 = vmatpush1.msra.mxu0 0.0
    %1732 = vmatprep.subr.mxu0 0.0
    %1733 = vmatpush1.msra.mxu0 0.0
    %1734 = vmatprep.mubr.f32.mxu0 0.0
    %1735 = vmatmul.mubr.f32.gmra.mrb[0].mxu0 %v1668
    %v1736 = vpop.f32.mrb[0].mxu0
    %v1737 = vadd.f32 1e-05, %v1736
    %v1738 = vpop.f32.mrb[0].mxu0
    %1739 = vdwg.mxu0
    %v1740 = vrsqrt.pop %v1737
    %v1741 = vmul.f32 %v1665, %v1740
    %v1743 = vlaneseq
    %v1744 = vshrl.u32 %v1743, 7
    %v1745 = vsub.s32 0, %v1744
    %v1746 = vrot.slane %v1590, %v1745
    %v1748 = vmul.f32 %v1741, %v1746
    %v1750 = vlaneseq
    %v1751 = vshrl.u32 %v1750, 7
    %v1752 = vsub.s32 0, %v1751
    %v1753 = vrot.slane %v1591, %v1752
    %v1755 = vadd.f32 %v1748, %v1753
    %v1756 = vld [vmem:[%s14] sm:$0xff]
    %v1757 = vld [vmem:[%s14 + $0x8] sm:$0xff]
    %v1758 = vld [vmem:[%s14 + $0x10] sm:$0xff]
    %v1759 = vld [vmem:[%s14 + $0x18] sm:$0xff]
    %v1760 = vld [vmem:[%s14 + $0x20] sm:$0xff]
    %v1761 = vld [vmem:[%s14 + $0x28] sm:$0xff]
    %v1762 = vld [vmem:[%s14 + $0x30] sm:$0xff]
    %v1763 = vld [vmem:[%s14 + $0x38] sm:$0xff]
    %v1764 = vld [vmem:[%s15] sm:$0x1]
    %v1766 = vlaneseq
    %v1767 = vshrl.u32 %v1766, 7
    %v1768 = vsub.s32 0, %v1767
    %v1769 = vrot.slane %v1764, %v1768
    %v1772 = vsel %vm474, %v1755, 0
    %1774 = vmatprep.subr.mxu0 0.0
    %1775 = vmatpush1.msra.mxu0 %v1756
    %1776 = vmatprep.subr.mxu0 0.0
    %1777 = vmatpush1.msra.mxu0 %v1757
    %1778 = vmatprep.subr.mxu0 0.0
    %1779 = vmatpush1.msra.mxu0 %v1758
    %1780 = vmatprep.subr.mxu0 0.0
    %1781 = vmatpush1.msra.mxu0 %v1759
    %1782 = vmatprep.subr.mxu0 0.0
    %1783 = vmatpush1.msra.mxu0 %v1760
    %1784 = vmatprep.subr.mxu0 0.0
    %1785 = vmatpush1.msra.mxu0 %v1761
    %1786 = vmatprep.subr.mxu0 0.0
    %1787 = vmatpush1.msra.mxu0 %v1762
    %1788 = vmatprep.subr.mxu0 0.0
    %1789 = vmatpush1.msra.mxu0 %v1763
    %1790 = vmatprep.subr.mxu0 0.0
    %1791 = vmatpush1.msra.mxu0 0.0
    %1792 = vmatprep.subr.mxu0 0.0
    %1793 = vmatpush1.msra.mxu0 0.0
    %1794 = vmatprep.subr.mxu0 0.0
    %1795 = vmatpush1.msra.mxu0 0.0
    %1796 = vmatprep.subr.mxu0 0.0
    %1797 = vmatpush1.msra.mxu0 0.0
    %1798 = vmatprep.subr.mxu0 0.0
    %1799 = vmatpush1.msra.mxu0 0.0
    %1800 = vmatprep.subr.mxu0 0.0
    %1801 = vmatpush1.msra.mxu0 0.0
    %1802 = vmatprep.subr.mxu0 0.0
    %1803 = vmatpush1.msra.mxu0 0.0
    %1804 = vmatprep.subr.mxu0 0.0
    %1805 = vmatpush1.msra.mxu0 0.0
    %1806 = vmatprep.subr.mxu0 0.0
    %1807 = vmatpush1.msra.mxu0 0.0
    %1808 = vmatprep.subr.mxu0 0.0
    %1809 = vmatpush1.msra.mxu0 0.0
    %1810 = vmatprep.subr.mxu0 0.0
    %1811 = vmatpush1.msra.mxu0 0.0
    %1812 = vmatprep.subr.mxu0 0.0
    %1813 = vmatpush1.msra.mxu0 0.0
    %1814 = vmatprep.subr.mxu0 0.0
    %1815 = vmatpush1.msra.mxu0 0.0
    %1816 = vmatprep.subr.mxu0 0.0
    %1817 = vmatpush1.msra.mxu0 0.0
    %1818 = vmatprep.subr.mxu0 0.0
    %1819 = vmatpush1.msra.mxu0 0.0
    %1820 = vmatprep.subr.mxu0 0.0
    %1821 = vmatpush1.msra.mxu0 0.0
    %1822 = vmatprep.subr.mxu0 0.0
    %1823 = vmatpush1.msra.mxu0 0.0
    %1824 = vmatprep.subr.mxu0 0.0
    %1825 = vmatpush1.msra.mxu0 0.0
    %1826 = vmatprep.subr.mxu0 0.0
    %1827 = vmatpush1.msra.mxu0 0.0
    %1828 = vmatprep.subr.mxu0 0.0
    %1829 = vmatpush1.msra.mxu0 0.0
    %1830 = vmatprep.subr.mxu0 0.0
    %1831 = vmatpush1.msra.mxu0 0.0
    %1832 = vmatprep.subr.mxu0 0.0
    %1833 = vmatpush1.msra.mxu0 0.0
    %1834 = vmatprep.subr.mxu0 0.0
    %1835 = vmatpush1.msra.mxu0 0.0
    %1836 = vmatprep.subr.mxu0 0.0
    %1837 = vmatpush1.msra.mxu0 0.0
    %1838 = vmatprep.mubr.f32.mxu0 0.0
    %1839 = vmatmul.mubr.f32.gmra.mrb[0].mxu0 %v1772
    %v1840 = vpop.f32.mrb[0].mxu0
    %v1841 = vadd.f32 %v1769, %v1840
    %v1842 = vpop.f32.mrb[0].mxu0
    %1843 = vdwg.mxu0
    %v1844 = vmul.f32 %v1841, %v1841
    %v1845 = vmul.f32 %v1841, %v1844
    %v1846 = vmul.f32 %v1845, 0.044715
    %v1847 = vadd.f32 %v1841, %v1846
    %v1848 = vmul.f32 %v1847, 0.7978846
    %v1849 = vtanh.pop %v1848
    %v1850 = vadd.f32 %v1849, 1.0
    %v1851 = vmul.f32 %v1850, 0.5
    %v1852 = vmul.f32 %v1841, %v1851
    %v1853 = vld [vmem:[%s16] sm:$0xff]
    %v1854 = vld [vmem:[%s16 + $0x8] sm:$0xff]
    %v1855 = vld [vmem:[%s16 + $0x10] sm:$0xff]
    %v1856 = vld [vmem:[%s16 + $0x18] sm:$0xff]
    %v1857 = vld [vmem:[%s16 + $0x20] sm:$0xff]
    %v1858 = vld [vmem:[%s16 + $0x28] sm:$0xff]
    %v1859 = vld [vmem:[%s16 + $0x30] sm:$0xff]
    %v1860 = vld [vmem:[%s16 + $0x38] sm:$0xff]
    %v1861 = vld [vmem:[%s16 + $0x40] sm:$0xff]
    %v1862 = vld [vmem:[%s16 + $0x48] sm:$0xff]
    %v1863 = vld [vmem:[%s16 + $0x50] sm:$0xff]
    %v1864 = vld [vmem:[%s16 + $0x58] sm:$0xff]
    %v1865 = vld [vmem:[%s16 + $0x60] sm:$0xff]
    %v1866 = vld [vmem:[%s16 + $0x68] sm:$0xff]
    %v1867 = vld [vmem:[%s16 + $0x70] sm:$0xff]
    %v1868 = vld [vmem:[%s16 + $0x78] sm:$0xff]
    %v1869 = vld [vmem:[%s17] sm:$0x1]
    %v1871 = vlaneseq
    %v1872 = vshrl.u32 %v1871, 7
    %v1873 = vsub.s32 0, %v1872
    %v1874 = vrot.slane %v1869, %v1873
    %1876 = vmatprep.subr.mxu0 0.0
    %1877 = vmatpush1.msra.mxu0 %v1853
    %1878 = vmatprep.subr.mxu0 0.0
    %1879 = vmatpush1.msra.mxu0 %v1854
    %1880 = vmatprep.subr.mxu0 0.0
    %1881 = vmatpush1.msra.mxu0 %v1855
    %1882 = vmatprep.subr.mxu0 0.0
    %1883 = vmatpush1.msra.mxu0 %v1856
    %1884 = vmatprep.subr.mxu0 0.0
    %1885 = vmatpush1.msra.mxu0 %v1857
    %1886 = vmatprep.subr.mxu0 0.0
    %1887 = vmatpush1.msra.mxu0 %v1858
    %1888 = vmatprep.subr.mxu0 0.0
    %1889 = vmatpush1.msra.mxu0 %v1859
    %1890 = vmatprep.subr.mxu0 0.0
    %1891 = vmatpush1.msra.mxu0 %v1860
    %1892 = vmatprep.subr.mxu0 0.0
    %1893 = vmatpush1.msra.mxu0 %v1861
    %1894 = vmatprep.subr.mxu0 0.0
    %1895 = vmatpush1.msra.mxu0 %v1862
    %1896 = vmatprep.subr.mxu0 0.0
    %1897 = vmatpush1.msra.mxu0 %v1863
    %1898 = vmatprep.subr.mxu0 0.0
    %1899 = vmatpush1.msra.mxu0 %v1864
    %1900 = vmatprep.subr.mxu0 0.0
    %1901 = vmatpush1.msra.mxu0 %v1865
    %1902 = vmatprep.subr.mxu0 0.0
    %1903 = vmatpush1.msra.mxu0 %v1866
    %1904 = vmatprep.subr.mxu0 0.0
    %1905 = vmatpush1.msra.mxu0 %v1867
    %1906 = vmatprep.subr.mxu0 0.0
    %1907 = vmatpush1.msra.mxu0 %v1868
    %1908 = vmatprep.subr.mxu0 0.0
    %1909 = vmatpush1.msra.mxu0 0.0
    %1910 = vmatprep.subr.mxu0 0.0
    %1911 = vmatpush1.msra.mxu0 0.0
    %1912 = vmatprep.subr.mxu0 0.0
    %1913 = vmatpush1.msra.mxu0 0.0
    %1914 = vmatprep.subr.mxu0 0.0
    %1915 = vmatpush1.msra.mxu0 0.0
    %1916 = vmatprep.subr.mxu0 0.0
    %1917 = vmatpush1.msra.mxu0 0.0
    %1918 = vmatprep.subr.mxu0 0.0
    %1919 = vmatpush1.msra.mxu0 0.0
    %1920 = vmatprep.subr.mxu0 0.0
    %1921 = vmatpush1.msra.mxu0 0.0
    %1922 = vmatprep.subr.mxu0 0.0
    %1923 = vmatpush1.msra.mxu0 0.0
    %1924 = vmatprep.subr.mxu0 0.0
    %1925 = vmatpush1.msra.mxu0 0.0
    %1926 = vmatprep.subr.mxu0 0.0
    %1927 = vmatpush1.msra.mxu0 0.0
    %1928 = vmatprep.subr.mxu0 0.0
    %1929 = vmatpush1.msra.mxu0 0.0
    %1930 = vmatprep.subr.mxu0 0.0
    %1931 = vmatpush1.msra.mxu0 0.0
    %1932 = vmatprep.subr.mxu0 0.0
    %1933 = vmatpush1.msra.mxu0 0.0
    %1934 = vmatprep.subr.mxu0 0.0
    %1935 = vmatpush1.msra.mxu0 0.0
    %1936 = vmatprep.subr.mxu0 0.0
    %1937 = vmatpush1.msra.mxu0 0.0
    %1938 = vmatprep.subr.mxu0 0.0
    %1939 = vmatpush1.msra.mxu0 0.0
    %1940 = vmatprep.mubr.f32.mxu0 0.0
    %1941 = vmatmul.mubr.f32.gmra.mrb[0].mxu0 %v1852
    %v1942 = vpop.f32.mrb[0].mxu0
    %v1943 = vadd.f32 %v1874, %v1942
    %v1944 = vpop.f32.mrb[0].mxu0
    %1945 = vdwg.mxu0
    %v1946 = vadd.f32 %v1943, %v1587
    %s1947 = scalar_lea.vmem %s2, 1
    %v1948 = vld [vmem:[%s1947] sm:$0x1]
    %s1949 = scalar_lea.vmem %s3, 1
    %v1950 = vld [vmem:[%s1949] sm:$0x1]
    %v1952 = vsel %vm474, %v1946, 0
    %1954 = vmatprep.subr.mxu0 0.0
    %1955 = vmatpush1.msra.mxu0 %v253
    %1956 = vmatprep.subr.mxu0 0.0
    %1957 = vmatpush1.msra.mxu0 %v254
    %1958 = vmatprep.subr.mxu0 0.0
    %1959 = vmatpush1.msra.mxu0 %v255
    %1960 = vmatprep.subr.mxu0 0.0
    %1961 = vmatpush1.msra.mxu0 %v256
    %1962 = vmatprep.subr.mxu0 0.0
    %1963 = vmatpush1.msra.mxu0 %v257
    %1964 = vmatprep.subr.mxu0 0.0
    %1965 = vmatpush1.msra.mxu0 %v258
    %1966 = vmatprep.subr.mxu0 0.0
    %1967 = vmatpush1.msra.mxu0 %v259
    %1968 = vmatprep.subr.mxu0 0.0
    %1969 = vmatpush1.msra.mxu0 %v260
    %1970 = vmatprep.subr.mxu0 0.0
    %1971 = vmatpush1.msra.mxu0 0.0
    %1972 = vmatprep.subr.mxu0 0.0
    %1973 = vmatpush1.msra.mxu0 0.0
    %1974 = vmatprep.subr.mxu0 0.0
    %1975 = vmatpush1.msra.mxu0 0.0
    %1976 = vmatprep.subr.mxu0 0.0
    %1977 = vmatpush1.msra.mxu0 0.0
    %1978 = vmatprep.subr.mxu0 0.0
    %1979 = vmatpush1.msra.mxu0 0.0
    %1980 = vmatprep.subr.mxu0 0.0
    %1981 = vmatpush1.msra.mxu0 0.0
    %1982 = vmatprep.subr.mxu0 0.0
    %1983 = vmatpush1.msra.mxu0 0.0
    %1984 = vmatprep.subr.mxu0 0.0
    %1985 = vmatpush1.msra.mxu0 0.0
    %1986 = vmatprep.subr.mxu0 0.0
    %1987 = vmatpush1.msra.mxu0 0.0
    %1988 = vmatprep.subr.mxu0 0.0
    %1989 = vmatpush1.msra.mxu0 0.0
    %1990 = vmatprep.subr.mxu0 0.0
    %1991 = vmatpush1.msra.mxu0 0.0
    %1992 = vmatprep.subr.mxu0 0.0
    %1993 = vmatpush1.msra.mxu0 0.0
    %1994 = vmatprep.subr.mxu0 0.0
    %1995 = vmatpush1.msra.mxu0 0.0
    %1996 = vmatprep.subr.mxu0 0.0
    %1997 = vmatpush1.msra.mxu0 0.0
    %1998 = vmatprep.subr.mxu0 0.0
    %1999 = vmatpush1.msra.mxu0 0.0
    %2000 = vmatprep.subr.mxu0 0.0
    %2001 = vmatpush1.msra.mxu0 0.0
    %2002 = vmatprep.subr.mxu0 0.0
    %2003 = vmatpush1.msra.mxu0 0.0
    %2004 = vmatprep.subr.mxu0 0.0
    %2005 = vmatpush1.msra.mxu0 0.0
    %2006 = vmatprep.subr.mxu0 0.0
    %2007 = vmatpush1.msra.mxu0 0.0
    %2008 = vmatprep.subr.mxu0 0.0
    %2009 = vmatpush1.msra.mxu0 0.0
    %2010 = vmatprep.subr.mxu0 0.0
    %2011 = vmatpush1.msra.mxu0 0.0
    %2012 = vmatprep.subr.mxu0 0.0
    %2013 = vmatpush1.msra.mxu0 0.0
    %2014 = vmatprep.subr.mxu0 0.0
    %2015 = vmatpush1.msra.mxu0 0.0
    %2016 = vmatprep.subr.mxu0 0.0
    %2017 = vmatpush1.msra.mxu0 0.0
    %2018 = vmatprep.mubr.f32.mxu0 0.0
    %2019 = vmatmul.mubr.f32.gmra.mrb[0].mxu0 %v1952
    %v2020 = vpop.f32.mrb[0].mxu0
    %v2021 = vadd.f32 0.0, %v2020
    %v2022 = vpop.f32.mrb[0].mxu0
    %2023 = vdwg.mxu0
    %v2024 = vsub.f32 %v1946, %v2021
    %v2025 = vmul.f32 %v2024, %v2024
    %v2027 = vsel %vm474, %v2025, 0
    %2029 = vmatprep.subr.mxu0 0.0
    %2030 = vmatpush1.msra.mxu0 %v253
    %2031 = vmatprep.subr.mxu0 0.0
    %2032 = vmatpush1.msra.mxu0 %v254
    %2033 = vmatprep.subr.mxu0 0.0
    %2034 = vmatpush1.msra.mxu0 %v255
    %2035 = vmatprep.subr.mxu0 0.0
    %2036 = vmatpush1.msra.mxu0 %v256
    %2037 = vmatprep.subr.mxu0 0.0
    %2038 = vmatpush1.msra.mxu0 %v257
    %2039 = vmatprep.subr.mxu0 0.0
    %2040 = vmatpush1.msra.mxu0 %v258
    %2041 = vmatprep.subr.mxu0 0.0
    %2042 = vmatpush1.msra.mxu0 %v259
    %2043 = vmatprep.subr.mxu0 0.0
    %2044 = vmatpush1.msra.mxu0 %v260
    %2045 = vmatprep.subr.mxu0 0.0
    %2046 = vmatpush1.msra.mxu0 0.0
    %2047 = vmatprep.subr.mxu0 0.0
    %2048 = vmatpush1.msra.mxu0 0.0
    %2049 = vmatprep.subr.mxu0 0.0
    %2050 = vmatpush1.msra.mxu0 0.0
    %2051 = vmatprep.subr.mxu0 0.0
    %2052 = vmatpush1.msra.mxu0 0.0
    %2053 = vmatprep.subr.mxu0 0.0
    %2054 = vmatpush1.msra.mxu0 0.0
    %2055 = vmatprep.subr.mxu0 0.0
    %2056 = vmatpush1.msra.mxu0 0.0
    %2057 = vmatprep.subr.mxu0 0.0
    %2058 = vmatpush1.msra.mxu0 0.0
    %2059 = vmatprep.subr.mxu0 0.0
    %2060 = vmatpush1.msra.mxu0 0.0
    %2061 = vmatprep.subr.mxu0 0.0
    %2062 = vmatpush1.msra.mxu0 0.0
    %2063 = vmatprep.subr.mxu0 0.0
    %2064 = vmatpush1.msra.mxu0 0.0
    %2065 = vmatprep.subr.mxu0 0.0
    %2066 = vmatpush1.msra.mxu0 0.0
    %2067 = vmatprep.subr.mxu0 0.0
    %2068 = vmatpush1.msra.mxu0 0.0
    %2069 = vmatprep.subr.mxu0 0.0
    %2070 = vmatpush1.msra.mxu0 0.0
    %2071 = vmatprep.subr.mxu0 0.0
    %2072 = vmatpush1.msra.mxu0 0.0
    %2073 = vmatprep.subr.mxu0 0.0
    %2074 = vmatpush1.msra.mxu0 0.0
    %2075 = vmatprep.subr.mxu0 0.0
    %2076 = vmatpush1.msra.mxu0 0.0
    %2077 = vmatprep.subr.mxu0 0.0
    %2078 = vmatpush1.msra.mxu0 0.0
    %2079 = vmatprep.subr.mxu0 0.0
    %2080 = vmatpush1.msra.mxu0 0.0
    %2081 = vmatprep.subr.mxu0 0.0
    %2082 = vmatpush1.msra.mxu0 0.0
    %2083 = vmatprep.subr.mxu0 0.0
    %2084 = vmatpush1.msra.mxu0 0.0
    %2085 = vmatprep.subr.mxu0 0.0
    %2086 = vmatpush1.msra.mxu0 0.0
    %2087 = vmatprep.subr.mxu0 0.0
    %2088 = vmatpush1.msra.mxu0 0.0
    %2089 = vmatprep.subr.mxu0 0.0
    %2090 = vmatpush1.msra.mxu0 0.0
    %2091 = vmatprep.subr.mxu0 0.0
    %2092 = vmatpush1.msra.mxu0 0.0
    %2093 = vmatprep.mubr.f32.mxu0 0.0
    %2094 = vmatmul.mubr.f32.gmra.mrb[0].mxu0 %v2027
    %v2095 = vpop.f32.mrb[0].mxu0
    %v2096 = vadd.f32 1e-05, %v2095
    %v2097 = vpop.f32.mrb[0].mxu0
    %2098 = vdwg.mxu0
    %v2099 = vrsqrt.pop %v2096
    %v2100 = vmul.f32 %v2024, %v2099
    %v2102 = vlaneseq
    %v2103 = vshrl.u32 %v2102, 7
    %v2104 = vsub.s32 0, %v2103
    %v2105 = vrot.slane %v1948, %v2104
    %v2107 = vmul.f32 %v2100, %v2105
    %v2109 = vlaneseq
    %v2110 = vshrl.u32 %v2109, 7
    %v2111 = vsub.s32 0, %v2110
    %v2112 = vrot.slane %v1950, %v2111
    %v2114 = vadd.f32 %v2107, %v2112
    %s2115 = scalar_lea.vmem %s4, 128
    %v2116 = vld [vmem:[%s2115] sm:$0xff]
    %v2117 = vld [vmem:[%s2115 + $0x8] sm:$0xff]
    %v2118 = vld [vmem:[%s2115 + $0x10] sm:$0xff]
    %v2119 = vld [vmem:[%s2115 + $0x18] sm:$0xff]
    %v2120 = vld [vmem:[%s2115 + $0x20] sm:$0xff]
    %v2121 = vld [vmem:[%s2115 + $0x28] sm:$0xff]
    %v2122 = vld [vmem:[%s2115 + $0x30] sm:$0xff]
    %v2123 = vld [vmem:[%s2115 + $0x38] sm:$0xff]
    %v2124 = vld [vmem:[%s2115 + $0x40] sm:$0xff]
    %v2125 = vld [vmem:[%s2115 + $0x48] sm:$0xff]
    %v2126 = vld [vmem:[%s2115 + $0x50] sm:$0xff]
    %v2127 = vld [vmem:[%s2115 + $0x58] sm:$0xff]
    %v2128 = vld [vmem:[%s2115 + $0x60] sm:$0xff]
    %v2129 = vld [vmem:[%s2115 + $0x68] sm:$0xff]
    %v2130 = vld [vmem:[%s2115 + $0x70] sm:$0xff]
    %v2131 = vld [vmem:[%s2115 + $0x78] sm:$0xff]
    %v2133 = vsel %vm474, %v2114, 0
    %2135 = vmatprep.subr.mxu0 %v2117
    %2136 = vmatpush1.msra.mxu0 %v2116
    %2137 = vmatprep.subr.mxu0 %v2119
    %2138 = vmatpush1.msra.mxu0 %v2118
    %2139 = vmatprep.subr.mxu0 %v2121
    %2140 = vmatpush1.msra.mxu0 %v2120
    %2141 = vmatprep.subr.mxu0 %v2123
    %2142 = vmatpush1.msra.mxu0 %v2122
    %2143 = vmatprep.subr.mxu0 %v2125
    %2144 = vmatpush1.msra.mxu0 %v2124
    %2145 = vmatprep.subr.mxu0 %v2127
    %2146 = vmatpush1.msra.mxu0 %v2126
    %2147 = vmatprep.subr.mxu0 %v2129
    %2148 = vmatpush1.msra.mxu0 %v2128
    %2149 = vmatprep.subr.mxu0 %v2131
    %2150 = vmatpush1.msra.mxu0 %v2130
    %2151 = vmatprep.subr.mxu0 0.0
    %2152 = vmatpush1.msra.mxu0 0.0
    %2153 = vmatprep.subr.mxu0 0.0
    %2154 = vmatpush1.msra.mxu0 0.0
    %2155 = vmatprep.subr.mxu0 0.0
    %2156 = vmatpush1.msra.mxu0 0.0
    %2157 = vmatprep.subr.mxu0 0.0
    %2158 = vmatpush1.msra.mxu0 0.0
    %2159 = vmatprep.subr.mxu0 0.0
    %2160 = vmatpush1.msra.mxu0 0.0
    %2161 = vmatprep.subr.mxu0 0.0
    %2162 = vmatpush1.msra.mxu0 0.0
    %2163 = vmatprep.subr.mxu0 0.0
    %2164 = vmatpush1.msra.mxu0 0.0
    %2165 = vmatprep.subr.mxu0 0.0
    %2166 = vmatpush1.msra.mxu0 0.0
    %2167 = vmatprep.subr.mxu0 0.0
    %2168 = vmatpush1.msra.mxu0 0.0
    %2169 = vmatprep.subr.mxu0 0.0
    %2170 = vmatpush1.msra.mxu0 0.0
    %2171 = vmatprep.subr.mxu0 0.0
    %2172 = vmatpush1.msra.mxu0 0.0
    %2173 = vmatprep.subr.mxu0 0.0
    %2174 = vmatpush1.msra.mxu0 0.0
    %2175 = vmatprep.subr.mxu0 0.0
    %2176 = vmatpush1.msra.mxu0 0.0
    %2177 = vmatprep.subr.mxu0 0.0
    %2178 = vmatpush1.msra.mxu0 0.0
    %2179 = vmatprep.subr.mxu0 0.0
    %2180 = vmatpush1.msra.mxu0 0.0
    %2181 = vmatprep.subr.mxu0 0.0
    %2182 = vmatpush1.msra.mxu0 0.0
    %2183 = vmatprep.subr.mxu0 0.0
    %2184 = vmatpush1.msra.mxu0 0.0
    %2185 = vmatprep.subr.mxu0 0.0
    %2186 = vmatpush1.msra.mxu0 0.0
    %2187 = vmatprep.subr.mxu0 0.0
    %2188 = vmatpush1.msra.mxu0 0.0
    %2189 = vmatprep.subr.mxu0 0.0
    %2190 = vmatpush1.msra.mxu0 0.0
    %2191 = vmatprep.subr.mxu0 0.0
    %2192 = vmatpush1.msra.mxu0 0.0
    %2193 = vmatprep.subr.mxu0 0.0
    %2194 = vmatpush1.msra.mxu0 0.0
    %2195 = vmatprep.subr.mxu0 0.0
    %2196 = vmatpush1.msra.mxu0 0.0
    %2197 = vmatprep.subr.mxu0 0.0
    %2198 = vmatpush1.msra.mxu0 0.0
    %2199 = vmatprep.mubr.f32.mxu0 0.0
    %2200 = vmatmul.mubr.f32.gmra.mrb[0].mxu0 %v2133
    %v2201 = vpop.f32.mrb[0].mxu0
    %v2202 = vadd.f32 0.0, %v2201
    %v2203 = vpop.f32.mrb[0].mxu0
    %v2204 = vadd.f32 0.0, %v2203
    %2205 = vdwg.mxu0
    %s2206 = scalar_lea.vmem %s5, 4
    %v2207 = vld [vmem:[%s2206] sm:$0xf]
    %v2208 = vlaneseq
    %v2209 = vshrl.u32 %v2208, 7
    %v2210 = vsub.s32 2, %v2209
    %v2211 = vrot.slane %v2207, %v2210
    %v2212 = vmul.f32 %v2202, %v2211
    %v2213 = vlaneseq
    %v2214 = vshrl.u32 %v2213, 7
    %v2215 = vsub.s32 1, %v2214
    %v2216 = vrot.slane %v2207, %v2215
    %v2217 = vmul.f32 %v2202, %v2216
    %v2218 = vlaneseq
    %v2219 = vshrl.u32 %v2218, 7
    %v2220 = vsub.s32 0, %v2219
    %v2221 = vrot.slane %v2207, %v2220
    %v2222 = vmul.f32 %v2202, %v2221
    %v2223 = vlaneseq
    %v2224 = vshrl.u32 %v2223, 7
    %v2225 = vsub.s32 3, %v2224
    %v2226 = vrot.slane %v2207, %v2225
    %v2227 = vmul.f32 %v2202, %v2226
    %2228 = vmatprep.subr.mxu0 0.0
    %2229 = vmatpush1.msra.mxu0 %v2212
    %2230 = vmatprep.subr.mxu0 0.0
    %2231 = vmatpush1.msra.mxu0 %v2217
    %2232 = vmatprep.subr.mxu0 0.0
    %2233 = vmatpush1.msra.mxu0 %v2222
    %2234 = vmatprep.subr.mxu0 0.0
    %2235 = vmatpush1.msra.mxu0 0.0
    %2236 = vmatprep.subr.mxu0 0.0
    %2237 = vmatpush1.msra.mxu0 0.0
    %2238 = vmatprep.subr.mxu0 0.0
    %2239 = vmatpush1.msra.mxu0 0.0
    %2240 = vmatprep.subr.mxu0 0.0
    %2241 = vmatpush1.msra.mxu0 0.0
    %2242 = vmatprep.subr.mxu0 0.0
    %2243 = vmatpush1.msra.mxu0 0.0
    %2244 = vmatprep.subr.mxu0 0.0
    %2245 = vmatpush1.msra.mxu0 0.0
    %2246 = vmatprep.subr.mxu0 0.0
    %2247 = vmatpush1.msra.mxu0 0.0
    %2248 = vmatprep.subr.mxu0 0.0
    %2249 = vmatpush1.msra.mxu0 0.0
    %2250 = vmatprep.subr.mxu0 0.0
    %2251 = vmatpush1.msra.mxu0 0.0
    %2252 = vmatprep.subr.mxu0 0.0
    %2253 = vmatpush1.msra.mxu0 0.0
    %2254 = vmatprep.subr.mxu0 0.0
    %2255 = vmatpush1.msra.mxu0 0.0
    %2256 = vmatprep.subr.mxu0 0.0
    %2257 = vmatpush1.msra.mxu0 0.0
    %2258 = vmatprep.subr.mxu0 0.0
    %2259 = vmatpush1.msra.mxu0 0.0
    %2260 = vmatprep.subr.mxu0 0.0
    %2261 = vmatpush1.msra.mxu0 0.0
    %2262 = vmatprep.subr.mxu0 0.0
    %2263 = vmatpush1.msra.mxu0 0.0
    %2264 = vmatprep.subr.mxu0 0.0
    %2265 = vmatpush1.msra.mxu0 0.0
    %2266 = vmatprep.subr.mxu0 0.0
    %2267 = vmatpush1.msra.mxu0 0.0
    %2268 = vmatprep.subr.mxu0 0.0
    %2269 = vmatpush1.msra.mxu0 0.0
    %2270 = vmatprep.subr.mxu0 0.0
    %2271 = vmatpush1.msra.mxu0 0.0
    %2272 = vmatprep.subr.mxu0 0.0
    %2273 = vmatpush1.msra.mxu0 0.0
    %2274 = vmatprep.subr.mxu0 0.0
    %2275 = vmatpush1.msra.mxu0 0.0
    %2276 = vmatprep.subr.mxu0 0.0
    %2277 = vmatpush1.msra.mxu0 0.0
    %2278 = vmatprep.subr.mxu0 0.0
    %2279 = vmatpush1.msra.mxu0 0.0
    %2280 = vmatprep.subr.mxu0 0.0
    %2281 = vmatpush1.msra.mxu0 0.0
    %2282 = vmatprep.subr.mxu0 0.0
    %2283 = vmatpush1.msra.mxu0 0.0
    %2284 = vmatprep.subr.mxu0 0.0
    %2285 = vmatpush1.msra.mxu0 0.0
    %2286 = vmatprep.subr.mxu0 0.0
    %2287 = vmatpush1.msra.mxu0 0.0
    %2288 = vmatprep.subr.mxu0 0.0
    %2289 = vmatpush1.msra.mxu0 0.0
    %2290 = vmatprep.subr.mxu0 0.0
    %2291 = vmatpush1.msra.mxu0 0.0
    %2292 = vmatprep.mubr.f32.mxu0 0.0
    %2293 = vmatmul.mubr.f32.gmra.mrb[0].mxu0 %v752
    %v2294 = vpop.f32.mrb[0].mxu0
    %v2295 = vadd.f32 0.0, %v2294
    %v2296 = vpop.f32.mrb[0].mxu0
    %2297 = vdwg.mxu0
    %v2298 = vadd.f32 %v2227, %v2295
    %s2299 = scalar_lea.vmem %s6, 1
    %v2300 = vld [vmem:[%s2299] sm:$0x1]
    %v2302 = vlaneseq
    %v2303 = vshrl.u32 %v2302, 7
    %v2304 = vsub.s32 0, %v2303
    %v2305 = vrot.slane %v2300, %v2304
    %v2307 = vadd.f32 %v2298, %v2305
    %v2308 = vxor.u32 %v2307, 2147483648
    %v2309 = vmul.f32 %v2308, 1.442695
    %v2310 = vpow.pop %v2309
    %v2311 = vadd.f32 %v2310, 1.0
    %v2312 = vrcp.pop %v2311
    %v2313 = vmul.f32 1.0, %v2312
    %v2314 = vmul.f32 %v2307, %v2313
    %s2315 = scalar_lea.vmem %s7, 256
    %v2316 = vld [vmem:[%s2315] sm:$0xff]
    %v2317 = vld [vmem:[%s2315 + $0x8] sm:$0xff]
    %v2318 = vld [vmem:[%s2315 + $0x10] sm:$0xff]
    %v2319 = vld [vmem:[%s2315 + $0x18] sm:$0xff]
    %v2320 = vld [vmem:[%s2315 + $0x20] sm:$0xff]
    %v2321 = vld [vmem:[%s2315 + $0x28] sm:$0xff]
    %v2322 = vld [vmem:[%s2315 + $0x30] sm:$0xff]
    %v2323 = vld [vmem:[%s2315 + $0x38] sm:$0xff]
    %v2324 = vld [vmem:[%s2315 + $0x40] sm:$0xff]
    %v2325 = vld [vmem:[%s2315 + $0x48] sm:$0xff]
    %v2326 = vld [vmem:[%s2315 + $0x50] sm:$0xff]
    %v2327 = vld [vmem:[%s2315 + $0x58] sm:$0xff]
    %v2328 = vld [vmem:[%s2315 + $0x60] sm:$0xff]
    %v2329 = vld [vmem:[%s2315 + $0x68] sm:$0xff]
    %v2330 = vld [vmem:[%s2315 + $0x70] sm:$0xff]
    %v2331 = vld [vmem:[%s2315 + $0x78] sm:$0xff]
    %v2332 = vld [vmem:[%s2315 + $0x80] sm:$0xff]
    %v2333 = vld [vmem:[%s2315 + $0x88] sm:$0xff]
    %v2334 = vld [vmem:[%s2315 + $0x90] sm:$0xff]
    %v2335 = vld [vmem:[%s2315 + $0x98] sm:$0xff]
    %v2336 = vld [vmem:[%s2315 + $0xa0] sm:$0xff]
    %v2337 = vld [vmem:[%s2315 + $0xa8] sm:$0xff]
    %v2338 = vld [vmem:[%s2315 + $0xb0] sm:$0xff]
    %v2339 = vld [vmem:[%s2315 + $0xb8] sm:$0xff]
    %v2340 = vld [vmem:[%s2315 + $0xc0] sm:$0xff]
    %v2341 = vld [vmem:[%s2315 + $0xc8] sm:$0xff]
    %v2342 = vld [vmem:[%s2315 + $0xd0] sm:$0xff]
    %v2343 = vld [vmem:[%s2315 + $0xd8] sm:$0xff]
    %v2344 = vld [vmem:[%s2315 + $0xe0] sm:$0xff]
    %v2345 = vld [vmem:[%s2315 + $0xe8] sm:$0xff]
    %v2346 = vld [vmem:[%s2315 + $0xf0] sm:$0xff]
    %v2347 = vld [vmem:[%s2315 + $0xf8] sm:$0xff]
    %2348 = vmatprep.subr.mxu0 %v2317
    %2349 = vmatpush1.msra.mxu0 %v2316
    %2350 = vmatprep.subr.mxu0 %v2319
    %2351 = vmatpush1.msra.mxu0 %v2318
    %2352 = vmatprep.subr.mxu0 %v2321
    %2353 = vmatpush1.msra.mxu0 %v2320
    %2354 = vmatprep.subr.mxu0 %v2323
    %2355 = vmatpush1.msra.mxu0 %v2322
    %2356 = vmatprep.subr.mxu0 %v2325
    %2357 = vmatpush1.msra.mxu0 %v2324
    %2358 = vmatprep.subr.mxu0 %v2327
    %2359 = vmatpush1.msra.mxu0 %v2326
    %2360 = vmatprep.subr.mxu0 %v2329
    %2361 = vmatpush1.msra.mxu0 %v2328
    %2362 = vmatprep.subr.mxu0 %v2331
    %2363 = vmatpush1.msra.mxu0 %v2330
    %2364 = vmatprep.subr.mxu0 %v2333
    %2365 = vmatpush1.msra.mxu0 %v2332
    %2366 = vmatprep.subr.mxu0 %v2335
    %2367 = vmatpush1.msra.mxu0 %v2334
    %2368 = vmatprep.subr.mxu0 %v2337
    %2369 = vmatpush1.msra.mxu0 %v2336
    %2370 = vmatprep.subr.mxu0 %v2339
    %2371 = vmatpush1.msra.mxu0 %v2338
    %2372 = vmatprep.subr.mxu0 %v2341
    %2373 = vmatpush1.msra.mxu0 %v2340
    %2374 = vmatprep.subr.mxu0 %v2343
    %2375 = vmatpush1.msra.mxu0 %v2342
    %2376 = vmatprep.subr.mxu0 %v2345
    %2377 = vmatpush1.msra.mxu0 %v2344
    %2378 = vmatprep.subr.mxu0 %v2347
    %2379 = vmatpush1.msra.mxu0 %v2346
    %2380 = vmatprep.subr.mxu0 0.0
    %2381 = vmatpush1.msra.mxu0 0.0
    %2382 = vmatprep.subr.mxu0 0.0
    %2383 = vmatpush1.msra.mxu0 0.0
    %2384 = vmatprep.subr.mxu0 0.0
    %2385 = vmatpush1.msra.mxu0 0.0
    %2386 = vmatprep.subr.mxu0 0.0
    %2387 = vmatpush1.msra.mxu0 0.0
    %2388 = vmatprep.subr.mxu0 0.0
    %2389 = vmatpush1.msra.mxu0 0.0
    %2390 = vmatprep.subr.mxu0 0.0
    %2391 = vmatpush1.msra.mxu0 0.0
    %2392 = vmatprep.subr.mxu0 0.0
    %2393 = vmatpush1.msra.mxu0 0.0
    %2394 = vmatprep.subr.mxu0 0.0
    %2395 = vmatpush1.msra.mxu0 0.0
    %2396 = vmatprep.subr.mxu0 0.0
    %2397 = vmatpush1.msra.mxu0 0.0
    %2398 = vmatprep.subr.mxu0 0.0
    %2399 = vmatpush1.msra.mxu0 0.0
    %2400 = vmatprep.subr.mxu0 0.0
    %2401 = vmatpush1.msra.mxu0 0.0
    %2402 = vmatprep.subr.mxu0 0.0
    %2403 = vmatpush1.msra.mxu0 0.0
    %2404 = vmatprep.subr.mxu0 0.0
    %2405 = vmatpush1.msra.mxu0 0.0
    %2406 = vmatprep.subr.mxu0 0.0
    %2407 = vmatpush1.msra.mxu0 0.0
    %2408 = vmatprep.subr.mxu0 0.0
    %2409 = vmatpush1.msra.mxu0 0.0
    %2410 = vmatprep.subr.mxu0 0.0
    %2411 = vmatpush1.msra.mxu0 0.0
    %2412 = vmatprep.mubr.f32.mxu0 0.0
    %2413 = vmatmul.mubr.f32.gmra.mrb[0].mxu0 %v2314
    %v2414 = vpop.f32.mrb[0].mxu0
    %v2415 = vadd.f32 0.0, %v2414
    %v2416 = vpop.f32.mrb[0].mxu0
    %v2417 = vadd.f32 0.0, %v2416
    %2418 = vdwg.mxu0
    %s2419 = scalar_lea.vmem %s8, 1
    %v2420 = vld [vmem:[%s2419] sm:$0x1]
    %v2422 = vlaneseq
    %v2423 = vshrl.u32 %v2422, 7
    %v2424 = vsub.s32 0, %v2423
    %v2425 = vrot.slane %v2420, %v2424
    %v2427 = vadd.f32 %v2415, %v2425
    %v2428 = vmax.f32 %v2427, 0.0
    %vm2429 = vcmp.ne.f32.partialorder %v2427, %v2427
    %v2430 = vadd.f32 %v2427, 0.0
    %v2431 = vand.u32 2147483647, %v2427
    %v2432 = vsub.f32 0.0, %v2431
    %v2433 = vmul.f32 %v2432, 1.442695
    %v2434 = vpow.pop %v2433
    %v2435 = vadd.f32 %v2434, 1.0
    %v2436 = vlog2.pop %v2435
    %v2437 = vmul.f32 %v2436, 0.6931472
    %v2438 = vmul.f32 -0.5, %v2434
    %v2439 = vadd.f32 %v2438, 1.0
    %v2440 = vmul.f32 %v2439, %v2434
    %v2441 = vand.u32 2147483647, %v2434
    %vm2442 = vcmp.lt.f32.partialorder %v2441, 0.0004427343
    %v2443 = vsel %vm2442, %v2440, %v2437
    %v2444 = vadd.f32 %v2428, %v2443
    %v2445 = vsel %vm2429, %v2430, %v2444
    %v2446 = vmul.f32 %v2445, %v2314
    %2447 = vmatprep.subr.mxu0 %v2446
    %2448 = vmatpush1.msra.mxu0 %v2445
    %2449 = vmatprep.subr.mxu0 0.0
    %2450 = vmatpush1.msra.mxu0 0.0
    %2451 = vmatprep.subr.mxu0 0.0
    %2452 = vmatpush1.msra.mxu0 0.0
    %2453 = vmatprep.subr.mxu0 0.0
    %2454 = vmatpush1.msra.mxu0 0.0
    %2455 = vmatprep.subr.mxu0 0.0
    %2456 = vmatpush1.msra.mxu0 0.0
    %2457 = vmatprep.subr.mxu0 0.0
    %2458 = vmatpush1.msra.mxu0 0.0
    %2459 = vmatprep.subr.mxu0 0.0
    %2460 = vmatpush1.msra.mxu0 0.0
    %2461 = vmatprep.subr.mxu0 0.0
    %2462 = vmatpush1.msra.mxu0 0.0
    %2463 = vmatprep.subr.mxu0 0.0
    %2464 = vmatpush1.msra.mxu0 0.0
    %2465 = vmatprep.subr.mxu0 0.0
    %2466 = vmatpush1.msra.mxu0 0.0
    %2467 = vmatprep.subr.mxu0 0.0
    %2468 = vmatpush1.msra.mxu0 0.0
    %2469 = vmatprep.subr.mxu0 0.0
    %2470 = vmatpush1.msra.mxu0 0.0
    %2471 = vmatprep.subr.mxu0 0.0
    %2472 = vmatpush1.msra.mxu0 0.0
    %2473 = vmatprep.subr.mxu0 0.0
    %2474 = vmatpush1.msra.mxu0 0.0
    %2475 = vmatprep.subr.mxu0 0.0
    %2476 = vmatpush1.msra.mxu0 0.0
    %2477 = vmatprep.subr.mxu0 0.0
    %2478 = vmatpush1.msra.mxu0 0.0
    %2479 = vmatprep.subr.mxu0 0.0
    %2480 = vmatpush1.msra.mxu0 0.0
    %2481 = vmatprep.subr.mxu0 0.0
    %2482 = vmatpush1.msra.mxu0 0.0
    %2483 = vmatprep.subr.mxu0 0.0
    %2484 = vmatpush1.msra.mxu0 0.0
    %2485 = vmatprep.subr.mxu0 0.0
    %2486 = vmatpush1.msra.mxu0 0.0
    %2487 = vmatprep.subr.mxu0 0.0
    %2488 = vmatpush1.msra.mxu0 0.0
    %2489 = vmatprep.subr.mxu0 0.0
    %2490 = vmatpush1.msra.mxu0 0.0
    %2491 = vmatprep.subr.mxu0 0.0
    %2492 = vmatpush1.msra.mxu0 0.0
    %2493 = vmatprep.subr.mxu0 0.0
    %2494 = vmatpush1.msra.mxu0 0.0
    %2495 = vmatprep.subr.mxu0 0.0
    %2496 = vmatpush1.msra.mxu0 0.0
    %2497 = vmatprep.subr.mxu0 0.0
    %2498 = vmatpush1.msra.mxu0 0.0
    %2499 = vmatprep.subr.mxu0 0.0
    %2500 = vmatpush1.msra.mxu0 0.0
    %2501 = vmatprep.subr.mxu0 0.0
    %2502 = vmatpush1.msra.mxu0 0.0
    %2503 = vmatprep.subr.mxu0 0.0
    %2504 = vmatpush1.msra.mxu0 0.0
    %2505 = vmatprep.subr.mxu0 0.0
    %2506 = vmatpush1.msra.mxu0 0.0
    %2507 = vmatprep.subr.mxu0 0.0
    %2508 = vmatpush1.msra.mxu0 0.0
    %2509 = vmatprep.subr.mxu0 0.0
    %2510 = vmatpush1.msra.mxu0 0.0
    %2511 = vmatprep.mubr.f32.mxu0 0.0
    %2512 = vmatmul.mubr.f32.gmra.mrb[0].mxu0 %v972
    %v2513 = vpop.f32.mrb[0].mxu0
    %v2514 = vadd.f32 0.0, %v2513
    %v2515 = vpop.f32.mrb[0].mxu0
    %v2516 = vadd.f32 0.0, %v2515
    %2517 = vmatprep.mubr.f32.mxu0 0.0
    %2518 = vmatmul.mubr.f32.gmra.mrb[0].mxu0 %v975
    %v2519 = vpop.f32.mrb[0].mxu0
    %v2520 = vadd.f32 0.0, %v2519
    %v2521 = vpop.f32.mrb[0].mxu0
    %v2522 = vadd.f32 0.0, %v2521
    %2523 = vmatprep.mubr.f32.mxu0 0.0
    %2524 = vmatmul.mubr.f32.gmra.mrb[0].mxu0 %v978
    %v2525 = vpop.f32.mrb[0].mxu0
    %v2526 = vadd.f32 0.0, %v2525
    %v2527 = vpop.f32.mrb[0].mxu0
    %v2528 = vadd.f32 0.0, %v2527
    %2529 = vmatprep.mubr.f32.mxu0 0.0
    %2530 = vmatmul.mubr.f32.gmra.mrb[0].mxu0 %v981
    %v2531 = vpop.f32.mrb[0].mxu0
    %v2532 = vadd.f32 0.0, %v2531
    %v2533 = vpop.f32.mrb[0].mxu0
    %v2534 = vadd.f32 0.0, %v2533
    %2535 = vmatprep.mubr.f32.mxu0 0.0
    %2536 = vmatmul.mubr.f32.gmra.mrb[0].mxu0 %v984
    %v2537 = vpop.f32.mrb[0].mxu0
    %v2538 = vadd.f32 0.0, %v2537
    %v2539 = vpop.f32.mrb[0].mxu0
    %v2540 = vadd.f32 0.0, %v2539
    %2541 = vmatprep.mubr.f32.mxu0 0.0
    %2542 = vmatmul.mubr.f32.gmra.mrb[0].mxu0 %v987
    %v2543 = vpop.f32.mrb[0].mxu0
    %v2544 = vadd.f32 0.0, %v2543
    %v2545 = vpop.f32.mrb[0].mxu0
    %v2546 = vadd.f32 0.0, %v2545
    %2547 = vmatprep.mubr.f32.mxu0 0.0
    %2548 = vmatmul.mubr.f32.gmra.mrb[0].mxu0 %v990
    %v2549 = vpop.f32.mrb[0].mxu0
    %v2550 = vadd.f32 0.0, %v2549
    %v2551 = vpop.f32.mrb[0].mxu0
    %v2552 = vadd.f32 0.0, %v2551
    %2553 = vmatprep.mubr.f32.mxu0 0.0
    %2554 = vmatmul.mubr.f32.gmra.mrb[0].mxu0 %v993
    %v2555 = vpop.f32.mrb[0].mxu0
    %v2556 = vadd.f32 0.0, %v2555
    %v2557 = vpop.f32.mrb[0].mxu0
    %v2558 = vadd.f32 0.0, %v2557
    %2559 = vdwg.mxu0
    %2560 = vmatprep.subr.mxu0 0.0
    %2561 = vmatpush1.msra.mxu0 %v2417
    %2562 = vmatprep.subr.mxu0 0.0
    %2563 = vmatpush1.msra.mxu0 0.0
    %2564 = vmatprep.subr.mxu0 0.0
    %2565 = vmatpush1.msra.mxu0 0.0
    %2566 = vmatprep.subr.mxu0 0.0
    %2567 = vmatpush1.msra.mxu0 0.0
    %2568 = vmatprep.subr.mxu0 0.0
    %2569 = vmatpush1.msra.mxu0 0.0
    %2570 = vmatprep.subr.mxu0 0.0
    %2571 = vmatpush1.msra.mxu0 0.0
    %2572 = vmatprep.subr.mxu0 0.0
    %2573 = vmatpush1.msra.mxu0 0.0
    %2574 = vmatprep.subr.mxu0 0.0
    %2575 = vmatpush1.msra.mxu0 0.0
    %2576 = vmatprep.subr.mxu0 0.0
    %2577 = vmatpush1.msra.mxu0 0.0
    %2578 = vmatprep.subr.mxu0 0.0
    %2579 = vmatpush1.msra.mxu0 0.0
    %2580 = vmatprep.subr.mxu0 0.0
    %2581 = vmatpush1.msra.mxu0 0.0
    %2582 = vmatprep.subr.mxu0 0.0
    %2583 = vmatpush1.msra.mxu0 0.0
    %2584 = vmatprep.subr.mxu0 0.0
    %2585 = vmatpush1.msra.mxu0 0.0
    %2586 = vmatprep.subr.mxu0 0.0
    %2587 = vmatpush1.msra.mxu0 0.0
    %2588 = vmatprep.subr.mxu0 0.0
    %2589 = vmatpush1.msra.mxu0 0.0
    %2590 = vmatprep.subr.mxu0 0.0
    %2591 = vmatpush1.msra.mxu0 0.0
    %2592 = vmatprep.subr.mxu0 0.0
    %2593 = vmatpush1.msra.mxu0 0.0
    %2594 = vmatprep.subr.mxu0 0.0
    %2595 = vmatpush1.msra.mxu0 0.0
    %2596 = vmatprep.subr.mxu0 0.0
    %2597 = vmatpush1.msra.mxu0 0.0
    %2598 = vmatprep.subr.mxu0 0.0
    %2599 = vmatpush1.msra.mxu0 0.0
    %2600 = vmatprep.subr.mxu0 0.0
    %2601 = vmatpush1.msra.mxu0 0.0
    %2602 = vmatprep.subr.mxu0 0.0
    %2603 = vmatpush1.msra.mxu0 0.0
    %2604 = vmatprep.subr.mxu0 0.0
    %2605 = vmatpush1.msra.mxu0 0.0
    %2606 = vmatprep.subr.mxu0 0.0
    %2607 = vmatpush1.msra.mxu0 0.0
    %2608 = vmatprep.subr.mxu0 0.0
    %2609 = vmatpush1.msra.mxu0 0.0
    %2610 = vmatprep.subr.mxu0 0.0
    %2611 = vmatpush1.msra.mxu0 0.0
    %2612 = vmatprep.subr.mxu0 0.0
    %2613 = vmatpush1.msra.mxu0 0.0
    %2614 = vmatprep.subr.mxu0 0.0
    %2615 = vmatpush1.msra.mxu0 0.0
    %2616 = vmatprep.subr.mxu0 0.0
    %2617 = vmatpush1.msra.mxu0 0.0
    %2618 = vmatprep.subr.mxu0 0.0
    %2619 = vmatpush1.msra.mxu0 0.0
    %2620 = vmatprep.subr.mxu0 0.0
    %2621 = vmatpush1.msra.mxu0 0.0
    %2622 = vmatprep.subr.mxu0 0.0
    %2623 = vmatpush1.msra.mxu0 0.0
    %2624 = vmatprep.mubr.f32.mxu0 0.0
    %2625 = vmatmul.mubr.f32.gmra.mrb[0].mxu0 %v972
    %v2626 = vpop.f32.mrb[0].mxu0
    %v2627 = vadd.f32 0.0, %v2626
    %v2628 = vpop.f32.mrb[0].mxu0
    %2629 = vmatprep.mubr.f32.mxu0 0.0
    %2630 = vmatmul.mubr.f32.gmra.mrb[0].mxu0 %v975
    %v2631 = vpop.f32.mrb[0].mxu0
    %v2632 = vadd.f32 0.0, %v2631
    %v2633 = vpop.f32.mrb[0].mxu0
    %2634 = vmatprep.mubr.f32.mxu0 0.0
    %2635 = vmatmul.mubr.f32.gmra.mrb[0].mxu0 %v978
    %v2636 = vpop.f32.mrb[0].mxu0
    %v2637 = vadd.f32 0.0, %v2636
    %v2638 = vpop.f32.mrb[0].mxu0
    %2639 = vmatprep.mubr.f32.mxu0 0.0
    %2640 = vmatmul.mubr.f32.gmra.mrb[0].mxu0 %v981
    %v2641 = vpop.f32.mrb[0].mxu0
    %v2642 = vadd.f32 0.0, %v2641
    %v2643 = vpop.f32.mrb[0].mxu0
    %2644 = vmatprep.mubr.f32.mxu0 0.0
    %2645 = vmatmul.mubr.f32.gmra.mrb[0].mxu0 %v984
    %v2646 = vpop.f32.mrb[0].mxu0
    %v2647 = vadd.f32 0.0, %v2646
    %v2648 = vpop.f32.mrb[0].mxu0
    %2649 = vmatprep.mubr.f32.mxu0 0.0
    %2650 = vmatmul.mubr.f32.gmra.mrb[0].mxu0 %v987
    %v2651 = vpop.f32.mrb[0].mxu0
    %v2652 = vadd.f32 0.0, %v2651
    %v2653 = vpop.f32.mrb[0].mxu0
    %2654 = vmatprep.mubr.f32.mxu0 0.0
    %2655 = vmatmul.mubr.f32.gmra.mrb[0].mxu0 %v990
    %v2656 = vpop.f32.mrb[0].mxu0
    %v2657 = vadd.f32 0.0, %v2656
    %v2658 = vpop.f32.mrb[0].mxu0
    %2659 = vmatprep.mubr.f32.mxu0 0.0
    %2660 = vmatmul.mubr.f32.gmra.mrb[0].mxu0 %v993
    %v2661 = vpop.f32.mrb[0].mxu0
    %v2662 = vadd.f32 0.0, %v2661
    %v2663 = vpop.f32.mrb[0].mxu0
    %2664 = vdwg.mxu0
    %v2665 = vmul.f32 %v2627, %v153
    %v2666 = vmul.f32 %v2632, %v154
    %v2667 = vmul.f32 %v2637, %v155
    %v2668 = vmul.f32 %v2642, %v156
    %v2669 = vmul.f32 %v2647, %v157
    %v2670 = vmul.f32 %v2652, %v158
    %v2671 = vmul.f32 %v2657, %v159
    %v2672 = vmul.f32 %v2662, %v160
    %v2674 = vsel %vm398, %v2665, 0
    %v2677 = vsel %vm398, %v2666, 0
    %v2680 = vsel %vm398, %v2667, 0
    %v2683 = vsel %vm398, %v2668, 0
    %v2686 = vsel %vm398, %v2669, 0
    %v2689 = vsel %vm398, %v2670, 0
    %v2692 = vsel %vm398, %v2671, 0
    %v2695 = vsel %vm398, %v2672, 0
    %2697 = vmatprep.subr.mxu0 %v213
    %2698 = vmatpush1.msra.mxu0 %v212
    %2699 = vmatprep.subr.mxu0 %v215
    %2700 = vmatpush1.msra.mxu0 %v214
    %2701 = vmatprep.subr.mxu0 %v217
    %2702 = vmatpush1.msra.mxu0 %v216
    %2703 = vmatprep.subr.mxu0 %v219
    %2704 = vmatpush1.msra.mxu0 %v218
    %2705 = vmatprep.subr.mxu0 0.0
    %2706 = vmatpush1.msra.mxu0 0.0
    %2707 = vmatprep.subr.mxu0 0.0
    %2708 = vmatpush1.msra.mxu0 0.0
    %2709 = vmatprep.subr.mxu0 0.0
    %2710 = vmatpush1.msra.mxu0 0.0
    %2711 = vmatprep.subr.mxu0 0.0
    %2712 = vmatpush1.msra.mxu0 0.0
    %2713 = vmatprep.subr.mxu0 0.0
    %2714 = vmatpush1.msra.mxu0 0.0
    %2715 = vmatprep.subr.mxu0 0.0
    %2716 = vmatpush1.msra.mxu0 0.0
    %2717 = vmatprep.subr.mxu0 0.0
    %2718 = vmatpush1.msra.mxu0 0.0
    %2719 = vmatprep.subr.mxu0 0.0
    %2720 = vmatpush1.msra.mxu0 0.0
    %2721 = vmatprep.subr.mxu0 0.0
    %2722 = vmatpush1.msra.mxu0 0.0
    %2723 = vmatprep.subr.mxu0 0.0
    %2724 = vmatpush1.msra.mxu0 0.0
    %2725 = vmatprep.subr.mxu0 0.0
    %2726 = vmatpush1.msra.mxu0 0.0
    %2727 = vmatprep.subr.mxu0 0.0
    %2728 = vmatpush1.msra.mxu0 0.0
    %2729 = vmatprep.subr.mxu0 0.0
    %2730 = vmatpush1.msra.mxu0 0.0
    %2731 = vmatprep.subr.mxu0 0.0
    %2732 = vmatpush1.msra.mxu0 0.0
    %2733 = vmatprep.subr.mxu0 0.0
    %2734 = vmatpush1.msra.mxu0 0.0
    %2735 = vmatprep.subr.mxu0 0.0
    %2736 = vmatpush1.msra.mxu0 0.0
    %2737 = vmatprep.subr.mxu0 0.0
    %2738 = vmatpush1.msra.mxu0 0.0
    %2739 = vmatprep.subr.mxu0 0.0
    %2740 = vmatpush1.msra.mxu0 0.0
    %2741 = vmatprep.subr.mxu0 0.0
    %2742 = vmatpush1.msra.mxu0 0.0
    %2743 = vmatprep.subr.mxu0 0.0
    %2744 = vmatpush1.msra.mxu0 0.0
    %2745 = vmatprep.subr.mxu0 0.0
    %2746 = vmatpush1.msra.mxu0 0.0
    %2747 = vmatprep.subr.mxu0 0.0
    %2748 = vmatpush1.msra.mxu0 0.0
    %2749 = vmatprep.subr.mxu0 0.0
    %2750 = vmatpush1.msra.mxu0 0.0
    %2751 = vmatprep.subr.mxu0 0.0
    %2752 = vmatpush1.msra.mxu0 0.0
    %2753 = vmatprep.subr.mxu0 0.0
    %2754 = vmatpush1.msra.mxu0 0.0
    %2755 = vmatprep.subr.mxu0 0.0
    %2756 = vmatpush1.msra.mxu0 0.0
    %2757 = vmatprep.subr.mxu0 0.0
    %2758 = vmatpush1.msra.mxu0 0.0
    %2759 = vmatprep.subr.mxu0 0.0
    %2760 = vmatpush1.msra.mxu0 0.0
    %2761 = vmatprep.mubr.f32.mxu0 0.0
    %2762 = vmatmul.mubr.f32.gmra.mrb[0].mxu0 %v2674
    %v2763 = vpop.f32.mrb[0].mxu0
    %v2764 = vadd.f32 0.0, %v2763
    %v2765 = vpop.f32.mrb[0].mxu0
    %v2766 = vadd.f32 0.0, %v2765
    %2767 = vmatprep.mubr.f32.mxu0 0.0
    %2768 = vmatmul.mubr.f32.gmra.mrb[0].mxu0 %v2677
    %v2769 = vpop.f32.mrb[0].mxu0
    %v2770 = vadd.f32 0.0, %v2769
    %v2771 = vpop.f32.mrb[0].mxu0
    %v2772 = vadd.f32 0.0, %v2771
    %2773 = vmatprep.mubr.f32.mxu0 0.0
    %2774 = vmatmul.mubr.f32.gmra.mrb[0].mxu0 %v2680
    %v2775 = vpop.f32.mrb[0].mxu0
    %v2776 = vadd.f32 0.0, %v2775
    %v2777 = vpop.f32.mrb[0].mxu0
    %v2778 = vadd.f32 0.0, %v2777
    %2779 = vmatprep.mubr.f32.mxu0 0.0
    %2780 = vmatmul.mubr.f32.gmra.mrb[0].mxu0 %v2683
    %v2781 = vpop.f32.mrb[0].mxu0
    %v2782 = vadd.f32 0.0, %v2781
    %v2783 = vpop.f32.mrb[0].mxu0
    %v2784 = vadd.f32 0.0, %v2783
    %2785 = vmatprep.mubr.f32.mxu0 0.0
    %2786 = vmatmul.mubr.f32.gmra.mrb[0].mxu0 %v2686
    %v2787 = vpop.f32.mrb[0].mxu0
    %v2788 = vadd.f32 0.0, %v2787
    %v2789 = vpop.f32.mrb[0].mxu0
    %v2790 = vadd.f32 0.0, %v2789
    %2791 = vmatprep.mubr.f32.mxu0 0.0
    %2792 = vmatmul.mubr.f32.gmra.mrb[0].mxu0 %v2689
    %v2793 = vpop.f32.mrb[0].mxu0
    %v2794 = vadd.f32 0.0, %v2793
    %v2795 = vpop.f32.mrb[0].mxu0
    %v2796 = vadd.f32 0.0, %v2795
    %2797 = vmatprep.mubr.f32.mxu0 0.0
    %2798 = vmatmul.mubr.f32.gmra.mrb[0].mxu0 %v2692
    %v2799 = vpop.f32.mrb[0].mxu0
    %v2800 = vadd.f32 0.0, %v2799
    %v2801 = vpop.f32.mrb[0].mxu0
    %v2802 = vadd.f32 0.0, %v2801
    %2803 = vmatprep.mubr.f32.mxu0 0.0
    %2804 = vmatmul.mubr.f32.gmra.mrb[0].mxu0 %v2695
    %v2805 = vpop.f32.mrb[0].mxu0
    %v2806 = vadd.f32 0.0, %v2805
    %v2807 = vpop.f32.mrb[0].mxu0
    %v2808 = vadd.f32 0.0, %v2807
    %2809 = vdwg.mxu0
    %s2810 = scalar_lea.vmem %s9, 8
    %v2811 = vld [vmem:[%s2810] sm:$0xff]
    %v2812 = vmul.f32 %v2514, %v2811
    %v2813 = vmul.f32 %v2520, %v2811
    %v2814 = vmul.f32 %v2526, %v2811
    %v2815 = vmul.f32 %v2532, %v2811
    %v2816 = vmul.f32 %v2538, %v2811
    %v2817 = vmul.f32 %v2544, %v2811
    %v2818 = vmul.f32 %v2550, %v2811
    %v2819 = vmul.f32 %v2556, %v2811
    %v2820 = vmul.f32 %v2812, 1.442695
    %v2821 = vpow.pop %v2820
    %v2822 = vmul.f32 %v2813, 1.442695
    %v2823 = vpow.pop %v2822
    %v2824 = vmul.f32 %v2814, 1.442695
    %v2825 = vpow.pop %v2824
    %v2826 = vmul.f32 %v2815, 1.442695
    %v2827 = vpow.pop %v2826
    %v2828 = vmul.f32 %v2816, 1.442695
    %v2829 = vpow.pop %v2828
    %v2830 = vmul.f32 %v2817, 1.442695
    %v2831 = vpow.pop %v2830
    %v2832 = vmul.f32 %v2818, 1.442695
    %v2833 = vpow.pop %v2832
    %v2834 = vmul.f32 %v2819, 1.442695
    %v2835 = vpow.pop %v2834
    %v2836 = vmul.f32 %v2764, %v2516
    %v2837 = vmul.f32 %v2770, %v2522
    %v2838 = vmul.f32 %v2776, %v2528
    %v2839 = vmul.f32 %v2782, %v2534
    %v2840 = vmul.f32 %v2788, %v2540
    %v2841 = vmul.f32 %v2794, %v2546
    %v2842 = vmul.f32 %v2800, %v2552
    %v2843 = vmul.f32 %v2806, %v2558
    %v2844 = vmul.f32 %v2821, 0.0
    %v2845 = vadd.f32 %v2844, %v2836
    %v2846 = vmul.f32 %v2845, %v2766
    %v2847 = vmul.f32 %v2823, %v2845
    %v2848 = vadd.f32 %v2847, %v2837
    %v2849 = vmul.f32 %v2848, %v2772
    %v2850 = vmul.f32 %v2825, %v2848
    %v2851 = vadd.f32 %v2850, %v2838
    %v2852 = vmul.f32 %v2851, %v2778
    %v2853 = vmul.f32 %v2827, %v2851
    %v2854 = vadd.f32 %v2853, %v2839
    %v2855 = vmul.f32 %v2854, %v2784
    %v2856 = vmul.f32 %v2829, %v2854
    %v2857 = vadd.f32 %v2856, %v2840
    %v2858 = vmul.f32 %v2857, %v2790
    %v2859 = vmul.f32 %v2831, %v2857
    %v2860 = vadd.f32 %v2859, %v2841
    %v2861 = vmul.f32 %v2860, %v2796
    %v2862 = vmul.f32 %v2833, %v2860
    %v2863 = vadd.f32 %v2862, %v2842
    %v2864 = vmul.f32 %v2863, %v2802
    %v2865 = vmul.f32 %v2835, %v2863
    %v2866 = vadd.f32 %v2865, %v2843
    %v2867 = vmul.f32 %v2866, %v2808
    %s2868 = scalar_lea.vmem %s10, 1
    %v2869 = vld [vmem:[%s2868] sm:$0x1]
    %v2871 = vlaneseq
    %v2872 = vshrl.u32 %v2871, 7
    %v2873 = vsub.s32 0, %v2872
    %v2874 = vrot.slane %v2869, %v2873
    %v2876 = vmul.f32 %v2874, %v2314
    %2877 = vmatprep.subr.mxu0 0.0
    %2878 = vmatpush1.msra.mxu0 %v2846
    %2879 = vmatprep.subr.mxu0 0.0
    %2880 = vmatpush1.msra.mxu0 %v2849
    %2881 = vmatprep.subr.mxu0 0.0
    %2882 = vmatpush1.msra.mxu0 %v2852
    %2883 = vmatprep.subr.mxu0 0.0
    %2884 = vmatpush1.msra.mxu0 %v2855
    %2885 = vmatprep.subr.mxu0 0.0
    %2886 = vmatpush1.msra.mxu0 %v2858
    %2887 = vmatprep.subr.mxu0 0.0
    %2888 = vmatpush1.msra.mxu0 %v2861
    %2889 = vmatprep.subr.mxu0 0.0
    %2890 = vmatpush1.msra.mxu0 %v2864
    %2891 = vmatprep.subr.mxu0 0.0
    %2892 = vmatpush1.msra.mxu0 %v2867
    %2893 = vmatprep.subr.mxu0 0.0
    %2894 = vmatpush1.msra.mxu0 0.0
    %2895 = vmatprep.subr.mxu0 0.0
    %2896 = vmatpush1.msra.mxu0 0.0
    %2897 = vmatprep.subr.mxu0 0.0
    %2898 = vmatpush1.msra.mxu0 0.0
    %2899 = vmatprep.subr.mxu0 0.0
    %2900 = vmatpush1.msra.mxu0 0.0
    %2901 = vmatprep.subr.mxu0 0.0
    %2902 = vmatpush1.msra.mxu0 0.0
    %2903 = vmatprep.subr.mxu0 0.0
    %2904 = vmatpush1.msra.mxu0 0.0
    %2905 = vmatprep.subr.mxu0 0.0
    %2906 = vmatpush1.msra.mxu0 0.0
    %2907 = vmatprep.subr.mxu0 0.0
    %2908 = vmatpush1.msra.mxu0 0.0
    %2909 = vmatprep.subr.mxu0 0.0
    %2910 = vmatpush1.msra.mxu0 0.0
    %2911 = vmatprep.subr.mxu0 0.0
    %2912 = vmatpush1.msra.mxu0 0.0
    %2913 = vmatprep.subr.mxu0 0.0
    %2914 = vmatpush1.msra.mxu0 0.0
    %2915 = vmatprep.subr.mxu0 0.0
    %2916 = vmatpush1.msra.mxu0 0.0
    %2917 = vmatprep.subr.mxu0 0.0
    %2918 = vmatpush1.msra.mxu0 0.0
    %2919 = vmatprep.subr.mxu0 0.0
    %2920 = vmatpush1.msra.mxu0 0.0
    %2921 = vmatprep.subr.mxu0 0.0
    %2922 = vmatpush1.msra.mxu0 0.0
    %2923 = vmatprep.subr.mxu0 0.0
    %2924 = vmatpush1.msra.mxu0 0.0
    %2925 = vmatprep.subr.mxu0 0.0
    %2926 = vmatpush1.msra.mxu0 0.0
    %2927 = vmatprep.subr.mxu0 0.0
    %2928 = vmatpush1.msra.mxu0 0.0
    %2929 = vmatprep.subr.mxu0 0.0
    %2930 = vmatpush1.msra.mxu0 0.0
    %2931 = vmatprep.subr.mxu0 0.0
    %2932 = vmatpush1.msra.mxu0 0.0
    %2933 = vmatprep.subr.mxu0 0.0
    %2934 = vmatpush1.msra.mxu0 0.0
    %2935 = vmatprep.subr.mxu0 0.0
    %2936 = vmatpush1.msra.mxu0 0.0
    %2937 = vmatprep.subr.mxu0 0.0
    %2938 = vmatpush1.msra.mxu0 0.0
    %2939 = vmatprep.subr.mxu0 0.0
    %2940 = vmatpush1.msra.mxu0 0.0
    %2941 = vmatprep.mubr.f32.mxu0 0.0
    %2942 = vmatmul.mubr.f32.gmra.mrb[0].mxu0 %v1424
    %v2943 = vpop.f32.mrb[0].mxu0
    %v2944 = vadd.f32 %v2876, %v2943
    %v2945 = vpop.f32.mrb[0].mxu0
    %2946 = vdwg.mxu0
    %v2947 = vxor.u32 %v2204, 2147483648
    %v2948 = vmul.f32 %v2947, 1.442695
    %v2949 = vpow.pop %v2948
    %v2950 = vadd.f32 %v2949, 1.0
    %v2951 = vrcp.pop %v2950
    %v2952 = vmul.f32 1.0, %v2951
    %v2953 = vmul.f32 %v2204, %v2952
    %v2954 = vmul.f32 %v2944, %v2953
    %s2955 = scalar_lea.vmem %s11, 128
    %v2956 = vld [vmem:[%s2955] sm:$0xff]
    %v2957 = vld [vmem:[%s2955 + $0x8] sm:$0xff]
    %v2958 = vld [vmem:[%s2955 + $0x10] sm:$0xff]
    %v2959 = vld [vmem:[%s2955 + $0x18] sm:$0xff]
    %v2960 = vld [vmem:[%s2955 + $0x20] sm:$0xff]
    %v2961 = vld [vmem:[%s2955 + $0x28] sm:$0xff]
    %v2962 = vld [vmem:[%s2955 + $0x30] sm:$0xff]
    %v2963 = vld [vmem:[%s2955 + $0x38] sm:$0xff]
    %v2964 = vld [vmem:[%s2955 + $0x40] sm:$0xff]
    %v2965 = vld [vmem:[%s2955 + $0x48] sm:$0xff]
    %v2966 = vld [vmem:[%s2955 + $0x50] sm:$0xff]
    %v2967 = vld [vmem:[%s2955 + $0x58] sm:$0xff]
    %v2968 = vld [vmem:[%s2955 + $0x60] sm:$0xff]
    %v2969 = vld [vmem:[%s2955 + $0x68] sm:$0xff]
    %v2970 = vld [vmem:[%s2955 + $0x70] sm:$0xff]
    %v2971 = vld [vmem:[%s2955 + $0x78] sm:$0xff]
    %2972 = vmatprep.subr.mxu0 0.0
    %2973 = vmatpush1.msra.mxu0 %v2956
    %2974 = vmatprep.subr.mxu0 0.0
    %2975 = vmatpush1.msra.mxu0 %v2957
    %2976 = vmatprep.subr.mxu0 0.0
    %2977 = vmatpush1.msra.mxu0 %v2958
    %2978 = vmatprep.subr.mxu0 0.0
    %2979 = vmatpush1.msra.mxu0 %v2959
    %2980 = vmatprep.subr.mxu0 0.0
    %2981 = vmatpush1.msra.mxu0 %v2960
    %2982 = vmatprep.subr.mxu0 0.0
    %2983 = vmatpush1.msra.mxu0 %v2961
    %2984 = vmatprep.subr.mxu0 0.0
    %2985 = vmatpush1.msra.mxu0 %v2962
    %2986 = vmatprep.subr.mxu0 0.0
    %2987 = vmatpush1.msra.mxu0 %v2963
    %2988 = vmatprep.subr.mxu0 0.0
    %2989 = vmatpush1.msra.mxu0 %v2964
    %2990 = vmatprep.subr.mxu0 0.0
    %2991 = vmatpush1.msra.mxu0 %v2965
    %2992 = vmatprep.subr.mxu0 0.0
    %2993 = vmatpush1.msra.mxu0 %v2966
    %2994 = vmatprep.subr.mxu0 0.0
    %2995 = vmatpush1.msra.mxu0 %v2967
    %2996 = vmatprep.subr.mxu0 0.0
    %2997 = vmatpush1.msra.mxu0 %v2968
    %2998 = vmatprep.subr.mxu0 0.0
    %2999 = vmatpush1.msra.mxu0 %v2969
    %3000 = vmatprep.subr.mxu0 0.0
    %3001 = vmatpush1.msra.mxu0 %v2970
    %3002 = vmatprep.subr.mxu0 0.0
    %3003 = vmatpush1.msra.mxu0 %v2971
    %3004 = vmatprep.subr.mxu0 0.0
    %3005 = vmatpush1.msra.mxu0 0.0
    %3006 = vmatprep.subr.mxu0 0.0
    %3007 = vmatpush1.msra.mxu0 0.0
    %3008 = vmatprep.subr.mxu0 0.0
    %3009 = vmatpush1.msra.mxu0 0.0
    %3010 = vmatprep.subr.mxu0 0.0
    %3011 = vmatpush1.msra.mxu0 0.0
    %3012 = vmatprep.subr.mxu0 0.0
    %3013 = vmatpush1.msra.mxu0 0.0
    %3014 = vmatprep.subr.mxu0 0.0
    %3015 = vmatpush1.msra.mxu0 0.0
    %3016 = vmatprep.subr.mxu0 0.0
    %3017 = vmatpush1.msra.mxu0 0.0
    %3018 = vmatprep.subr.mxu0 0.0
    %3019 = vmatpush1.msra.mxu0 0.0
    %3020 = vmatprep.subr.mxu0 0.0
    %3021 = vmatpush1.msra.mxu0 0.0
    %3022 = vmatprep.subr.mxu0 0.0
    %3023 = vmatpush1.msra.mxu0 0.0
    %3024 = vmatprep.subr.mxu0 0.0
    %3025 = vmatpush1.msra.mxu0 0.0
    %3026 = vmatprep.subr.mxu0 0.0
    %3027 = vmatpush1.msra.mxu0 0.0
    %3028 = vmatprep.subr.mxu0 0.0
    %3029 = vmatpush1.msra.mxu0 0.0
    %3030 = vmatprep.subr.mxu0 0.0
    %3031 = vmatpush1.msra.mxu0 0.0
    %3032 = vmatprep.subr.mxu0 0.0
    %3033 = vmatpush1.msra.mxu0 0.0
    %3034 = vmatprep.subr.mxu0 0.0
    %3035 = vmatpush1.msra.mxu0 0.0
    %3036 = vmatprep.mubr.f32.mxu0 0.0
    %3037 = vmatmul.mubr.f32.gmra.mrb[0].mxu0 %v2954
    %v3038 = vpop.f32.mrb[0].mxu0
    %v3039 = vadd.f32 %v1946, %v3038
    %v3040 = vpop.f32.mrb[0].mxu0
    %3041 = vdwg.mxu0
    %s3042 = scalar_lea.vmem %s12, 1
    %v3043 = vld [vmem:[%s3042] sm:$0x1]
    %s3044 = scalar_lea.vmem %s13, 1
    %v3045 = vld [vmem:[%s3044] sm:$0x1]
    %v3047 = vsel %vm474, %v3039, 0
    %3049 = vmatprep.subr.mxu0 0.0
    %3050 = vmatpush1.msra.mxu0 %v253
    %3051 = vmatprep.subr.mxu0 0.0
    %3052 = vmatpush1.msra.mxu0 %v254
    %3053 = vmatprep.subr.mxu0 0.0
    %3054 = vmatpush1.msra.mxu0 %v255
    %3055 = vmatprep.subr.mxu0 0.0
    %3056 = vmatpush1.msra.mxu0 %v256
    %3057 = vmatprep.subr.mxu0 0.0
    %3058 = vmatpush1.msra.mxu0 %v257
    %3059 = vmatprep.subr.mxu0 0.0
    %3060 = vmatpush1.msra.mxu0 %v258
    %3061 = vmatprep.subr.mxu0 0.0
    %3062 = vmatpush1.msra.mxu0 %v259
    %3063 = vmatprep.subr.mxu0 0.0
    %3064 = vmatpush1.msra.mxu0 %v260
    %3065 = vmatprep.subr.mxu0 0.0
    %3066 = vmatpush1.msra.mxu0 0.0
    %3067 = vmatprep.subr.mxu0 0.0
    %3068 = vmatpush1.msra.mxu0 0.0
    %3069 = vmatprep.subr.mxu0 0.0
    %3070 = vmatpush1.msra.mxu0 0.0
    %3071 = vmatprep.subr.mxu0 0.0
    %3072 = vmatpush1.msra.mxu0 0.0
    %3073 = vmatprep.subr.mxu0 0.0
    %3074 = vmatpush1.msra.mxu0 0.0
    %3075 = vmatprep.subr.mxu0 0.0
    %3076 = vmatpush1.msra.mxu0 0.0
    %3077 = vmatprep.subr.mxu0 0.0
    %3078 = vmatpush1.msra.mxu0 0.0
    %3079 = vmatprep.subr.mxu0 0.0
    %3080 = vmatpush1.msra.mxu0 0.0
    %3081 = vmatprep.subr.mxu0 0.0
    %3082 = vmatpush1.msra.mxu0 0.0
    %3083 = vmatprep.subr.mxu0 0.0
    %3084 = vmatpush1.msra.mxu0 0.0
    %3085 = vmatprep.subr.mxu0 0.0
    %3086 = vmatpush1.msra.mxu0 0.0
    %3087 = vmatprep.subr.mxu0 0.0
    %3088 = vmatpush1.msra.mxu0 0.0
    %3089 = vmatprep.subr.mxu0 0.0
    %3090 = vmatpush1.msra.mxu0 0.0
    %3091 = vmatprep.subr.mxu0 0.0
    %3092 = vmatpush1.msra.mxu0 0.0
    %3093 = vmatprep.subr.mxu0 0.0
    %3094 = vmatpush1.msra.mxu0 0.0
    %3095 = vmatprep.subr.mxu0 0.0
    %3096 = vmatpush1.msra.mxu0 0.0
    %3097 = vmatprep.subr.mxu0 0.0
    %3098 = vmatpush1.msra.mxu0 0.0
    %3099 = vmatprep.subr.mxu0 0.0
    %3100 = vmatpush1.msra.mxu0 0.0
    %3101 = vmatprep.subr.mxu0 0.0
    %3102 = vmatpush1.msra.mxu0 0.0
    %3103 = vmatprep.subr.mxu0 0.0
    %3104 = vmatpush1.msra.mxu0 0.0
    %3105 = vmatprep.subr.mxu0 0.0
    %3106 = vmatpush1.msra.mxu0 0.0
    %3107 = vmatprep.subr.mxu0 0.0
    %3108 = vmatpush1.msra.mxu0 0.0
    %3109 = vmatprep.subr.mxu0 0.0
    %3110 = vmatpush1.msra.mxu0 0.0
    %3111 = vmatprep.subr.mxu0 0.0
    %3112 = vmatpush1.msra.mxu0 0.0
    %3113 = vmatprep.mubr.f32.mxu0 0.0
    %3114 = vmatmul.mubr.f32.gmra.mrb[0].mxu0 %v3047
    %v3115 = vpop.f32.mrb[0].mxu0
    %v3116 = vadd.f32 0.0, %v3115
    %v3117 = vpop.f32.mrb[0].mxu0
    %3118 = vdwg.mxu0
    %v3119 = vsub.f32 %v3039, %v3116
    %v3120 = vmul.f32 %v3119, %v3119
    %v3122 = vsel %vm474, %v3120, 0
    %3124 = vmatprep.subr.mxu0 0.0
    %3125 = vmatpush1.msra.mxu0 %v253
    %3126 = vmatprep.subr.mxu0 0.0
    %3127 = vmatpush1.msra.mxu0 %v254
    %3128 = vmatprep.subr.mxu0 0.0
    %3129 = vmatpush1.msra.mxu0 %v255
    %3130 = vmatprep.subr.mxu0 0.0
    %3131 = vmatpush1.msra.mxu0 %v256
    %3132 = vmatprep.subr.mxu0 0.0
    %3133 = vmatpush1.msra.mxu0 %v257
    %3134 = vmatprep.subr.mxu0 0.0
    %3135 = vmatpush1.msra.mxu0 %v258
    %3136 = vmatprep.subr.mxu0 0.0
    %3137 = vmatpush1.msra.mxu0 %v259
    %3138 = vmatprep.subr.mxu0 0.0
    %3139 = vmatpush1.msra.mxu0 %v260
    %3140 = vmatprep.subr.mxu0 0.0
    %3141 = vmatpush1.msra.mxu0 0.0
    %3142 = vmatprep.subr.mxu0 0.0
    %3143 = vmatpush1.msra.mxu0 0.0
    %3144 = vmatprep.subr.mxu0 0.0
    %3145 = vmatpush1.msra.mxu0 0.0
    %3146 = vmatprep.subr.mxu0 0.0
    %3147 = vmatpush1.msra.mxu0 0.0
    %3148 = vmatprep.subr.mxu0 0.0
    %3149 = vmatpush1.msra.mxu0 0.0
    %3150 = vmatprep.subr.mxu0 0.0
    %3151 = vmatpush1.msra.mxu0 0.0
    %3152 = vmatprep.subr.mxu0 0.0
    %3153 = vmatpush1.msra.mxu0 0.0
    %3154 = vmatprep.subr.mxu0 0.0
    %3155 = vmatpush1.msra.mxu0 0.0
    %3156 = vmatprep.subr.mxu0 0.0
    %3157 = vmatpush1.msra.mxu0 0.0
    %3158 = vmatprep.subr.mxu0 0.0
    %3159 = vmatpush1.msra.mxu0 0.0
    %3160 = vmatprep.subr.mxu0 0.0
    %3161 = vmatpush1.msra.mxu0 0.0
    %3162 = vmatprep.subr.mxu0 0.0
    %3163 = vmatpush1.msra.mxu0 0.0
    %3164 = vmatprep.subr.mxu0 0.0
    %3165 = vmatpush1.msra.mxu0 0.0
    %3166 = vmatprep.subr.mxu0 0.0
    %3167 = vmatpush1.msra.mxu0 0.0
    %3168 = vmatprep.subr.mxu0 0.0
    %3169 = vmatpush1.msra.mxu0 0.0
    %3170 = vmatprep.subr.mxu0 0.0
    %3171 = vmatpush1.msra.mxu0 0.0
    %3172 = vmatprep.subr.mxu0 0.0
    %3173 = vmatpush1.msra.mxu0 0.0
    %3174 = vmatprep.subr.mxu0 0.0
    %3175 = vmatpush1.msra.mxu0 0.0
    %3176 = vmatprep.subr.mxu0 0.0
    %3177 = vmatpush1.msra.mxu0 0.0
    %3178 = vmatprep.subr.mxu0 0.0
    %3179 = vmatpush1.msra.mxu0 0.0
    %3180 = vmatprep.subr.mxu0 0.0
    %3181 = vmatpush1.msra.mxu0 0.0
    %3182 = vmatprep.subr.mxu0 0.0
    %3183 = vmatpush1.msra.mxu0 0.0
    %3184 = vmatprep.subr.mxu0 0.0
    %3185 = vmatpush1.msra.mxu0 0.0
    %3186 = vmatprep.subr.mxu0 0.0
    %3187 = vmatpush1.msra.mxu0 0.0
    %3188 = vmatprep.mubr.f32.mxu0 0.0
    %3189 = vmatmul.mubr.f32.gmra.mrb[0].mxu0 %v3122
    %v3190 = vpop.f32.mrb[0].mxu0
    %v3191 = vadd.f32 1e-05, %v3190
    %v3192 = vpop.f32.mrb[0].mxu0
    %3193 = vdwg.mxu0
    %v3194 = vrsqrt.pop %v3191
    %v3195 = vmul.f32 %v3119, %v3194
    %v3197 = vlaneseq
    %v3198 = vshrl.u32 %v3197, 7
    %v3199 = vsub.s32 0, %v3198
    %v3200 = vrot.slane %v3043, %v3199
    %v3202 = vmul.f32 %v3195, %v3200
    %v3204 = vlaneseq
    %v3205 = vshrl.u32 %v3204, 7
    %v3206 = vsub.s32 0, %v3205
    %v3207 = vrot.slane %v3045, %v3206
    %v3209 = vadd.f32 %v3202, %v3207
    %s3210 = scalar_lea.vmem %s14, 64
    %v3211 = vld [vmem:[%s3210] sm:$0xff]
    %v3212 = vld [vmem:[%s3210 + $0x8] sm:$0xff]
    %v3213 = vld [vmem:[%s3210 + $0x10] sm:$0xff]
    %v3214 = vld [vmem:[%s3210 + $0x18] sm:$0xff]
    %v3215 = vld [vmem:[%s3210 + $0x20] sm:$0xff]
    %v3216 = vld [vmem:[%s3210 + $0x28] sm:$0xff]
    %v3217 = vld [vmem:[%s3210 + $0x30] sm:$0xff]
    %v3218 = vld [vmem:[%s3210 + $0x38] sm:$0xff]
    %s3219 = scalar_lea.vmem %s15, 1
    %v3220 = vld [vmem:[%s3219] sm:$0x1]
    %v3222 = vlaneseq
    %v3223 = vshrl.u32 %v3222, 7
    %v3224 = vsub.s32 0, %v3223
    %v3225 = vrot.slane %v3220, %v3224
    %v3228 = vsel %vm474, %v3209, 0
    %3230 = vmatprep.subr.mxu0 0.0
    %3231 = vmatpush1.msra.mxu0 %v3211
    %3232 = vmatprep.subr.mxu0 0.0
    %3233 = vmatpush1.msra.mxu0 %v3212
    %3234 = vmatprep.subr.mxu0 0.0
    %3235 = vmatpush1.msra.mxu0 %v3213
    %3236 = vmatprep.subr.mxu0 0.0
    %3237 = vmatpush1.msra.mxu0 %v3214
    %3238 = vmatprep.subr.mxu0 0.0
    %3239 = vmatpush1.msra.mxu0 %v3215
    %3240 = vmatprep.subr.mxu0 0.0
    %3241 = vmatpush1.msra.mxu0 %v3216
    %3242 = vmatprep.subr.mxu0 0.0
    %3243 = vmatpush1.msra.mxu0 %v3217
    %3244 = vmatprep.subr.mxu0 0.0
    %3245 = vmatpush1.msra.mxu0 %v3218
    %3246 = vmatprep.subr.mxu0 0.0
    %3247 = vmatpush1.msra.mxu0 0.0
    %3248 = vmatprep.subr.mxu0 0.0
    %3249 = vmatpush1.msra.mxu0 0.0
    %3250 = vmatprep.subr.mxu0 0.0
    %3251 = vmatpush1.msra.mxu0 0.0
    %3252 = vmatprep.subr.mxu0 0.0
    %3253 = vmatpush1.msra.mxu0 0.0
    %3254 = vmatprep.subr.mxu0 0.0
    %3255 = vmatpush1.msra.mxu0 0.0
    %3256 = vmatprep.subr.mxu0 0.0
    %3257 = vmatpush1.msra.mxu0 0.0
    %3258 = vmatprep.subr.mxu0 0.0
    %3259 = vmatpush1.msra.mxu0 0.0
    %3260 = vmatprep.subr.mxu0 0.0
    %3261 = vmatpush1.msra.mxu0 0.0
    %3262 = vmatprep.subr.mxu0 0.0
    %3263 = vmatpush1.msra.mxu0 0.0
    %3264 = vmatprep.subr.mxu0 0.0
    %3265 = vmatpush1.msra.mxu0 0.0
    %3266 = vmatprep.subr.mxu0 0.0
    %3267 = vmatpush1.msra.mxu0 0.0
    %3268 = vmatprep.subr.mxu0 0.0
    %3269 = vmatpush1.msra.mxu0 0.0
    %3270 = vmatprep.subr.mxu0 0.0
    %3271 = vmatpush1.msra.mxu0 0.0
    %3272 = vmatprep.subr.mxu0 0.0
    %3273 = vmatpush1.msra.mxu0 0.0
    %3274 = vmatprep.subr.mxu0 0.0
    %3275 = vmatpush1.msra.mxu0 0.0
    %3276 = vmatprep.subr.mxu0 0.0
    %3277 = vmatpush1.msra.mxu0 0.0
    %3278 = vmatprep.subr.mxu0 0.0
    %3279 = vmatpush1.msra.mxu0 0.0
    %3280 = vmatprep.subr.mxu0 0.0
    %3281 = vmatpush1.msra.mxu0 0.0
    %3282 = vmatprep.subr.mxu0 0.0
    %3283 = vmatpush1.msra.mxu0 0.0
    %3284 = vmatprep.subr.mxu0 0.0
    %3285 = vmatpush1.msra.mxu0 0.0
    %3286 = vmatprep.subr.mxu0 0.0
    %3287 = vmatpush1.msra.mxu0 0.0
    %3288 = vmatprep.subr.mxu0 0.0
    %3289 = vmatpush1.msra.mxu0 0.0
    %3290 = vmatprep.subr.mxu0 0.0
    %3291 = vmatpush1.msra.mxu0 0.0
    %3292 = vmatprep.subr.mxu0 0.0
    %3293 = vmatpush1.msra.mxu0 0.0
    %3294 = vmatprep.mubr.f32.mxu0 0.0
    %3295 = vmatmul.mubr.f32.gmra.mrb[0].mxu0 %v3228
    %v3296 = vpop.f32.mrb[0].mxu0
    %v3297 = vadd.f32 %v3225, %v3296
    %v3298 = vpop.f32.mrb[0].mxu0
    %3299 = vdwg.mxu0
    %v3300 = vmul.f32 %v3297, %v3297
    %v3301 = vmul.f32 %v3297, %v3300
    %v3302 = vmul.f32 %v3301, 0.044715
    %v3303 = vadd.f32 %v3297, %v3302
    %v3304 = vmul.f32 %v3303, 0.7978846
    %v3305 = vtanh.pop %v3304
    %v3306 = vadd.f32 %v3305, 1.0
    %v3307 = vmul.f32 %v3306, 0.5
    %v3308 = vmul.f32 %v3297, %v3307
    %s3309 = scalar_lea.vmem %s16, 128
    %v3310 = vld [vmem:[%s3309] sm:$0xff]
    %v3311 = vld [vmem:[%s3309 + $0x8] sm:$0xff]
    %v3312 = vld [vmem:[%s3309 + $0x10] sm:$0xff]
    %v3313 = vld [vmem:[%s3309 + $0x18] sm:$0xff]
    %v3314 = vld [vmem:[%s3309 + $0x20] sm:$0xff]
    %v3315 = vld [vmem:[%s3309 + $0x28] sm:$0xff]
    %v3316 = vld [vmem:[%s3309 + $0x30] sm:$0xff]
    %v3317 = vld [vmem:[%s3309 + $0x38] sm:$0xff]
    %v3318 = vld [vmem:[%s3309 + $0x40] sm:$0xff]
    %v3319 = vld [vmem:[%s3309 + $0x48] sm:$0xff]
    %v3320 = vld [vmem:[%s3309 + $0x50] sm:$0xff]
    %v3321 = vld [vmem:[%s3309 + $0x58] sm:$0xff]
    %v3322 = vld [vmem:[%s3309 + $0x60] sm:$0xff]
    %v3323 = vld [vmem:[%s3309 + $0x68] sm:$0xff]
    %v3324 = vld [vmem:[%s3309 + $0x70] sm:$0xff]
    %v3325 = vld [vmem:[%s3309 + $0x78] sm:$0xff]
    %s3326 = scalar_lea.vmem %s17, 1
    %v3327 = vld [vmem:[%s3326] sm:$0x1]
    %v3329 = vlaneseq
    %v3330 = vshrl.u32 %v3329, 7
    %v3331 = vsub.s32 0, %v3330
    %v3332 = vrot.slane %v3327, %v3331
    %3334 = vmatprep.subr.mxu0 0.0
    %3335 = vmatpush1.msra.mxu0 %v3310
    %3336 = vmatprep.subr.mxu0 0.0
    %3337 = vmatpush1.msra.mxu0 %v3311
    %3338 = vmatprep.subr.mxu0 0.0
    %3339 = vmatpush1.msra.mxu0 %v3312
    %3340 = vmatprep.subr.mxu0 0.0
    %3341 = vmatpush1.msra.mxu0 %v3313
    %3342 = vmatprep.subr.mxu0 0.0
    %3343 = vmatpush1.msra.mxu0 %v3314
    %3344 = vmatprep.subr.mxu0 0.0
    %3345 = vmatpush1.msra.mxu0 %v3315
    %3346 = vmatprep.subr.mxu0 0.0
    %3347 = vmatpush1.msra.mxu0 %v3316
    %3348 = vmatprep.subr.mxu0 0.0
    %3349 = vmatpush1.msra.mxu0 %v3317
    %3350 = vmatprep.subr.mxu0 0.0
    %3351 = vmatpush1.msra.mxu0 %v3318
    %3352 = vmatprep.subr.mxu0 0.0
    %3353 = vmatpush1.msra.mxu0 %v3319
    %3354 = vmatprep.subr.mxu0 0.0
    %3355 = vmatpush1.msra.mxu0 %v3320
    %3356 = vmatprep.subr.mxu0 0.0
    %3357 = vmatpush1.msra.mxu0 %v3321
    %3358 = vmatprep.subr.mxu0 0.0
    %3359 = vmatpush1.msra.mxu0 %v3322
    %3360 = vmatprep.subr.mxu0 0.0
    %3361 = vmatpush1.msra.mxu0 %v3323
    %3362 = vmatprep.subr.mxu0 0.0
    %3363 = vmatpush1.msra.mxu0 %v3324
    %3364 = vmatprep.subr.mxu0 0.0
    %3365 = vmatpush1.msra.mxu0 %v3325
    %3366 = vmatprep.subr.mxu0 0.0
    %3367 = vmatpush1.msra.mxu0 0.0
    %3368 = vmatprep.subr.mxu0 0.0
    %3369 = vmatpush1.msra.mxu0 0.0
    %3370 = vmatprep.subr.mxu0 0.0
    %3371 = vmatpush1.msra.mxu0 0.0
    %3372 = vmatprep.subr.mxu0 0.0
    %3373 = vmatpush1.msra.mxu0 0.0
    %3374 = vmatprep.subr.mxu0 0.0
    %3375 = vmatpush1.msra.mxu0 0.0
    %3376 = vmatprep.subr.mxu0 0.0
    %3377 = vmatpush1.msra.mxu0 0.0
    %3378 = vmatprep.subr.mxu0 0.0
    %3379 = vmatpush1.msra.mxu0 0.0
    %3380 = vmatprep.subr.mxu0 0.0
    %3381 = vmatpush1.msra.mxu0 0.0
    %3382 = vmatprep.subr.mxu0 0.0
    %3383 = vmatpush1.msra.mxu0 0.0
    %3384 = vmatprep.subr.mxu0 0.0
    %3385 = vmatpush1.msra.mxu0 0.0
    %3386 = vmatprep.subr.mxu0 0.0
    %3387 = vmatpush1.msra.mxu0 0.0
    %3388 = vmatprep.subr.mxu0 0.0
    %3389 = vmatpush1.msra.mxu0 0.0
    %3390 = vmatprep.subr.mxu0 0.0
    %3391 = vmatpush1.msra.mxu0 0.0
    %3392 = vmatprep.subr.mxu0 0.0
    %3393 = vmatpush1.msra.mxu0 0.0
    %3394 = vmatprep.subr.mxu0 0.0
    %3395 = vmatpush1.msra.mxu0 0.0
    %3396 = vmatprep.subr.mxu0 0.0
    %3397 = vmatpush1.msra.mxu0 0.0
    %3398 = vmatprep.mubr.f32.mxu0 0.0
    %3399 = vmatmul.mubr.f32.gmra.mrb[0].mxu0 %v3308
    %v3400 = vpop.f32.mrb[0].mxu0
    %v3401 = vadd.f32 %v3332, %v3400
    %v3402 = vpop.f32.mrb[0].mxu0
    %3403 = vdwg.mxu0
    %v3404 = vadd.f32 %v3401, %v3039
    %v3405 = vld [vmem:[%s18] sm:$0x1]
    %v3406 = vld [vmem:[%s19] sm:$0x1]
    %v3408 = vsel %vm474, %v3404, 0
    %3410 = vmatprep.subr.mxu0 0.0
    %3411 = vmatpush1.msra.mxu0 %v253
    %3412 = vmatprep.subr.mxu0 0.0
    %3413 = vmatpush1.msra.mxu0 %v254
    %3414 = vmatprep.subr.mxu0 0.0
    %3415 = vmatpush1.msra.mxu0 %v255
    %3416 = vmatprep.subr.mxu0 0.0
    %3417 = vmatpush1.msra.mxu0 %v256
    %3418 = vmatprep.subr.mxu0 0.0
    %3419 = vmatpush1.msra.mxu0 %v257
    %3420 = vmatprep.subr.mxu0 0.0
    %3421 = vmatpush1.msra.mxu0 %v258
    %3422 = vmatprep.subr.mxu0 0.0
    %3423 = vmatpush1.msra.mxu0 %v259
    %3424 = vmatprep.subr.mxu0 0.0
    %3425 = vmatpush1.msra.mxu0 %v260
    %3426 = vmatprep.subr.mxu0 0.0
    %3427 = vmatpush1.msra.mxu0 0.0
    %3428 = vmatprep.subr.mxu0 0.0
    %3429 = vmatpush1.msra.mxu0 0.0
    %3430 = vmatprep.subr.mxu0 0.0
    %3431 = vmatpush1.msra.mxu0 0.0
    %3432 = vmatprep.subr.mxu0 0.0
    %3433 = vmatpush1.msra.mxu0 0.0
    %3434 = vmatprep.subr.mxu0 0.0
    %3435 = vmatpush1.msra.mxu0 0.0
    %3436 = vmatprep.subr.mxu0 0.0
    %3437 = vmatpush1.msra.mxu0 0.0
    %3438 = vmatprep.subr.mxu0 0.0
    %3439 = vmatpush1.msra.mxu0 0.0
    %3440 = vmatprep.subr.mxu0 0.0
    %3441 = vmatpush1.msra.mxu0 0.0
    %3442 = vmatprep.subr.mxu0 0.0
    %3443 = vmatpush1.msra.mxu0 0.0
    %3444 = vmatprep.subr.mxu0 0.0
    %3445 = vmatpush1.msra.mxu0 0.0
    %3446 = vmatprep.subr.mxu0 0.0
    %3447 = vmatpush1.msra.mxu0 0.0
    %3448 = vmatprep.subr.mxu0 0.0
    %3449 = vmatpush1.msra.mxu0 0.0
    %3450 = vmatprep.subr.mxu0 0.0
    %3451 = vmatpush1.msra.mxu0 0.0
    %3452 = vmatprep.subr.mxu0 0.0
    %3453 = vmatpush1.msra.mxu0 0.0
    %3454 = vmatprep.subr.mxu0 0.0
    %3455 = vmatpush1.msra.mxu0 0.0
    %3456 = vmatprep.subr.mxu0 0.0
    %3457 = vmatpush1.msra.mxu0 0.0
    %3458 = vmatprep.subr.mxu0 0.0
    %3459 = vmatpush1.msra.mxu0 0.0
    %3460 = vmatprep.subr.mxu0 0.0
    %3461 = vmatpush1.msra.mxu0 0.0
    %3462 = vmatprep.subr.mxu0 0.0
    %3463 = vmatpush1.msra.mxu0 0.0
    %3464 = vmatprep.subr.mxu0 0.0
    %3465 = vmatpush1.msra.mxu0 0.0
    %3466 = vmatprep.subr.mxu0 0.0
    %3467 = vmatpush1.msra.mxu0 0.0
    %3468 = vmatprep.subr.mxu0 0.0
    %3469 = vmatpush1.msra.mxu0 0.0
    %3470 = vmatprep.subr.mxu0 0.0
    %3471 = vmatpush1.msra.mxu0 0.0
    %3472 = vmatprep.subr.mxu0 0.0
    %3473 = vmatpush1.msra.mxu0 0.0
    %3474 = vmatprep.mubr.f32.mxu0 0.0
    %3475 = vmatmul.mubr.f32.gmra.mrb[0].mxu0 %v3408
    %v3476 = vpop.f32.mrb[0].mxu0
    %v3477 = vadd.f32 0.0, %v3476
    %v3478 = vpop.f32.mrb[0].mxu0
    %3479 = vdwg.mxu0
    %v3480 = vsub.f32 %v3404, %v3477
    %v3481 = vmul.f32 %v3480, %v3480
    %v3483 = vsel %vm474, %v3481, 0
    %3485 = vmatprep.subr.mxu0 0.0
    %3486 = vmatpush1.msra.mxu0 %v253
    %3487 = vmatprep.subr.mxu0 0.0
    %3488 = vmatpush1.msra.mxu0 %v254
    %3489 = vmatprep.subr.mxu0 0.0
    %3490 = vmatpush1.msra.mxu0 %v255
    %3491 = vmatprep.subr.mxu0 0.0
    %3492 = vmatpush1.msra.mxu0 %v256
    %3493 = vmatprep.subr.mxu0 0.0
    %3494 = vmatpush1.msra.mxu0 %v257
    %3495 = vmatprep.subr.mxu0 0.0
    %3496 = vmatpush1.msra.mxu0 %v258
    %3497 = vmatprep.subr.mxu0 0.0
    %3498 = vmatpush1.msra.mxu0 %v259
    %3499 = vmatprep.subr.mxu0 0.0
    %3500 = vmatpush1.msra.mxu0 %v260
    %3501 = vmatprep.subr.mxu0 0.0
    %3502 = vmatpush1.msra.mxu0 0.0
    %3503 = vmatprep.subr.mxu0 0.0
    %3504 = vmatpush1.msra.mxu0 0.0
    %3505 = vmatprep.subr.mxu0 0.0
    %3506 = vmatpush1.msra.mxu0 0.0
    %3507 = vmatprep.subr.mxu0 0.0
    %3508 = vmatpush1.msra.mxu0 0.0
    %3509 = vmatprep.subr.mxu0 0.0
    %3510 = vmatpush1.msra.mxu0 0.0
    %3511 = vmatprep.subr.mxu0 0.0
    %3512 = vmatpush1.msra.mxu0 0.0
    %3513 = vmatprep.subr.mxu0 0.0
    %3514 = vmatpush1.msra.mxu0 0.0
    %3515 = vmatprep.subr.mxu0 0.0
    %3516 = vmatpush1.msra.mxu0 0.0
    %3517 = vmatprep.subr.mxu0 0.0
    %3518 = vmatpush1.msra.mxu0 0.0
    %3519 = vmatprep.subr.mxu0 0.0
    %3520 = vmatpush1.msra.mxu0 0.0
    %3521 = vmatprep.subr.mxu0 0.0
    %3522 = vmatpush1.msra.mxu0 0.0
    %3523 = vmatprep.subr.mxu0 0.0
    %3524 = vmatpush1.msra.mxu0 0.0
    %3525 = vmatprep.subr.mxu0 0.0
    %3526 = vmatpush1.msra.mxu0 0.0
    %3527 = vmatprep.subr.mxu0 0.0
    %3528 = vmatpush1.msra.mxu0 0.0
    %3529 = vmatprep.subr.mxu0 0.0
    %3530 = vmatpush1.msra.mxu0 0.0
    %3531 = vmatprep.subr.mxu0 0.0
    %3532 = vmatpush1.msra.mxu0 0.0
    %3533 = vmatprep.subr.mxu0 0.0
    %3534 = vmatpush1.msra.mxu0 0.0
    %3535 = vmatprep.subr.mxu0 0.0
    %3536 = vmatpush1.msra.mxu0 0.0
    %3537 = vmatprep.subr.mxu0 0.0
    %3538 = vmatpush1.msra.mxu0 0.0
    %3539 = vmatprep.subr.mxu0 0.0
    %3540 = vmatpush1.msra.mxu0 0.0
    %3541 = vmatprep.subr.mxu0 0.0
    %3542 = vmatpush1.msra.mxu0 0.0
    %3543 = vmatprep.subr.mxu0 0.0
    %3544 = vmatpush1.msra.mxu0 0.0
    %3545 = vmatprep.subr.mxu0 0.0
    %3546 = vmatpush1.msra.mxu0 0.0
    %3547 = vmatprep.subr.mxu0 0.0
    %3548 = vmatpush1.msra.mxu0 0.0
    %3549 = vmatprep.mubr.f32.mxu0 0.0
    %3550 = vmatmul.mubr.f32.gmra.mrb[0].mxu0 %v3483
    %v3551 = vpop.f32.mrb[0].mxu0
    %v3552 = vadd.f32 1e-05, %v3551
    %v3553 = vpop.f32.mrb[0].mxu0
    %3554 = vdwg.mxu0
    %v3555 = vrsqrt.pop %v3552
    %v3556 = vmul.f32 %v3480, %v3555
    %v3558 = vlaneseq
    %v3559 = vshrl.u32 %v3558, 7
    %v3560 = vsub.s32 0, %v3559
    %v3561 = vrot.slane %v3405, %v3560
    %v3563 = vmul.f32 %v3556, %v3561
    %v3565 = vlaneseq
    %v3566 = vshrl.u32 %v3565, 7
    %v3567 = vsub.s32 0, %v3566
    %v3568 = vrot.slane %v3406, %v3567
    %v3570 = vadd.f32 %v3563, %v3568
    %v3571 = vld [vmem:[%s20] sm:$0xff]
    %v3572 = vld [vmem:[%s20 + $0x8] sm:$0xff]
    %v3573 = vld [vmem:[%s20 + $0x10] sm:$0xff]
    %v3574 = vld [vmem:[%s20 + $0x18] sm:$0xff]
    %v3575 = vld [vmem:[%s20 + $0x20] sm:$0xff]
    %v3576 = vld [vmem:[%s20 + $0x28] sm:$0xff]
    %v3577 = vld [vmem:[%s20 + $0x30] sm:$0xff]
    %v3578 = vld [vmem:[%s20 + $0x38] sm:$0xff]
    %v3580 = vsel %vm474, %v3570, 0
    %3582 = vmatprep.subr.mxu0 0.0
    %3583 = vmatpush1.msra.mxu0 %v3571
    %3584 = vmatprep.subr.mxu0 0.0
    %3585 = vmatpush1.msra.mxu0 %v3572
    %3586 = vmatprep.subr.mxu0 0.0
    %3587 = vmatpush1.msra.mxu0 %v3573
    %3588 = vmatprep.subr.mxu0 0.0
    %3589 = vmatpush1.msra.mxu0 %v3574
    %3590 = vmatprep.subr.mxu0 0.0
    %3591 = vmatpush1.msra.mxu0 %v3575
    %3592 = vmatprep.subr.mxu0 0.0
    %3593 = vmatpush1.msra.mxu0 %v3576
    %3594 = vmatprep.subr.mxu0 0.0
    %3595 = vmatpush1.msra.mxu0 %v3577
    %3596 = vmatprep.subr.mxu0 0.0
    %3597 = vmatpush1.msra.mxu0 %v3578
    %3598 = vmatprep.subr.mxu0 0.0
    %3599 = vmatpush1.msra.mxu0 0.0
    %3600 = vmatprep.subr.mxu0 0.0
    %3601 = vmatpush1.msra.mxu0 0.0
    %3602 = vmatprep.subr.mxu0 0.0
    %3603 = vmatpush1.msra.mxu0 0.0
    %3604 = vmatprep.subr.mxu0 0.0
    %3605 = vmatpush1.msra.mxu0 0.0
    %3606 = vmatprep.subr.mxu0 0.0
    %3607 = vmatpush1.msra.mxu0 0.0
    %3608 = vmatprep.subr.mxu0 0.0
    %3609 = vmatpush1.msra.mxu0 0.0
    %3610 = vmatprep.subr.mxu0 0.0
    %3611 = vmatpush1.msra.mxu0 0.0
    %3612 = vmatprep.subr.mxu0 0.0
    %3613 = vmatpush1.msra.mxu0 0.0
    %3614 = vmatprep.subr.mxu0 0.0
    %3615 = vmatpush1.msra.mxu0 0.0
    %3616 = vmatprep.subr.mxu0 0.0
    %3617 = vmatpush1.msra.mxu0 0.0
    %3618 = vmatprep.subr.mxu0 0.0
    %3619 = vmatpush1.msra.mxu0 0.0
    %3620 = vmatprep.subr.mxu0 0.0
    %3621 = vmatpush1.msra.mxu0 0.0
    %3622 = vmatprep.subr.mxu0 0.0
    %3623 = vmatpush1.msra.mxu0 0.0
    %3624 = vmatprep.subr.mxu0 0.0
    %3625 = vmatpush1.msra.mxu0 0.0
    %3626 = vmatprep.subr.mxu0 0.0
    %3627 = vmatpush1.msra.mxu0 0.0
    %3628 = vmatprep.subr.mxu0 0.0
    %3629 = vmatpush1.msra.mxu0 0.0
    %3630 = vmatprep.subr.mxu0 0.0
    %3631 = vmatpush1.msra.mxu0 0.0
    %3632 = vmatprep.subr.mxu0 0.0
    %3633 = vmatpush1.msra.mxu0 0.0
    %3634 = vmatprep.subr.mxu0 0.0
    %3635 = vmatpush1.msra.mxu0 0.0
    %3636 = vmatprep.subr.mxu0 0.0
    %3637 = vmatpush1.msra.mxu0 0.0
    %3638 = vmatprep.subr.mxu0 0.0
    %3639 = vmatpush1.msra.mxu0 0.0
    %3640 = vmatprep.subr.mxu0 0.0
    %3641 = vmatpush1.msra.mxu0 0.0
    %3642 = vmatprep.subr.mxu0 0.0
    %3643 = vmatpush1.msra.mxu0 0.0
    %3644 = vmatprep.subr.mxu0 0.0
    %3645 = vmatpush1.msra.mxu0 0.0
    %3646 = vmatprep.mubr.f32.mxu0 0.0
    %3647 = vmatmul.mubr.f32.gmra.mrb[0].mxu0 %v3580
    %v3648 = vpop.f32.mrb[0].mxu0
    %v3649 = vadd.f32 0.0, %v3648
    %v3650 = vpop.f32.mrb[0].mxu0
    %3651 = vdwg.mxu0
    %3652 = vst [vmem:[%s21] sm:$0xff] %v3649
    // Predicated region
    $region90: #{barcode_mamba_forward.1} parent=1 // pred_check
      _
    $region91: #{barcode_mamba_forward.1} parent=1 // pred_check_branch
      %3654 = sbr.rel (0) target = $region93
    $region92: #{barcode_mamba_forward.1} parent=1 // pred_region
      _
    $region93: #{barcode_mamba_forward.1} parent=1 // pred_fallthru
      _
    // Predicated region
    $region94: #{barcode_mamba_forward.1} parent=1 // pred_check
      _
    $region95: #{barcode_mamba_forward.1} parent=1 // pred_check_branch
      %3656 = sbr.rel (0) target = $region97
    $region96: #{barcode_mamba_forward.1} parent=1 // pred_region
      _
    $region97: #{barcode_mamba_forward.1} parent=1 // pred_fallthru
      _
    %3657 = vsyncpa [#allocation3], 1

</llo_original>
